<compile_context>
chip_gen: v5e
topology: v5e:2x2
jax: 0.10.0
libtpu: 0.0.40
codegen_flags: <defaults>
</compile_context>

<pallas_src>
import functools
import math

import jax
import jax.numpy as jnp
from jax.experimental import pallas as pl
from jax.experimental.pallas import tpu as pltpu

EMBED = 99                     # RNN_embed_dim
EMBED_PAD = 128                # zero-padded contraction dim (lane/sublane aligned)
HIDDEN = 72                    # h_RNN
FC_DIM = 64                    # h_FC_dim
NUM_CLASSES = 9
NUM_HEADS = 8
HEAD_DIM = HIDDEN // NUM_HEADS  # 9
NGATES = 4
GATE_PITCH = 128               # each LSTM gate padded to a full 128-lane tile
GCOLS = NGATES * GATE_PITCH    # 512
# Packed gate order is (i, f, o, g): blocks 0..2 take sigmoid, block 3 takes tanh.
GATE_ORDER = (0, 1, 3, 2)      # packed block p <- PyTorch gate GATE_ORDER[p]


# ------------------------------ LSTM cell -----------------------------------
def _lstm_cell(gates_in, h_prev, c_prev, whh):
    """gates_in: (B, GCOLS) = x @ W_ih + (b_ih + b_hh); whh: (H, GCOLS).

    Packed gate order (i, f, o, g); gate p occupies lanes
    [p*128, p*128 + HIDDEN).  Padded lanes hold 0 and are never read.
    """
    g = gates_in + jnp.dot(h_prev, whh, preferred_element_type=jnp.float32)
    sig = jax.nn.sigmoid(g[:, :3 * GATE_PITCH])          # one EUP issue for i,f,o
    i = sig[:, 0 * GATE_PITCH:0 * GATE_PITCH + HIDDEN]
    f = sig[:, 1 * GATE_PITCH:1 * GATE_PITCH + HIDDEN]
    o = sig[:, 2 * GATE_PITCH:2 * GATE_PITCH + HIDDEN]
    gg = jnp.tanh(g[:, 3 * GATE_PITCH:3 * GATE_PITCH + HIDDEN])
    c_new = f * c_prev + i * gg
    h_new = o * jnp.tanh(c_new)
    return h_new, c_new


# ---------------------------- fused kernel -----------------------------------
def rnn_fused_kernel(T, B,
                     x_ref,
                     wih0_ref, whh0_ref, b0_ref,
                     wih1_ref, whh1_ref, b1_ref,
                     wq_ref, bq_ref, wk_ref, bk_ref, wv_ref, bv_ref,
                     wo_ref, bo_ref,
                     wf1_ref, bf1_ref, wf2_ref, bf2_ref,
                     gsum_ref, gexp_ref,
                     out_ref):
    H = HIDDEN

    # Hoisted layer-0 input projection: one (B*T, 128) @ (128, 512) GEMM,
    # tile-aligned on the contraction dim thanks to the host-side zero pad.
    x2 = x_ref[...].reshape(B * T, EMBED_PAD)                  # rows are b-major
    g0 = (jnp.dot(x2, wih0_ref[...], preferred_element_type=jnp.float32)
          + b0_ref[...]).reshape(B, T, GCOLS)

    whh0 = whh0_ref[...]
    wih1 = wih1_ref[...]
    whh1 = whh1_ref[...]
    b1 = b1_ref[...]

    h0 = jnp.zeros((B, H), jnp.float32)
    c0 = jnp.zeros((B, H), jnp.float32)
    h1 = jnp.zeros((B, H), jnp.float32)
    c1 = jnp.zeros((B, H), jnp.float32)
    h1_list = []

    # Software-pipelined recurrence: layer-0 step t and layer-1 step t-1 are
    # independent (layer-1 consumes h0[t-1]), so each unrolled iteration hands
    # the VLIW scheduler two LSTM cells plus one 512-wide input-projection
    # GEMM with no serial dependency between them.
    for t in range(T):                                         # static unroll
        h0_prev = h0
        h0, c0 = _lstm_cell(g0[:, t, :], h0, c0, whh0)         # layer 0, step t
        if t >= 1:                                             # layer 1, step t-1
            g1_t = (jnp.dot(h0_prev, wih1,
                            preferred_element_type=jnp.float32) + b1)
            h1, c1 = _lstm_cell(g1_t, h1, c1, whh1)
            h1_list.append(h1)
    # drain: layer-1 step T-1
    g1_last = jnp.dot(h0, wih1, preferred_element_type=jnp.float32) + b1
    h1, c1 = _lstm_cell(g1_last, h1, c1, whh1)
    h1_list.append(h1)
    q_last = h1                                                # == RNN_out[:, -1, :]

    # ----------- multi-head self-attention (only the last query matters) -----
    # No mask in the reference module, so attention_out[:, -1, :] depends only
    # on the last-position query.  All projections / softmax are vectorized
    # over T; no per-timestep loops.
    kv = jnp.concatenate(h1_list, axis=0)                      # (T*B, H), t-major
    scale = jnp.float32(1.0 / math.sqrt(HEAD_DIM))
    qp = (jnp.dot(q_last, wq_ref[...], preferred_element_type=jnp.float32)
          + bq_ref[...]) * scale                               # (B, H)
    kp = jnp.dot(kv, wk_ref[...], preferred_element_type=jnp.float32) + bk_ref[...]
    vp = jnp.dot(kv, wv_ref[...], preferred_element_type=jnp.float32) + bv_ref[...]

    gsum = gsum_ref[...]                                       # (H, nH) host-built
    gexp = gexp_ref[...]                                       # (nH, H)

    prod = (kp.reshape(T, B, H) * qp[None, :, :]).reshape(T * B, H)
    scores = jnp.dot(prod, gsum, preferred_element_type=jnp.float32)   # (T*B, nH)
    scores3 = scores.reshape(T, B, NUM_HEADS)
    m = jnp.max(scores3, axis=0)                               # (B, nH)
    e3 = jnp.exp(scores3 - m[None, :, :])                      # one EUP op
    denom = jnp.sum(e3, axis=0)                                # (B, nH)
    w3 = e3 * (jnp.float32(1.0) / denom)[None, :, :]           # exact for parity
    w_exp = jnp.dot(w3.reshape(T * B, NUM_HEADS), gexp,
                    preferred_element_type=jnp.float32)        # (T*B, H)
    ctx = jnp.sum((w_exp * vp).reshape(T, B, H), axis=0)       # (B, H)

    attn_out = (jnp.dot(ctx, wo_ref[...], preferred_element_type=jnp.float32)
                + bo_ref[...])                                 # (B, H)

    # ------------------------------- FC head ---------------------------------
    hid = jnp.maximum(
        jnp.dot(attn_out, wf1_ref[...], preferred_element_type=jnp.float32)
        + bf1_ref[...], jnp.float32(0.0))                      # (B, FC)
    # TODO(synk): F.dropout(p=0.2) is treated as identity (eval/inference mode).
    out_ref[...] = (jnp.dot(hid, wf2_ref[...], preferred_element_type=jnp.float32)
                    + bf2_ref[...])                            # (B, C)


# ------------------------------ parameters -----------------------------------
def init_params(key):
    ks = jax.random.split(key, 16)

    def u(k, shape):
        return jax.random.uniform(k, shape, jnp.float32, -0.1, 0.1)

    H, E = HIDDEN, EMBED

    def pack_lstm(w_ih, w_hh, b_ih, b_hh, din, din_pad):
        # PyTorch layout: weight_ih (4H, din), weight_hh (4H, H), biases (4H,)
        # stacked in gate order (i, f, g, o).  Convert to y = x @ W form, repack
        # into (i, f, o, g) order, pad each gate's output block to a full
        # 128-lane tile, and zero-pad the contraction dim to din_pad.
        w_ih_t = w_ih.reshape(NGATES, H, din).transpose(0, 2, 1)   # (4, din, H)
        w_hh_t = w_hh.reshape(NGATES, H, H).transpose(0, 2, 1)     # (4, H, H)
        bias = (b_ih + b_hh).reshape(NGATES, H)
        wih_p = jnp.zeros((din_pad, GCOLS), jnp.float32)
        whh_p = jnp.zeros((H, GCOLS), jnp.float32)
        b_p = jnp.zeros((1, GCOLS), jnp.float32)
        for p_idx, g in enumerate(GATE_ORDER):
            sl = slice(p_idx * GATE_PITCH, p_idx * GATE_PITCH + H)
            wih_p = wih_p.at[:din, sl].set(w_ih_t[g])
            whh_p = whh_p.at[:, sl].set(w_hh_t[g])
            b_p = b_p.at[:, sl].set(bias[g])
        return wih_p, whh_p, b_p

    p = {}
    p["wih0"], p["whh0"], p["b0"] = pack_lstm(
        u(ks[0], (4 * H, E)), u(ks[1], (4 * H, H)),
        u(ks[2], (4 * H,)), u(ks[3], (4 * H,)), E, EMBED_PAD)
    p["wih1"], p["whh1"], p["b1"] = pack_lstm(
        u(ks[4], (4 * H, H)), u(ks[5], (4 * H, H)),
        u(ks[6], (4 * H,)), u(ks[7], (4 * H,)), H, H)

    # nn.MultiheadAttention: in_proj (3H, H) + (3H,), out_proj (H, H) + (H,)
    in_w, in_b = u(ks[8], (3 * H, H)), u(ks[9], (3 * H,))
    out_w, out_b = u(ks[10], (H, H)), u(ks[11], (H,))
    p["wq"], p["bq"] = in_w[:H].T, in_b[:H].reshape(1, H)
    p["wk"], p["bk"] = in_w[H:2 * H].T, in_b[H:2 * H].reshape(1, H)
    p["wv"], p["bv"] = in_w[2 * H:].T, in_b[2 * H:].reshape(1, H)
    p["wo"], p["bo"] = out_w.T, out_b.reshape(1, H)

    # FC head
    w1, b1 = u(ks[12], (FC_DIM, H)), u(ks[13], (FC_DIM,))
    w2, b2 = u(ks[14], (NUM_CLASSES, FC_DIM)), u(ks[15], (NUM_CLASSES,))
    p["wf1"], p["bf1"] = w1.T, b1.reshape(1, FC_DIM)
    p["wf2"], p["bf2"] = w2.T, b2.reshape(1, NUM_CLASSES)

    # Host-precomputed per-head indicator matrices (lane -> head reduce/expand),
    # instead of building them with broadcasted_iota inside the kernel.
    head_of_lane = jnp.arange(H) // HEAD_DIM
    gsum = (head_of_lane[:, None] == jnp.arange(NUM_HEADS)[None, :]
            ).astype(jnp.float32)                               # (H, nH)
    p["gsum"] = gsum
    p["gexp"] = gsum.T                                          # (nH, H)
    return p


# -------------------------------- forward ------------------------------------
def rnn_forward(x, p):
    """x: (B, T, EMBED) batch-first, like the PyTorch module (eval mode)."""
    B, T, E = x.shape
    assert E == EMBED
    # Zero-pad the contraction dim 99 -> 128 (mathematically identical).
    x_pad = jnp.pad(x.astype(jnp.float32),
                    ((0, 0), (0, 0), (0, EMBED_PAD - EMBED)))
    kernel = functools.partial(rnn_fused_kernel, T, B)
    args = (x_pad,
            p["wih0"], p["whh0"], p["b0"],
            p["wih1"], p["whh1"], p["b1"],
            p["wq"], p["bq"], p["wk"], p["bk"], p["wv"], p["bv"],
            p["wo"], p["bo"], p["wf1"], p["bf1"], p["wf2"], p["bf2"],
            p["gsum"], p["gexp"])
    vmem_spec = lambda: pl.BlockSpec(memory_space=pltpu.MemorySpace.VMEM)
    return pl.pallas_call(
        kernel,
        out_shape=jax.ShapeDtypeStruct((B, NUM_CLASSES), jnp.float32),
        in_specs=[vmem_spec() for _ in args],
        out_specs=vmem_spec(),
    )(*args)


if __name__ == "__main__":
    key = jax.random.PRNGKey(0)
    kx, kparam = jax.random.split(key)
    B, T = 2, 8
    x = jax.random.normal(kx, (B, T, EMBED), jnp.float32)
    params = init_params(kparam)
    out = rnn_forward(x, params)
    out = jax.block_until_ready(out)
    assert out.shape == (B, NUM_CLASSES)
    assert bool(jnp.all(jnp.isfinite(out)))
    print("KERNEL_OK")
</pallas_src>

<mosaic_0001>
module attributes {stable_mosaic.version = 11 : i64} {
  func.func @rnn_fused_kernel(%arg0: memref<2x8x128xf32, #tpu.memory_space<vmem>>, %arg1: memref<128x512xf32, #tpu.memory_space<vmem>>, %arg2: memref<72x512xf32, #tpu.memory_space<vmem>>, %arg3: memref<1x512xf32, #tpu.memory_space<vmem>>, %arg4: memref<72x512xf32, #tpu.memory_space<vmem>>, %arg5: memref<72x512xf32, #tpu.memory_space<vmem>>, %arg6: memref<1x512xf32, #tpu.memory_space<vmem>>, %arg7: memref<72x72xf32, #tpu.memory_space<vmem>>, %arg8: memref<1x72xf32, #tpu.memory_space<vmem>>, %arg9: memref<72x72xf32, #tpu.memory_space<vmem>>, %arg10: memref<1x72xf32, #tpu.memory_space<vmem>>, %arg11: memref<72x72xf32, #tpu.memory_space<vmem>>, %arg12: memref<1x72xf32, #tpu.memory_space<vmem>>, %arg13: memref<72x72xf32, #tpu.memory_space<vmem>>, %arg14: memref<1x72xf32, #tpu.memory_space<vmem>>, %arg15: memref<72x64xf32, #tpu.memory_space<vmem>>, %arg16: memref<1x64xf32, #tpu.memory_space<vmem>>, %arg17: memref<64x9xf32, #tpu.memory_space<vmem>>, %arg18: memref<1x9xf32, #tpu.memory_space<vmem>>, %arg19: memref<72x8xf32, #tpu.memory_space<vmem>>, %arg20: memref<8x72xf32, #tpu.memory_space<vmem>>, %arg21: memref<2x9xf32, #tpu.memory_space<vmem>>) attributes {dimension_semantics = [], scalar_prefetch = 0 : i64, scratch_operands = 0 : i64, tpu.core_type = #tpu.core_type<tc>} {
    %c0 = arith.constant 0 : index
    %c0_0 = arith.constant 0 : index
    %c0_1 = arith.constant 0 : index
    %0 = vector.load %arg0[%c0, %c0_0, %c0_1] : memref<2x8x128xf32, #tpu.memory_space<vmem>>, vector<2x8x128xf32>
    %1 = vector.shape_cast %0 : vector<2x8x128xf32> to vector<16x128xf32>
    %c0_2 = arith.constant 0 : index
    %c0_3 = arith.constant 0 : index
    %2 = vector.load %arg1[%c0_2, %c0_3] : memref<128x512xf32, #tpu.memory_space<vmem>>, vector<128x512xf32>
    %cst = arith.constant dense<0.000000e+00> : vector<16x512xf32>
    %3 = tpu.matmul %1, %2, %cst {dimension_numbers = #tpu.dot_dimension_numbers<[1], [0], [0], [1], [0, 0, 1, 1], [], []>} : vector<16x128xf32>, vector<128x512xf32>, vector<16x512xf32> -> vector<16x512xf32>
    %c0_4 = arith.constant 0 : index
    %c0_5 = arith.constant 0 : index
    %4 = vector.load %arg3[%c0_4, %c0_5] : memref<1x512xf32, #tpu.memory_space<vmem>>, vector<1x512xf32>
    %5 = vector.broadcast %4 : vector<1x512xf32> to vector<16x512xf32>
    %6 = arith.addf %3, %5 : vector<16x512xf32>
    %7 = vector.shape_cast %6 : vector<16x512xf32> to vector<2x8x512xf32>
    %c0_6 = arith.constant 0 : index
    %c0_7 = arith.constant 0 : index
    %8 = vector.load %arg2[%c0_6, %c0_7] : memref<72x512xf32, #tpu.memory_space<vmem>>, vector<72x512xf32>
    %c0_8 = arith.constant 0 : index
    %c0_9 = arith.constant 0 : index
    %9 = vector.load %arg4[%c0_8, %c0_9] : memref<72x512xf32, #tpu.memory_space<vmem>>, vector<72x512xf32>
    %c0_10 = arith.constant 0 : index
    %c0_11 = arith.constant 0 : index
    %10 = vector.load %arg5[%c0_10, %c0_11] : memref<72x512xf32, #tpu.memory_space<vmem>>, vector<72x512xf32>
    %c0_12 = arith.constant 0 : index
    %c0_13 = arith.constant 0 : index
    %11 = vector.load %arg6[%c0_12, %c0_13] : memref<1x512xf32, #tpu.memory_space<vmem>>, vector<1x512xf32>
    %cst_14 = arith.constant 0.000000e+00 : f32
    %12 = vector.broadcast %cst_14 : f32 to vector<2x72xf32>
    %cst_15 = arith.constant 0.000000e+00 : f32
    %13 = vector.broadcast %cst_15 : f32 to vector<2x72xf32>
    %cst_16 = arith.constant 0.000000e+00 : f32
    %14 = vector.broadcast %cst_16 : f32 to vector<2x72xf32>
    %cst_17 = arith.constant 0.000000e+00 : f32
    %15 = vector.broadcast %cst_17 : f32 to vector<2x72xf32>
    %16 = vector.extract_strided_slice %7 {offsets = [0, 0, 0], sizes = [2, 1, 512], strides = [1, 1, 1]} : vector<2x8x512xf32> to vector<2x1x512xf32>
    %17 = vector.shape_cast %16 : vector<2x1x512xf32> to vector<2x512xf32>
    %cst_18 = arith.constant dense<0.000000e+00> : vector<2x512xf32>
    %18 = tpu.matmul %12, %8, %cst_18 {dimension_numbers = #tpu.dot_dimension_numbers<[1], [0], [0], [1], [0, 0, 1, 1], [], []>} : vector<2x72xf32>, vector<72x512xf32>, vector<2x512xf32> -> vector<2x512xf32>
    %19 = arith.addf %17, %18 : vector<2x512xf32>
    %20 = vector.extract_strided_slice %19 {offsets = [0, 0], sizes = [2, 384], strides = [1, 1]} : vector<2x512xf32> to vector<2x384xf32>
    %21 = arith.negf %20 : vector<2x384xf32>
    %22 = math.exp %21 : vector<2x384xf32>
    %cst_19 = arith.constant 1.000000e+00 : f32
    %23 = vector.broadcast %cst_19 : f32 to vector<2x384xf32>
    %24 = arith.addf %23, %22 : vector<2x384xf32>
    %25 = arith.divf %23, %24 : vector<2x384xf32>
    %26 = vector.extract_strided_slice %25 {offsets = [0, 0], sizes = [2, 72], strides = [1, 1]} : vector<2x384xf32> to vector<2x72xf32>
    %27 = vector.extract_strided_slice %25 {offsets = [0, 128], sizes = [2, 72], strides = [1, 1]} : vector<2x384xf32> to vector<2x72xf32>
    %28 = vector.extract_strided_slice %25 {offsets = [0, 256], sizes = [2, 72], strides = [1, 1]} : vector<2x384xf32> to vector<2x72xf32>
    %29 = vector.extract_strided_slice %19 {offsets = [0, 384], sizes = [2, 72], strides = [1, 1]} : vector<2x512xf32> to vector<2x72xf32>
    %30 = math.tanh %29 : vector<2x72xf32>
    %31 = arith.mulf %27, %13 : vector<2x72xf32>
    %32 = arith.mulf %26, %30 : vector<2x72xf32>
    %33 = arith.addf %31, %32 : vector<2x72xf32>
    %34 = math.tanh %33 : vector<2x72xf32>
    %35 = arith.mulf %28, %34 : vector<2x72xf32>
    %36 = vector.extract_strided_slice %7 {offsets = [0, 1, 0], sizes = [2, 1, 512], strides = [1, 1, 1]} : vector<2x8x512xf32> to vector<2x1x512xf32>
    %37 = vector.shape_cast %36 : vector<2x1x512xf32> to vector<2x512xf32>
    %cst_20 = arith.constant dense<0.000000e+00> : vector<2x512xf32>
    %38 = tpu.matmul %35, %8, %cst_20 {dimension_numbers = #tpu.dot_dimension_numbers<[1], [0], [0], [1], [0, 0, 1, 1], [], []>} : vector<2x72xf32>, vector<72x512xf32>, vector<2x512xf32> -> vector<2x512xf32>
    %39 = arith.addf %37, %38 : vector<2x512xf32>
    %40 = vector.extract_strided_slice %39 {offsets = [0, 0], sizes = [2, 384], strides = [1, 1]} : vector<2x512xf32> to vector<2x384xf32>
    %41 = arith.negf %40 : vector<2x384xf32>
    %42 = math.exp %41 : vector<2x384xf32>
    %cst_21 = arith.constant 1.000000e+00 : f32
    %43 = vector.broadcast %cst_21 : f32 to vector<2x384xf32>
    %44 = arith.addf %43, %42 : vector<2x384xf32>
    %45 = arith.divf %43, %44 : vector<2x384xf32>
    %46 = vector.extract_strided_slice %45 {offsets = [0, 0], sizes = [2, 72], strides = [1, 1]} : vector<2x384xf32> to vector<2x72xf32>
    %47 = vector.extract_strided_slice %45 {offsets = [0, 128], sizes = [2, 72], strides = [1, 1]} : vector<2x384xf32> to vector<2x72xf32>
    %48 = vector.extract_strided_slice %45 {offsets = [0, 256], sizes = [2, 72], strides = [1, 1]} : vector<2x384xf32> to vector<2x72xf32>
    %49 = vector.extract_strided_slice %39 {offsets = [0, 384], sizes = [2, 72], strides = [1, 1]} : vector<2x512xf32> to vector<2x72xf32>
    %50 = math.tanh %49 : vector<2x72xf32>
    %51 = arith.mulf %47, %33 : vector<2x72xf32>
    %52 = arith.mulf %46, %50 : vector<2x72xf32>
    %53 = arith.addf %51, %52 : vector<2x72xf32>
    %54 = math.tanh %53 : vector<2x72xf32>
    %55 = arith.mulf %48, %54 : vector<2x72xf32>
    %cst_22 = arith.constant dense<0.000000e+00> : vector<2x512xf32>
    %56 = tpu.matmul %35, %9, %cst_22 {dimension_numbers = #tpu.dot_dimension_numbers<[1], [0], [0], [1], [0, 0, 1, 1], [], []>} : vector<2x72xf32>, vector<72x512xf32>, vector<2x512xf32> -> vector<2x512xf32>
    %57 = vector.broadcast %11 : vector<1x512xf32> to vector<2x512xf32>
    %58 = arith.addf %56, %57 : vector<2x512xf32>
    %cst_23 = arith.constant dense<0.000000e+00> : vector<2x512xf32>
    %59 = tpu.matmul %14, %10, %cst_23 {dimension_numbers = #tpu.dot_dimension_numbers<[1], [0], [0], [1], [0, 0, 1, 1], [], []>} : vector<2x72xf32>, vector<72x512xf32>, vector<2x512xf32> -> vector<2x512xf32>
    %60 = arith.addf %58, %59 : vector<2x512xf32>
    %61 = vector.extract_strided_slice %60 {offsets = [0, 0], sizes = [2, 384], strides = [1, 1]} : vector<2x512xf32> to vector<2x384xf32>
    %62 = arith.negf %61 : vector<2x384xf32>
    %63 = math.exp %62 : vector<2x384xf32>
    %cst_24 = arith.constant 1.000000e+00 : f32
    %64 = vector.broadcast %cst_24 : f32 to vector<2x384xf32>
    %65 = arith.addf %64, %63 : vector<2x384xf32>
    %66 = arith.divf %64, %65 : vector<2x384xf32>
    %67 = vector.extract_strided_slice %66 {offsets = [0, 0], sizes = [2, 72], strides = [1, 1]} : vector<2x384xf32> to vector<2x72xf32>
    %68 = vector.extract_strided_slice %66 {offsets = [0, 128], sizes = [2, 72], strides = [1, 1]} : vector<2x384xf32> to vector<2x72xf32>
    %69 = vector.extract_strided_slice %66 {offsets = [0, 256], sizes = [2, 72], strides = [1, 1]} : vector<2x384xf32> to vector<2x72xf32>
    %70 = vector.extract_strided_slice %60 {offsets = [0, 384], sizes = [2, 72], strides = [1, 1]} : vector<2x512xf32> to vector<2x72xf32>
    %71 = math.tanh %70 : vector<2x72xf32>
    %72 = arith.mulf %68, %15 : vector<2x72xf32>
    %73 = arith.mulf %67, %71 : vector<2x72xf32>
    %74 = arith.addf %72, %73 : vector<2x72xf32>
    %75 = math.tanh %74 : vector<2x72xf32>
    %76 = arith.mulf %69, %75 : vector<2x72xf32>
    %77 = vector.extract_strided_slice %7 {offsets = [0, 2, 0], sizes = [2, 1, 512], strides = [1, 1, 1]} : vector<2x8x512xf32> to vector<2x1x512xf32>
    %78 = vector.shape_cast %77 : vector<2x1x512xf32> to vector<2x512xf32>
    %cst_25 = arith.constant dense<0.000000e+00> : vector<2x512xf32>
    %79 = tpu.matmul %55, %8, %cst_25 {dimension_numbers = #tpu.dot_dimension_numbers<[1], [0], [0], [1], [0, 0, 1, 1], [], []>} : vector<2x72xf32>, vector<72x512xf32>, vector<2x512xf32> -> vector<2x512xf32>
    %80 = arith.addf %78, %79 : vector<2x512xf32>
    %81 = vector.extract_strided_slice %80 {offsets = [0, 0], sizes = [2, 384], strides = [1, 1]} : vector<2x512xf32> to vector<2x384xf32>
    %82 = arith.negf %81 : vector<2x384xf32>
    %83 = math.exp %82 : vector<2x384xf32>
    %cst_26 = arith.constant 1.000000e+00 : f32
    %84 = vector.broadcast %cst_26 : f32 to vector<2x384xf32>
    %85 = arith.addf %84, %83 : vector<2x384xf32>
    %86 = arith.divf %84, %85 : vector<2x384xf32>
    %87 = vector.extract_strided_slice %86 {offsets = [0, 0], sizes = [2, 72], strides = [1, 1]} : vector<2x384xf32> to vector<2x72xf32>
    %88 = vector.extract_strided_slice %86 {offsets = [0, 128], sizes = [2, 72], strides = [1, 1]} : vector<2x384xf32> to vector<2x72xf32>
    %89 = vector.extract_strided_slice %86 {offsets = [0, 256], sizes = [2, 72], strides = [1, 1]} : vector<2x384xf32> to vector<2x72xf32>
    %90 = vector.extract_strided_slice %80 {offsets = [0, 384], sizes = [2, 72], strides = [1, 1]} : vector<2x512xf32> to vector<2x72xf32>
    %91 = math.tanh %90 : vector<2x72xf32>
    %92 = arith.mulf %88, %53 : vector<2x72xf32>
    %93 = arith.mulf %87, %91 : vector<2x72xf32>
    %94 = arith.addf %92, %93 : vector<2x72xf32>
    %95 = math.tanh %94 : vector<2x72xf32>
    %96 = arith.mulf %89, %95 : vector<2x72xf32>
    %cst_27 = arith.constant dense<0.000000e+00> : vector<2x512xf32>
    %97 = tpu.matmul %55, %9, %cst_27 {dimension_numbers = #tpu.dot_dimension_numbers<[1], [0], [0], [1], [0, 0, 1, 1], [], []>} : vector<2x72xf32>, vector<72x512xf32>, vector<2x512xf32> -> vector<2x512xf32>
    %98 = vector.broadcast %11 : vector<1x512xf32> to vector<2x512xf32>
    %99 = arith.addf %97, %98 : vector<2x512xf32>
    %cst_28 = arith.constant dense<0.000000e+00> : vector<2x512xf32>
    %100 = tpu.matmul %76, %10, %cst_28 {dimension_numbers = #tpu.dot_dimension_numbers<[1], [0], [0], [1], [0, 0, 1, 1], [], []>} : vector<2x72xf32>, vector<72x512xf32>, vector<2x512xf32> -> vector<2x512xf32>
    %101 = arith.addf %99, %100 : vector<2x512xf32>
    %102 = vector.extract_strided_slice %101 {offsets = [0, 0], sizes = [2, 384], strides = [1, 1]} : vector<2x512xf32> to vector<2x384xf32>
    %103 = arith.negf %102 : vector<2x384xf32>
    %104 = math.exp %103 : vector<2x384xf32>
    %cst_29 = arith.constant 1.000000e+00 : f32
    %105 = vector.broadcast %cst_29 : f32 to vector<2x384xf32>
    %106 = arith.addf %105, %104 : vector<2x384xf32>
    %107 = arith.divf %105, %106 : vector<2x384xf32>
    %108 = vector.extract_strided_slice %107 {offsets = [0, 0], sizes = [2, 72], strides = [1, 1]} : vector<2x384xf32> to vector<2x72xf32>
    %109 = vector.extract_strided_slice %107 {offsets = [0, 128], sizes = [2, 72], strides = [1, 1]} : vector<2x384xf32> to vector<2x72xf32>
    %110 = vector.extract_strided_slice %107 {offsets = [0, 256], sizes = [2, 72], strides = [1, 1]} : vector<2x384xf32> to vector<2x72xf32>
    %111 = vector.extract_strided_slice %101 {offsets = [0, 384], sizes = [2, 72], strides = [1, 1]} : vector<2x512xf32> to vector<2x72xf32>
    %112 = math.tanh %111 : vector<2x72xf32>
    %113 = arith.mulf %109, %74 : vector<2x72xf32>
    %114 = arith.mulf %108, %112 : vector<2x72xf32>
    %115 = arith.addf %113, %114 : vector<2x72xf32>
    %116 = math.tanh %115 : vector<2x72xf32>
    %117 = arith.mulf %110, %116 : vector<2x72xf32>
    %118 = vector.extract_strided_slice %7 {offsets = [0, 3, 0], sizes = [2, 1, 512], strides = [1, 1, 1]} : vector<2x8x512xf32> to vector<2x1x512xf32>
    %119 = vector.shape_cast %118 : vector<2x1x512xf32> to vector<2x512xf32>
    %cst_30 = arith.constant dense<0.000000e+00> : vector<2x512xf32>
    %120 = tpu.matmul %96, %8, %cst_30 {dimension_numbers = #tpu.dot_dimension_numbers<[1], [0], [0], [1], [0, 0, 1, 1], [], []>} : vector<2x72xf32>, vector<72x512xf32>, vector<2x512xf32> -> vector<2x512xf32>
    %121 = arith.addf %119, %120 : vector<2x512xf32>
    %122 = vector.extract_strided_slice %121 {offsets = [0, 0], sizes = [2, 384], strides = [1, 1]} : vector<2x512xf32> to vector<2x384xf32>
    %123 = arith.negf %122 : vector<2x384xf32>
    %124 = math.exp %123 : vector<2x384xf32>
    %cst_31 = arith.constant 1.000000e+00 : f32
    %125 = vector.broadcast %cst_31 : f32 to vector<2x384xf32>
    %126 = arith.addf %125, %124 : vector<2x384xf32>
    %127 = arith.divf %125, %126 : vector<2x384xf32>
    %128 = vector.extract_strided_slice %127 {offsets = [0, 0], sizes = [2, 72], strides = [1, 1]} : vector<2x384xf32> to vector<2x72xf32>
    %129 = vector.extract_strided_slice %127 {offsets = [0, 128], sizes = [2, 72], strides = [1, 1]} : vector<2x384xf32> to vector<2x72xf32>
    %130 = vector.extract_strided_slice %127 {offsets = [0, 256], sizes = [2, 72], strides = [1, 1]} : vector<2x384xf32> to vector<2x72xf32>
    %131 = vector.extract_strided_slice %121 {offsets = [0, 384], sizes = [2, 72], strides = [1, 1]} : vector<2x512xf32> to vector<2x72xf32>
    %132 = math.tanh %131 : vector<2x72xf32>
    %133 = arith.mulf %129, %94 : vector<2x72xf32>
    %134 = arith.mulf %128, %132 : vector<2x72xf32>
    %135 = arith.addf %133, %134 : vector<2x72xf32>
    %136 = math.tanh %135 : vector<2x72xf32>
    %137 = arith.mulf %130, %136 : vector<2x72xf32>
    %cst_32 = arith.constant dense<0.000000e+00> : vector<2x512xf32>
    %138 = tpu.matmul %96, %9, %cst_32 {dimension_numbers = #tpu.dot_dimension_numbers<[1], [0], [0], [1], [0, 0, 1, 1], [], []>} : vector<2x72xf32>, vector<72x512xf32>, vector<2x512xf32> -> vector<2x512xf32>
    %139 = vector.broadcast %11 : vector<1x512xf32> to vector<2x512xf32>
    %140 = arith.addf %138, %139 : vector<2x512xf32>
    %cst_33 = arith.constant dense<0.000000e+00> : vector<2x512xf32>
    %141 = tpu.matmul %117, %10, %cst_33 {dimension_numbers = #tpu.dot_dimension_numbers<[1], [0], [0], [1], [0, 0, 1, 1], [], []>} : vector<2x72xf32>, vector<72x512xf32>, vector<2x512xf32> -> vector<2x512xf32>
    %142 = arith.addf %140, %141 : vector<2x512xf32>
    %143 = vector.extract_strided_slice %142 {offsets = [0, 0], sizes = [2, 384], strides = [1, 1]} : vector<2x512xf32> to vector<2x384xf32>
    %144 = arith.negf %143 : vector<2x384xf32>
    %145 = math.exp %144 : vector<2x384xf32>
    %cst_34 = arith.constant 1.000000e+00 : f32
    %146 = vector.broadcast %cst_34 : f32 to vector<2x384xf32>
    %147 = arith.addf %146, %145 : vector<2x384xf32>
    %148 = arith.divf %146, %147 : vector<2x384xf32>
    %149 = vector.extract_strided_slice %148 {offsets = [0, 0], sizes = [2, 72], strides = [1, 1]} : vector<2x384xf32> to vector<2x72xf32>
    %150 = vector.extract_strided_slice %148 {offsets = [0, 128], sizes = [2, 72], strides = [1, 1]} : vector<2x384xf32> to vector<2x72xf32>
    %151 = vector.extract_strided_slice %148 {offsets = [0, 256], sizes = [2, 72], strides = [1, 1]} : vector<2x384xf32> to vector<2x72xf32>
    %152 = vector.extract_strided_slice %142 {offsets = [0, 384], sizes = [2, 72], strides = [1, 1]} : vector<2x512xf32> to vector<2x72xf32>
    %153 = math.tanh %152 : vector<2x72xf32>
    %154 = arith.mulf %150, %115 : vector<2x72xf32>
    %155 = arith.mulf %149, %153 : vector<2x72xf32>
    %156 = arith.addf %154, %155 : vector<2x72xf32>
    %157 = math.tanh %156 : vector<2x72xf32>
    %158 = arith.mulf %151, %157 : vector<2x72xf32>
    %159 = vector.extract_strided_slice %7 {offsets = [0, 4, 0], sizes = [2, 1, 512], strides = [1, 1, 1]} : vector<2x8x512xf32> to vector<2x1x512xf32>
    %160 = vector.shape_cast %159 : vector<2x1x512xf32> to vector<2x512xf32>
    %cst_35 = arith.constant dense<0.000000e+00> : vector<2x512xf32>
    %161 = tpu.matmul %137, %8, %cst_35 {dimension_numbers = #tpu.dot_dimension_numbers<[1], [0], [0], [1], [0, 0, 1, 1], [], []>} : vector<2x72xf32>, vector<72x512xf32>, vector<2x512xf32> -> vector<2x512xf32>
    %162 = arith.addf %160, %161 : vector<2x512xf32>
    %163 = vector.extract_strided_slice %162 {offsets = [0, 0], sizes = [2, 384], strides = [1, 1]} : vector<2x512xf32> to vector<2x384xf32>
    %164 = arith.negf %163 : vector<2x384xf32>
    %165 = math.exp %164 : vector<2x384xf32>
    %cst_36 = arith.constant 1.000000e+00 : f32
    %166 = vector.broadcast %cst_36 : f32 to vector<2x384xf32>
    %167 = arith.addf %166, %165 : vector<2x384xf32>
    %168 = arith.divf %166, %167 : vector<2x384xf32>
    %169 = vector.extract_strided_slice %168 {offsets = [0, 0], sizes = [2, 72], strides = [1, 1]} : vector<2x384xf32> to vector<2x72xf32>
    %170 = vector.extract_strided_slice %168 {offsets = [0, 128], sizes = [2, 72], strides = [1, 1]} : vector<2x384xf32> to vector<2x72xf32>
    %171 = vector.extract_strided_slice %168 {offsets = [0, 256], sizes = [2, 72], strides = [1, 1]} : vector<2x384xf32> to vector<2x72xf32>
    %172 = vector.extract_strided_slice %162 {offsets = [0, 384], sizes = [2, 72], strides = [1, 1]} : vector<2x512xf32> to vector<2x72xf32>
    %173 = math.tanh %172 : vector<2x72xf32>
    %174 = arith.mulf %170, %135 : vector<2x72xf32>
    %175 = arith.mulf %169, %173 : vector<2x72xf32>
    %176 = arith.addf %174, %175 : vector<2x72xf32>
    %177 = math.tanh %176 : vector<2x72xf32>
    %178 = arith.mulf %171, %177 : vector<2x72xf32>
    %cst_37 = arith.constant dense<0.000000e+00> : vector<2x512xf32>
    %179 = tpu.matmul %137, %9, %cst_37 {dimension_numbers = #tpu.dot_dimension_numbers<[1], [0], [0], [1], [0, 0, 1, 1], [], []>} : vector<2x72xf32>, vector<72x512xf32>, vector<2x512xf32> -> vector<2x512xf32>
    %180 = vector.broadcast %11 : vector<1x512xf32> to vector<2x512xf32>
    %181 = arith.addf %179, %180 : vector<2x512xf32>
    %cst_38 = arith.constant dense<0.000000e+00> : vector<2x512xf32>
    %182 = tpu.matmul %158, %10, %cst_38 {dimension_numbers = #tpu.dot_dimension_numbers<[1], [0], [0], [1], [0, 0, 1, 1], [], []>} : vector<2x72xf32>, vector<72x512xf32>, vector<2x512xf32> -> vector<2x512xf32>
    %183 = arith.addf %181, %182 : vector<2x512xf32>
    %184 = vector.extract_strided_slice %183 {offsets = [0, 0], sizes = [2, 384], strides = [1, 1]} : vector<2x512xf32> to vector<2x384xf32>
    %185 = arith.negf %184 : vector<2x384xf32>
    %186 = math.exp %185 : vector<2x384xf32>
    %cst_39 = arith.constant 1.000000e+00 : f32
    %187 = vector.broadcast %cst_39 : f32 to vector<2x384xf32>
    %188 = arith.addf %187, %186 : vector<2x384xf32>
    %189 = arith.divf %187, %188 : vector<2x384xf32>
    %190 = vector.extract_strided_slice %189 {offsets = [0, 0], sizes = [2, 72], strides = [1, 1]} : vector<2x384xf32> to vector<2x72xf32>
    %191 = vector.extract_strided_slice %189 {offsets = [0, 128], sizes = [2, 72], strides = [1, 1]} : vector<2x384xf32> to vector<2x72xf32>
    %192 = vector.extract_strided_slice %189 {offsets = [0, 256], sizes = [2, 72], strides = [1, 1]} : vector<2x384xf32> to vector<2x72xf32>
    %193 = vector.extract_strided_slice %183 {offsets = [0, 384], sizes = [2, 72], strides = [1, 1]} : vector<2x512xf32> to vector<2x72xf32>
    %194 = math.tanh %193 : vector<2x72xf32>
    %195 = arith.mulf %191, %156 : vector<2x72xf32>
    %196 = arith.mulf %190, %194 : vector<2x72xf32>
    %197 = arith.addf %195, %196 : vector<2x72xf32>
    %198 = math.tanh %197 : vector<2x72xf32>
    %199 = arith.mulf %192, %198 : vector<2x72xf32>
    %200 = vector.extract_strided_slice %7 {offsets = [0, 5, 0], sizes = [2, 1, 512], strides = [1, 1, 1]} : vector<2x8x512xf32> to vector<2x1x512xf32>
    %201 = vector.shape_cast %200 : vector<2x1x512xf32> to vector<2x512xf32>
    %cst_40 = arith.constant dense<0.000000e+00> : vector<2x512xf32>
    %202 = tpu.matmul %178, %8, %cst_40 {dimension_numbers = #tpu.dot_dimension_numbers<[1], [0], [0], [1], [0, 0, 1, 1], [], []>} : vector<2x72xf32>, vector<72x512xf32>, vector<2x512xf32> -> vector<2x512xf32>
    %203 = arith.addf %201, %202 : vector<2x512xf32>
    %204 = vector.extract_strided_slice %203 {offsets = [0, 0], sizes = [2, 384], strides = [1, 1]} : vector<2x512xf32> to vector<2x384xf32>
    %205 = arith.negf %204 : vector<2x384xf32>
    %206 = math.exp %205 : vector<2x384xf32>
    %cst_41 = arith.constant 1.000000e+00 : f32
    %207 = vector.broadcast %cst_41 : f32 to vector<2x384xf32>
    %208 = arith.addf %207, %206 : vector<2x384xf32>
    %209 = arith.divf %207, %208 : vector<2x384xf32>
    %210 = vector.extract_strided_slice %209 {offsets = [0, 0], sizes = [2, 72], strides = [1, 1]} : vector<2x384xf32> to vector<2x72xf32>
    %211 = vector.extract_strided_slice %209 {offsets = [0, 128], sizes = [2, 72], strides = [1, 1]} : vector<2x384xf32> to vector<2x72xf32>
    %212 = vector.extract_strided_slice %209 {offsets = [0, 256], sizes = [2, 72], strides = [1, 1]} : vector<2x384xf32> to vector<2x72xf32>
    %213 = vector.extract_strided_slice %203 {offsets = [0, 384], sizes = [2, 72], strides = [1, 1]} : vector<2x512xf32> to vector<2x72xf32>
    %214 = math.tanh %213 : vector<2x72xf32>
    %215 = arith.mulf %211, %176 : vector<2x72xf32>
    %216 = arith.mulf %210, %214 : vector<2x72xf32>
    %217 = arith.addf %215, %216 : vector<2x72xf32>
    %218 = math.tanh %217 : vector<2x72xf32>
    %219 = arith.mulf %212, %218 : vector<2x72xf32>
    %cst_42 = arith.constant dense<0.000000e+00> : vector<2x512xf32>
    %220 = tpu.matmul %178, %9, %cst_42 {dimension_numbers = #tpu.dot_dimension_numbers<[1], [0], [0], [1], [0, 0, 1, 1], [], []>} : vector<2x72xf32>, vector<72x512xf32>, vector<2x512xf32> -> vector<2x512xf32>
    %221 = vector.broadcast %11 : vector<1x512xf32> to vector<2x512xf32>
    %222 = arith.addf %220, %221 : vector<2x512xf32>
    %cst_43 = arith.constant dense<0.000000e+00> : vector<2x512xf32>
    %223 = tpu.matmul %199, %10, %cst_43 {dimension_numbers = #tpu.dot_dimension_numbers<[1], [0], [0], [1], [0, 0, 1, 1], [], []>} : vector<2x72xf32>, vector<72x512xf32>, vector<2x512xf32> -> vector<2x512xf32>
    %224 = arith.addf %222, %223 : vector<2x512xf32>
    %225 = vector.extract_strided_slice %224 {offsets = [0, 0], sizes = [2, 384], strides = [1, 1]} : vector<2x512xf32> to vector<2x384xf32>
    %226 = arith.negf %225 : vector<2x384xf32>
    %227 = math.exp %226 : vector<2x384xf32>
    %cst_44 = arith.constant 1.000000e+00 : f32
    %228 = vector.broadcast %cst_44 : f32 to vector<2x384xf32>
    %229 = arith.addf %228, %227 : vector<2x384xf32>
    %230 = arith.divf %228, %229 : vector<2x384xf32>
    %231 = vector.extract_strided_slice %230 {offsets = [0, 0], sizes = [2, 72], strides = [1, 1]} : vector<2x384xf32> to vector<2x72xf32>
    %232 = vector.extract_strided_slice %230 {offsets = [0, 128], sizes = [2, 72], strides = [1, 1]} : vector<2x384xf32> to vector<2x72xf32>
    %233 = vector.extract_strided_slice %230 {offsets = [0, 256], sizes = [2, 72], strides = [1, 1]} : vector<2x384xf32> to vector<2x72xf32>
    %234 = vector.extract_strided_slice %224 {offsets = [0, 384], sizes = [2, 72], strides = [1, 1]} : vector<2x512xf32> to vector<2x72xf32>
    %235 = math.tanh %234 : vector<2x72xf32>
    %236 = arith.mulf %232, %197 : vector<2x72xf32>
    %237 = arith.mulf %231, %235 : vector<2x72xf32>
    %238 = arith.addf %236, %237 : vector<2x72xf32>
    %239 = math.tanh %238 : vector<2x72xf32>
    %240 = arith.mulf %233, %239 : vector<2x72xf32>
    %241 = vector.extract_strided_slice %7 {offsets = [0, 6, 0], sizes = [2, 1, 512], strides = [1, 1, 1]} : vector<2x8x512xf32> to vector<2x1x512xf32>
    %242 = vector.shape_cast %241 : vector<2x1x512xf32> to vector<2x512xf32>
    %cst_45 = arith.constant dense<0.000000e+00> : vector<2x512xf32>
    %243 = tpu.matmul %219, %8, %cst_45 {dimension_numbers = #tpu.dot_dimension_numbers<[1], [0], [0], [1], [0, 0, 1, 1], [], []>} : vector<2x72xf32>, vector<72x512xf32>, vector<2x512xf32> -> vector<2x512xf32>
    %244 = arith.addf %242, %243 : vector<2x512xf32>
    %245 = vector.extract_strided_slice %244 {offsets = [0, 0], sizes = [2, 384], strides = [1, 1]} : vector<2x512xf32> to vector<2x384xf32>
    %246 = arith.negf %245 : vector<2x384xf32>
    %247 = math.exp %246 : vector<2x384xf32>
    %cst_46 = arith.constant 1.000000e+00 : f32
    %248 = vector.broadcast %cst_46 : f32 to vector<2x384xf32>
    %249 = arith.addf %248, %247 : vector<2x384xf32>
    %250 = arith.divf %248, %249 : vector<2x384xf32>
    %251 = vector.extract_strided_slice %250 {offsets = [0, 0], sizes = [2, 72], strides = [1, 1]} : vector<2x384xf32> to vector<2x72xf32>
    %252 = vector.extract_strided_slice %250 {offsets = [0, 128], sizes = [2, 72], strides = [1, 1]} : vector<2x384xf32> to vector<2x72xf32>
    %253 = vector.extract_strided_slice %250 {offsets = [0, 256], sizes = [2, 72], strides = [1, 1]} : vector<2x384xf32> to vector<2x72xf32>
    %254 = vector.extract_strided_slice %244 {offsets = [0, 384], sizes = [2, 72], strides = [1, 1]} : vector<2x512xf32> to vector<2x72xf32>
    %255 = math.tanh %254 : vector<2x72xf32>
    %256 = arith.mulf %252, %217 : vector<2x72xf32>
    %257 = arith.mulf %251, %255 : vector<2x72xf32>
    %258 = arith.addf %256, %257 : vector<2x72xf32>
    %259 = math.tanh %258 : vector<2x72xf32>
    %260 = arith.mulf %253, %259 : vector<2x72xf32>
    %cst_47 = arith.constant dense<0.000000e+00> : vector<2x512xf32>
    %261 = tpu.matmul %219, %9, %cst_47 {dimension_numbers = #tpu.dot_dimension_numbers<[1], [0], [0], [1], [0, 0, 1, 1], [], []>} : vector<2x72xf32>, vector<72x512xf32>, vector<2x512xf32> -> vector<2x512xf32>
    %262 = vector.broadcast %11 : vector<1x512xf32> to vector<2x512xf32>
    %263 = arith.addf %261, %262 : vector<2x512xf32>
    %cst_48 = arith.constant dense<0.000000e+00> : vector<2x512xf32>
    %264 = tpu.matmul %240, %10, %cst_48 {dimension_numbers = #tpu.dot_dimension_numbers<[1], [0], [0], [1], [0, 0, 1, 1], [], []>} : vector<2x72xf32>, vector<72x512xf32>, vector<2x512xf32> -> vector<2x512xf32>
    %265 = arith.addf %263, %264 : vector<2x512xf32>
    %266 = vector.extract_strided_slice %265 {offsets = [0, 0], sizes = [2, 384], strides = [1, 1]} : vector<2x512xf32> to vector<2x384xf32>
    %267 = arith.negf %266 : vector<2x384xf32>
    %268 = math.exp %267 : vector<2x384xf32>
    %cst_49 = arith.constant 1.000000e+00 : f32
    %269 = vector.broadcast %cst_49 : f32 to vector<2x384xf32>
    %270 = arith.addf %269, %268 : vector<2x384xf32>
    %271 = arith.divf %269, %270 : vector<2x384xf32>
    %272 = vector.extract_strided_slice %271 {offsets = [0, 0], sizes = [2, 72], strides = [1, 1]} : vector<2x384xf32> to vector<2x72xf32>
    %273 = vector.extract_strided_slice %271 {offsets = [0, 128], sizes = [2, 72], strides = [1, 1]} : vector<2x384xf32> to vector<2x72xf32>
    %274 = vector.extract_strided_slice %271 {offsets = [0, 256], sizes = [2, 72], strides = [1, 1]} : vector<2x384xf32> to vector<2x72xf32>
    %275 = vector.extract_strided_slice %265 {offsets = [0, 384], sizes = [2, 72], strides = [1, 1]} : vector<2x512xf32> to vector<2x72xf32>
    %276 = math.tanh %275 : vector<2x72xf32>
    %277 = arith.mulf %273, %238 : vector<2x72xf32>
    %278 = arith.mulf %272, %276 : vector<2x72xf32>
    %279 = arith.addf %277, %278 : vector<2x72xf32>
    %280 = math.tanh %279 : vector<2x72xf32>
    %281 = arith.mulf %274, %280 : vector<2x72xf32>
    %282 = vector.extract_strided_slice %7 {offsets = [0, 7, 0], sizes = [2, 1, 512], strides = [1, 1, 1]} : vector<2x8x512xf32> to vector<2x1x512xf32>
    %283 = vector.shape_cast %282 : vector<2x1x512xf32> to vector<2x512xf32>
    %cst_50 = arith.constant dense<0.000000e+00> : vector<2x512xf32>
    %284 = tpu.matmul %260, %8, %cst_50 {dimension_numbers = #tpu.dot_dimension_numbers<[1], [0], [0], [1], [0, 0, 1, 1], [], []>} : vector<2x72xf32>, vector<72x512xf32>, vector<2x512xf32> -> vector<2x512xf32>
    %285 = arith.addf %283, %284 : vector<2x512xf32>
    %286 = vector.extract_strided_slice %285 {offsets = [0, 0], sizes = [2, 384], strides = [1, 1]} : vector<2x512xf32> to vector<2x384xf32>
    %287 = arith.negf %286 : vector<2x384xf32>
    %288 = math.exp %287 : vector<2x384xf32>
    %cst_51 = arith.constant 1.000000e+00 : f32
    %289 = vector.broadcast %cst_51 : f32 to vector<2x384xf32>
    %290 = arith.addf %289, %288 : vector<2x384xf32>
    %291 = arith.divf %289, %290 : vector<2x384xf32>
    %292 = vector.extract_strided_slice %291 {offsets = [0, 0], sizes = [2, 72], strides = [1, 1]} : vector<2x384xf32> to vector<2x72xf32>
    %293 = vector.extract_strided_slice %291 {offsets = [0, 128], sizes = [2, 72], strides = [1, 1]} : vector<2x384xf32> to vector<2x72xf32>
    %294 = vector.extract_strided_slice %291 {offsets = [0, 256], sizes = [2, 72], strides = [1, 1]} : vector<2x384xf32> to vector<2x72xf32>
    %295 = vector.extract_strided_slice %285 {offsets = [0, 384], sizes = [2, 72], strides = [1, 1]} : vector<2x512xf32> to vector<2x72xf32>
    %296 = math.tanh %295 : vector<2x72xf32>
    %297 = arith.mulf %293, %258 : vector<2x72xf32>
    %298 = arith.mulf %292, %296 : vector<2x72xf32>
    %299 = arith.addf %297, %298 : vector<2x72xf32>
    %300 = math.tanh %299 : vector<2x72xf32>
    %301 = arith.mulf %294, %300 : vector<2x72xf32>
    %cst_52 = arith.constant dense<0.000000e+00> : vector<2x512xf32>
    %302 = tpu.matmul %260, %9, %cst_52 {dimension_numbers = #tpu.dot_dimension_numbers<[1], [0], [0], [1], [0, 0, 1, 1], [], []>} : vector<2x72xf32>, vector<72x512xf32>, vector<2x512xf32> -> vector<2x512xf32>
    %303 = vector.broadcast %11 : vector<1x512xf32> to vector<2x512xf32>
    %304 = arith.addf %302, %303 : vector<2x512xf32>
    %cst_53 = arith.constant dense<0.000000e+00> : vector<2x512xf32>
    %305 = tpu.matmul %281, %10, %cst_53 {dimension_numbers = #tpu.dot_dimension_numbers<[1], [0], [0], [1], [0, 0, 1, 1], [], []>} : vector<2x72xf32>, vector<72x512xf32>, vector<2x512xf32> -> vector<2x512xf32>
    %306 = arith.addf %304, %305 : vector<2x512xf32>
    %307 = vector.extract_strided_slice %306 {offsets = [0, 0], sizes = [2, 384], strides = [1, 1]} : vector<2x512xf32> to vector<2x384xf32>
    %308 = arith.negf %307 : vector<2x384xf32>
    %309 = math.exp %308 : vector<2x384xf32>
    %cst_54 = arith.constant 1.000000e+00 : f32
    %310 = vector.broadcast %cst_54 : f32 to vector<2x384xf32>
    %311 = arith.addf %310, %309 : vector<2x384xf32>
    %312 = arith.divf %310, %311 : vector<2x384xf32>
    %313 = vector.extract_strided_slice %312 {offsets = [0, 0], sizes = [2, 72], strides = [1, 1]} : vector<2x384xf32> to vector<2x72xf32>
    %314 = vector.extract_strided_slice %312 {offsets = [0, 128], sizes = [2, 72], strides = [1, 1]} : vector<2x384xf32> to vector<2x72xf32>
    %315 = vector.extract_strided_slice %312 {offsets = [0, 256], sizes = [2, 72], strides = [1, 1]} : vector<2x384xf32> to vector<2x72xf32>
    %316 = vector.extract_strided_slice %306 {offsets = [0, 384], sizes = [2, 72], strides = [1, 1]} : vector<2x512xf32> to vector<2x72xf32>
    %317 = math.tanh %316 : vector<2x72xf32>
    %318 = arith.mulf %314, %279 : vector<2x72xf32>
    %319 = arith.mulf %313, %317 : vector<2x72xf32>
    %320 = arith.addf %318, %319 : vector<2x72xf32>
    %321 = math.tanh %320 : vector<2x72xf32>
    %322 = arith.mulf %315, %321 : vector<2x72xf32>
    %cst_55 = arith.constant dense<0.000000e+00> : vector<2x512xf32>
    %323 = tpu.matmul %301, %9, %cst_55 {dimension_numbers = #tpu.dot_dimension_numbers<[1], [0], [0], [1], [0, 0, 1, 1], [], []>} : vector<2x72xf32>, vector<72x512xf32>, vector<2x512xf32> -> vector<2x512xf32>
    %324 = vector.broadcast %11 : vector<1x512xf32> to vector<2x512xf32>
    %325 = arith.addf %323, %324 : vector<2x512xf32>
    %cst_56 = arith.constant dense<0.000000e+00> : vector<2x512xf32>
    %326 = tpu.matmul %322, %10, %cst_56 {dimension_numbers = #tpu.dot_dimension_numbers<[1], [0], [0], [1], [0, 0, 1, 1], [], []>} : vector<2x72xf32>, vector<72x512xf32>, vector<2x512xf32> -> vector<2x512xf32>
    %327 = arith.addf %325, %326 : vector<2x512xf32>
    %328 = vector.extract_strided_slice %327 {offsets = [0, 0], sizes = [2, 384], strides = [1, 1]} : vector<2x512xf32> to vector<2x384xf32>
    %329 = arith.negf %328 : vector<2x384xf32>
    %330 = math.exp %329 : vector<2x384xf32>
    %cst_57 = arith.constant 1.000000e+00 : f32
    %331 = vector.broadcast %cst_57 : f32 to vector<2x384xf32>
    %332 = arith.addf %331, %330 : vector<2x384xf32>
    %333 = arith.divf %331, %332 : vector<2x384xf32>
    %334 = vector.extract_strided_slice %333 {offsets = [0, 0], sizes = [2, 72], strides = [1, 1]} : vector<2x384xf32> to vector<2x72xf32>
    %335 = vector.extract_strided_slice %333 {offsets = [0, 128], sizes = [2, 72], strides = [1, 1]} : vector<2x384xf32> to vector<2x72xf32>
    %336 = vector.extract_strided_slice %333 {offsets = [0, 256], sizes = [2, 72], strides = [1, 1]} : vector<2x384xf32> to vector<2x72xf32>
    %337 = vector.extract_strided_slice %327 {offsets = [0, 384], sizes = [2, 72], strides = [1, 1]} : vector<2x512xf32> to vector<2x72xf32>
    %338 = math.tanh %337 : vector<2x72xf32>
    %339 = arith.mulf %335, %320 : vector<2x72xf32>
    %340 = arith.mulf %334, %338 : vector<2x72xf32>
    %341 = arith.addf %339, %340 : vector<2x72xf32>
    %342 = math.tanh %341 : vector<2x72xf32>
    %343 = arith.mulf %336, %342 : vector<2x72xf32>
    %344 = tpu.concatenate %76, %117, %158, %199, %240, %281, %322, %343 in 0 : vector<2x72xf32>, vector<2x72xf32>, vector<2x72xf32>, vector<2x72xf32>, vector<2x72xf32>, vector<2x72xf32>, vector<2x72xf32>, vector<2x72xf32> -> vector<16x72xf32>
    %c0_58 = arith.constant 0 : index
    %c0_59 = arith.constant 0 : index
    %345 = vector.load %arg7[%c0_58, %c0_59] : memref<72x72xf32, #tpu.memory_space<vmem>>, vector<72x72xf32>
    %cst_60 = arith.constant dense<0.000000e+00> : vector<2x72xf32>
    %346 = tpu.matmul %343, %345, %cst_60 {dimension_numbers = #tpu.dot_dimension_numbers<[1], [0], [0], [1], [0, 0, 1, 1], [], []>} : vector<2x72xf32>, vector<72x72xf32>, vector<2x72xf32> -> vector<2x72xf32>
    %c0_61 = arith.constant 0 : index
    %c0_62 = arith.constant 0 : index
    %347 = vector.load %arg8[%c0_61, %c0_62] : memref<1x72xf32, #tpu.memory_space<vmem>>, vector<1x72xf32>
    %348 = vector.broadcast %347 : vector<1x72xf32> to vector<2x72xf32>
    %349 = arith.addf %346, %348 : vector<2x72xf32>
    %cst_63 = arith.constant 0.333333343 : f32
    %350 = vector.broadcast %cst_63 : f32 to vector<2x72xf32>
    %351 = arith.mulf %349, %350 : vector<2x72xf32>
    %c0_64 = arith.constant 0 : index
    %c0_65 = arith.constant 0 : index
    %352 = vector.load %arg9[%c0_64, %c0_65] : memref<72x72xf32, #tpu.memory_space<vmem>>, vector<72x72xf32>
    %cst_66 = arith.constant dense<0.000000e+00> : vector<16x72xf32>
    %353 = tpu.matmul %344, %352, %cst_66 {dimension_numbers = #tpu.dot_dimension_numbers<[1], [0], [0], [1], [0, 0, 1, 1], [], []>} : vector<16x72xf32>, vector<72x72xf32>, vector<16x72xf32> -> vector<16x72xf32>
    %c0_67 = arith.constant 0 : index
    %c0_68 = arith.constant 0 : index
    %354 = vector.load %arg10[%c0_67, %c0_68] : memref<1x72xf32, #tpu.memory_space<vmem>>, vector<1x72xf32>
    %355 = vector.broadcast %354 : vector<1x72xf32> to vector<16x72xf32>
    %356 = arith.addf %353, %355 : vector<16x72xf32>
    %c0_69 = arith.constant 0 : index
    %c0_70 = arith.constant 0 : index
    %357 = vector.load %arg11[%c0_69, %c0_70] : memref<72x72xf32, #tpu.memory_space<vmem>>, vector<72x72xf32>
    %cst_71 = arith.constant dense<0.000000e+00> : vector<16x72xf32>
    %358 = tpu.matmul %344, %357, %cst_71 {dimension_numbers = #tpu.dot_dimension_numbers<[1], [0], [0], [1], [0, 0, 1, 1], [], []>} : vector<16x72xf32>, vector<72x72xf32>, vector<16x72xf32> -> vector<16x72xf32>
    %c0_72 = arith.constant 0 : index
    %c0_73 = arith.constant 0 : index
    %359 = vector.load %arg12[%c0_72, %c0_73] : memref<1x72xf32, #tpu.memory_space<vmem>>, vector<1x72xf32>
    %360 = vector.broadcast %359 : vector<1x72xf32> to vector<16x72xf32>
    %361 = arith.addf %358, %360 : vector<16x72xf32>
    %c0_74 = arith.constant 0 : index
    %c0_75 = arith.constant 0 : index
    %362 = vector.load %arg19[%c0_74, %c0_75] : memref<72x8xf32, #tpu.memory_space<vmem>>, vector<72x8xf32>
    %c0_76 = arith.constant 0 : index
    %c0_77 = arith.constant 0 : index
    %363 = vector.load %arg20[%c0_76, %c0_77] : memref<8x72xf32, #tpu.memory_space<vmem>>, vector<8x72xf32>
    %364 = vector.shape_cast %356 : vector<16x72xf32> to vector<8x2x72xf32>
    %365 = vector.shape_cast %351 : vector<2x72xf32> to vector<1x2x72xf32>
    %366 = vector.broadcast %365 : vector<1x2x72xf32> to vector<8x2x72xf32>
    %367 = arith.mulf %364, %366 : vector<8x2x72xf32>
    %368 = vector.shape_cast %367 : vector<8x2x72xf32> to vector<16x72xf32>
    %cst_78 = arith.constant dense<0.000000e+00> : vector<16x8xf32>
    %369 = tpu.matmul %368, %362, %cst_78 {dimension_numbers = #tpu.dot_dimension_numbers<[1], [0], [0], [1], [0, 0, 1, 1], [], []>} : vector<16x72xf32>, vector<72x8xf32>, vector<16x8xf32> -> vector<16x8xf32>
    %370 = vector.shape_cast %369 : vector<16x8xf32> to vector<8x2x8xf32>
    %cst_79 = arith.constant dense<0xFF800000> : vector<2x8xf32>
    %371 = vector.multi_reduction <maximumf>, %370, %cst_79 [0] : vector<8x2x8xf32> to vector<2x8xf32>
    %372 = vector.shape_cast %371 : vector<2x8xf32> to vector<1x2x8xf32>
    %373 = vector.broadcast %372 : vector<1x2x8xf32> to vector<8x2x8xf32>
    %374 = arith.subf %370, %373 : vector<8x2x8xf32>
    %375 = math.exp %374 : vector<8x2x8xf32>
    %cst_80 = arith.constant dense<0.000000e+00> : vector<2x8xf32>
    %376 = vector.multi_reduction <add>, %375, %cst_80 [0] : vector<8x2x8xf32> to vector<2x8xf32>
    %cst_81 = arith.constant 1.000000e+00 : f32
    %377 = vector.broadcast %cst_81 : f32 to vector<2x8xf32>
    %378 = arith.divf %377, %376 : vector<2x8xf32>
    %379 = vector.shape_cast %378 : vector<2x8xf32> to vector<1x2x8xf32>
    %380 = vector.broadcast %379 : vector<1x2x8xf32> to vector<8x2x8xf32>
    %381 = arith.mulf %375, %380 : vector<8x2x8xf32>
    %382 = vector.shape_cast %381 : vector<8x2x8xf32> to vector<16x8xf32>
    %cst_82 = arith.constant dense<0.000000e+00> : vector<16x72xf32>
    %383 = tpu.matmul %382, %363, %cst_82 {dimension_numbers = #tpu.dot_dimension_numbers<[1], [0], [0], [1], [0, 0, 1, 1], [], []>} : vector<16x8xf32>, vector<8x72xf32>, vector<16x72xf32> -> vector<16x72xf32>
    %384 = arith.mulf %383, %361 : vector<16x72xf32>
    %385 = vector.shape_cast %384 : vector<16x72xf32> to vector<8x2x72xf32>
    %cst_83 = arith.constant dense<0.000000e+00> : vector<2x72xf32>
    %386 = vector.multi_reduction <add>, %385, %cst_83 [0] : vector<8x2x72xf32> to vector<2x72xf32>
    %c0_84 = arith.constant 0 : index
    %c0_85 = arith.constant 0 : index
    %387 = vector.load %arg13[%c0_84, %c0_85] : memref<72x72xf32, #tpu.memory_space<vmem>>, vector<72x72xf32>
    %cst_86 = arith.constant dense<0.000000e+00> : vector<2x72xf32>
    %388 = tpu.matmul %386, %387, %cst_86 {dimension_numbers = #tpu.dot_dimension_numbers<[1], [0], [0], [1], [0, 0, 1, 1], [], []>} : vector<2x72xf32>, vector<72x72xf32>, vector<2x72xf32> -> vector<2x72xf32>
    %c0_87 = arith.constant 0 : index
    %c0_88 = arith.constant 0 : index
    %389 = vector.load %arg14[%c0_87, %c0_88] : memref<1x72xf32, #tpu.memory_space<vmem>>, vector<1x72xf32>
    %390 = vector.broadcast %389 : vector<1x72xf32> to vector<2x72xf32>
    %391 = arith.addf %388, %390 : vector<2x72xf32>
    %c0_89 = arith.constant 0 : index
    %c0_90 = arith.constant 0 : index
    %392 = vector.load %arg15[%c0_89, %c0_90] : memref<72x64xf32, #tpu.memory_space<vmem>>, vector<72x64xf32>
    %cst_91 = arith.constant dense<0.000000e+00> : vector<2x64xf32>
    %393 = tpu.matmul %391, %392, %cst_91 {dimension_numbers = #tpu.dot_dimension_numbers<[1], [0], [0], [1], [0, 0, 1, 1], [], []>} : vector<2x72xf32>, vector<72x64xf32>, vector<2x64xf32> -> vector<2x64xf32>
    %c0_92 = arith.constant 0 : index
    %c0_93 = arith.constant 0 : index
    %394 = vector.load %arg16[%c0_92, %c0_93] : memref<1x64xf32, #tpu.memory_space<vmem>>, vector<1x64xf32>
    %395 = vector.broadcast %394 : vector<1x64xf32> to vector<2x64xf32>
    %396 = arith.addf %393, %395 : vector<2x64xf32>
    %cst_94 = arith.constant 0.000000e+00 : f32
    %397 = vector.broadcast %cst_94 : f32 to vector<2x64xf32>
    %398 = arith.maximumf %396, %397 : vector<2x64xf32>
    %c0_95 = arith.constant 0 : index
    %c0_96 = arith.constant 0 : index
    %399 = vector.load %arg17[%c0_95, %c0_96] : memref<64x9xf32, #tpu.memory_space<vmem>>, vector<64x9xf32>
    %cst_97 = arith.constant dense<0.000000e+00> : vector<2x9xf32>
    %400 = tpu.matmul %398, %399, %cst_97 {dimension_numbers = #tpu.dot_dimension_numbers<[1], [0], [0], [1], [0, 0, 1, 1], [], []>} : vector<2x64xf32>, vector<64x9xf32>, vector<2x9xf32> -> vector<2x9xf32>
    %c0_98 = arith.constant 0 : index
    %c0_99 = arith.constant 0 : index
    %401 = vector.load %arg18[%c0_98, %c0_99] : memref<1x9xf32, #tpu.memory_space<vmem>>, vector<1x9xf32>
    %402 = vector.broadcast %401 : vector<1x9xf32> to vector<2x9xf32>
    %403 = arith.addf %400, %402 : vector<2x9xf32>
    %c0_100 = arith.constant 0 : index
    %c0_101 = arith.constant 0 : index
    %404 = vector.load %arg21[%c0_100, %c0_101] : memref<2x9xf32, #tpu.memory_space<vmem>>, vector<2x9xf32>
    tpu.vector_store %arg21[%c0_100, %c0_101], %403 {strides = array<i32>} : memref<2x9xf32, #tpu.memory_space<vmem>>, vector<2x9xf32>,
    return
  }
}

</mosaic_0001>

<llo_original>
// kernel: tpu_custom_call.1
$region0: #{tpu_custom_call.1}
  #allocation0 [shape = 'u32[]', space=smem, size = 0x4, offset = 0x4, fixed_abs, tag = 'smem constant byte address 0x4 - core index']
  #allocation1 [shape = 'u32[72,128]{1,0:T(1,128)}', space=vmem, size = 0x9000, scoped, tag = 'internal scratch']
  %s0 = inlined_call_operand.hbm [shape: f32[2,8,128], index: 0, kind: input, shape index: {}]
  %s1 = inlined_call_operand.hbm [shape: f32[128,512], index: 1, kind: input, shape index: {}]
  %s2 = inlined_call_operand.hbm [shape: f32[72,512], index: 2, kind: input, shape index: {}]
  %s3 = inlined_call_operand.hbm [shape: f32[1,512], index: 3, kind: input, shape index: {}]
  %s4 = inlined_call_operand.hbm [shape: f32[72,512], index: 4, kind: input, shape index: {}]
  %s5 = inlined_call_operand.hbm [shape: f32[72,512], index: 5, kind: input, shape index: {}]
  %s6 = inlined_call_operand.hbm [shape: f32[1,512], index: 6, kind: input, shape index: {}]
  %s7 = inlined_call_operand.vmem [shape: f32[72,72], index: 7, kind: input, shape index: {}]
  %s8 = inlined_call_operand.hbm [shape: f32[1,72], index: 8, kind: input, shape index: {}]
  %s9 = inlined_call_operand.vmem [shape: f32[72,72], index: 9, kind: input, shape index: {}]
  %s10 = inlined_call_operand.hbm [shape: f32[1,72], index: 10, kind: input, shape index: {}]
  %s11 = inlined_call_operand.vmem [shape: f32[72,72], index: 11, kind: input, shape index: {}]
  %s12 = inlined_call_operand.hbm [shape: f32[1,72], index: 12, kind: input, shape index: {}]
  %s13 = inlined_call_operand.hbm [shape: f32[72,72], index: 13, kind: input, shape index: {}]
  %s14 = inlined_call_operand.hbm [shape: f32[1,72], index: 14, kind: input, shape index: {}]
  %s15 = inlined_call_operand.vmem [shape: f32[72,64], index: 15, kind: input, shape index: {}]
  %s16 = inlined_call_operand.hbm [shape: f32[1,64], index: 16, kind: input, shape index: {}]
  %s17 = inlined_call_operand.vmem [shape: f32[64,9], index: 17, kind: input, shape index: {}]
  %s18 = inlined_call_operand.hbm [shape: f32[1,9], index: 18, kind: input, shape index: {}]
  %s19 = inlined_call_operand.vmem [shape: f32[72,8], index: 19, kind: input, shape index: {}]
  %s20 = inlined_call_operand.vmem [shape: f32[8,72], index: 20, kind: input, shape index: {}]
  %s21 = inlined_call_operand.hbm [shape: f32[2,9], index: 21, kind: output, shape index: {}]
  %s22 = sld [smem:[#allocation0]]
  $region150: #{tpu_custom_call.1} parent=0
    _
  %s24 = ssub.s32 1, %s22
  %s25 = scalar_select 0, %s24, %s22
  $region1: #{tpu_custom_call.1} parent=0
    #allocation2 [shape = 'u8[8192]{0}', space=vmem, size = 0x2000, scoped, tag = 'input window, operand 0, single buffered']
    #allocation3 [shape = 's32[1]{0}', space=sflag, size = 0x4, scoped, tag = 'scoped memory for tpu_custom_call.1']
    #allocation4 [shape = 's32[1]{0}', space=sflag, size = 0x4, scoped, tag = 'scoped memory for tpu_custom_call.1']
    #allocation5 [shape = 'u8[262144]{0}', space=vmem, size = 0x40000, scoped, tag = 'input window, operand 1, single buffered']
    #allocation6 [shape = 's32[1]{0}', space=sflag, size = 0x4, scoped, tag = 'scoped memory for tpu_custom_call.1']
    #allocation7 [shape = 'u8[147456]{0}', space=vmem, size = 0x24000, scoped, tag = 'input window, operand 2, single buffered']
    #allocation8 [shape = 'u8[2048]{0}', space=vmem, size = 0x800, scoped, tag = 'input window, operand 3, single buffered']
    #allocation9 [shape = 's32[1]{0}', space=sflag, size = 0x4, scoped, tag = 'scoped memory for tpu_custom_call.1']
    #allocation10 [shape = 'u8[147456]{0}', space=vmem, size = 0x24000, scoped, tag = 'input window, operand 4, single buffered']
    #allocation11 [shape = 'u8[147456]{0}', space=vmem, size = 0x24000, scoped, tag = 'input window, operand 5, single buffered']
    #allocation12 [shape = 's32[1]{0}', space=sflag, size = 0x4, scoped, tag = 'scoped memory for tpu_custom_call.1']
    #allocation13 [shape = 'u8[2048]{0}', space=vmem, size = 0x800, scoped, tag = 'input window, operand 6, single buffered']
    #allocation14 [shape = 'u8[512]{0}', space=vmem, size = 0x400, scoped, tag = 'input window, operand 8, single buffered']
    #allocation15 [shape = 's32[1]{0}', space=sflag, size = 0x4, scoped, tag = 'scoped memory for tpu_custom_call.1']
    #allocation16 [shape = 'u8[512]{0}', space=vmem, size = 0x400, scoped, tag = 'input window, operand 10, single buffered']
    #allocation17 [shape = 'u8[512]{0}', space=vmem, size = 0x400, scoped, tag = 'input window, operand 12, single buffered']
    #allocation18 [shape = 's32[1]{0}', space=sflag, size = 0x4, scoped, tag = 'scoped memory for tpu_custom_call.1']
    #allocation19 [shape = 'u8[36864]{0}', space=vmem, size = 0x9000, scoped, tag = 'input window, operand 13, single buffered']
    #allocation20 [shape = 'u8[512]{0}', space=vmem, size = 0x400, scoped, tag = 'input window, operand 14, single buffered']
    #allocation21 [shape = 's32[1]{0}', space=sflag, size = 0x4, scoped, tag = 'scoped memory for tpu_custom_call.1']
    #allocation22 [shape = 'u8[512]{0}', space=vmem, size = 0x400, scoped, tag = 'input window, operand 16, single buffered']
    #allocation23 [shape = 'u8[512]{0}', space=vmem, size = 0x400, scoped, tag = 'input window, operand 18, single buffered']
    #allocation24 [shape = 's32[1]{0}', space=sflag, size = 0x4, scoped, tag = 'scoped memory for tpu_custom_call.1']
    #allocation25 [shape = 'u8[1024]{0}', space=vmem, size = 0x400, scoped, tag = 'output window, operand 0, single buffered']
    %26 = vsyncpa [#allocation3], 0
    %27 = vsyncpa [#allocation6], 0
    %28 = vsyncpa [#allocation9], 0
    %29 = vsyncpa [#allocation12], 0
    %30 = vsyncpa [#allocation15], 0
    %31 = vsyncpa [#allocation18], 0
    %32 = vsyncpa [#allocation21], 0
    %33 = vsyncpa [#allocation24], 0
    %34 = vsyncpa [#allocation4], 0
    // Predicated region
    $region2: #{tpu_custom_call.1} parent=1 // pred_check
      _
    $region3: #{tpu_custom_call.1} parent=1 // pred_check_branch
      %36 = sbr.rel (0) target = $region5
    $region4: #{tpu_custom_call.1} parent=1 // pred_region
      %38 = vsyncadd [#allocation3], 0
      %s39 = sshll.u32 %s0, 4
      %s40 = int_to_ptr.hbm [resolvable:$true] %s39
      %s41 = sshll.u32 [#allocation2], 4
      %s42 = int_to_ptr.vmem [resolvable:$true] %s41
      %47 = dma.hbm_to_vmem [thread:$0]  %s40, 256, %s42, [#allocation3], 128, 128, 8
    $region5: #{tpu_custom_call.1} parent=1 // pred_fallthru
      _
    // Predicated region
    $region6: #{tpu_custom_call.1} parent=1 // pred_check
      _
    $region7: #{tpu_custom_call.1} parent=1 // pred_check_branch
      %49 = sbr.rel (0) target = $region9
    $region8: #{tpu_custom_call.1} parent=1 // pred_region
      %51 = vsyncadd [#allocation6], 0
      %s52 = sshll.u32 %s1, 4
      %s53 = int_to_ptr.hbm [resolvable:$true] %s52
      %s54 = sshll.u32 [#allocation5], 4
      %s55 = int_to_ptr.vmem [resolvable:$true] %s54
      %60 = dma.hbm_to_vmem [thread:$0]  %s53, 8192, %s55, [#allocation6], 512, 512, 32
    $region9: #{tpu_custom_call.1} parent=1 // pred_fallthru
      _
    // Predicated region
    $region10: #{tpu_custom_call.1} parent=1 // pred_check
      _
    $region11: #{tpu_custom_call.1} parent=1 // pred_check_branch
      %62 = sbr.rel (0) target = $region13
    $region12: #{tpu_custom_call.1} parent=1 // pred_region
      %64 = vsyncadd [#allocation6], 0
      %s65 = sshll.u32 %s2, 4
      %s66 = int_to_ptr.hbm [resolvable:$true] %s65
      %s67 = sshll.u32 [#allocation7], 4
      %s68 = int_to_ptr.vmem [resolvable:$true] %s67
      %73 = dma.hbm_to_vmem [thread:$0]  %s66, 4608, %s68, [#allocation6], 512, 512, 32
    $region13: #{tpu_custom_call.1} parent=1 // pred_fallthru
      _
    // Predicated region
    $region14: #{tpu_custom_call.1} parent=1 // pred_check
      _
    $region15: #{tpu_custom_call.1} parent=1 // pred_check_branch
      %75 = sbr.rel (0) target = $region17
    $region16: #{tpu_custom_call.1} parent=1 // pred_region
      %77 = vsyncadd [#allocation9], 0
      %s79 = sshll.u32 %s3, 4
      %s80 = int_to_ptr.hbm [resolvable:$true] %s79
      %s81 = sshll.u32 [#allocation8], 4
      %s82 = int_to_ptr.vmem [resolvable:$true] %s81
      %84 = dma.hbm_to_vmem [thread:$0]  %s80, 64, %s82, [#allocation9]
    $region17: #{tpu_custom_call.1} parent=1 // pred_fallthru
      _
    // Predicated region
    $region18: #{tpu_custom_call.1} parent=1 // pred_check
      _
    $region19: #{tpu_custom_call.1} parent=1 // pred_check_branch
      %86 = sbr.rel (0) target = $region21
    $region20: #{tpu_custom_call.1} parent=1 // pred_region
      %88 = vsyncadd [#allocation9], 0
      %s89 = sshll.u32 %s4, 4
      %s90 = int_to_ptr.hbm [resolvable:$true] %s89
      %s91 = sshll.u32 [#allocation10], 4
      %s92 = int_to_ptr.vmem [resolvable:$true] %s91
      %97 = dma.hbm_to_vmem [thread:$0]  %s90, 4608, %s92, [#allocation9], 512, 512, 32
    $region21: #{tpu_custom_call.1} parent=1 // pred_fallthru
      _
    // Predicated region
    $region22: #{tpu_custom_call.1} parent=1 // pred_check
      _
    $region23: #{tpu_custom_call.1} parent=1 // pred_check_branch
      %99 = sbr.rel (0) target = $region25
    $region24: #{tpu_custom_call.1} parent=1 // pred_region
      %101 = vsyncadd [#allocation12], 0
      %s102 = sshll.u32 %s5, 4
      %s103 = int_to_ptr.hbm [resolvable:$true] %s102
      %s104 = sshll.u32 [#allocation11], 4
      %s105 = int_to_ptr.vmem [resolvable:$true] %s104
      %110 = dma.hbm_to_vmem [thread:$0]  %s103, 4608, %s105, [#allocation12], 512, 512, 32
    $region25: #{tpu_custom_call.1} parent=1 // pred_fallthru
      _
    // Predicated region
    $region26: #{tpu_custom_call.1} parent=1 // pred_check
      _
    $region27: #{tpu_custom_call.1} parent=1 // pred_check_branch
      %112 = sbr.rel (0) target = $region29
    $region28: #{tpu_custom_call.1} parent=1 // pred_region
      %114 = vsyncadd [#allocation12], 0
      %s116 = sshll.u32 %s6, 4
      %s117 = int_to_ptr.hbm [resolvable:$true] %s116
      %s118 = sshll.u32 [#allocation13], 4
      %s119 = int_to_ptr.vmem [resolvable:$true] %s118
      %121 = dma.hbm_to_vmem [thread:$0]  %s117, 64, %s119, [#allocation12]
    $region29: #{tpu_custom_call.1} parent=1 // pred_fallthru
      _
    // Predicated region
    $region30: #{tpu_custom_call.1} parent=1 // pred_check
      _
    $region31: #{tpu_custom_call.1} parent=1 // pred_check_branch
      %123 = sbr.rel (0) target = $region33
    $region32: #{tpu_custom_call.1} parent=1 // pred_region
      _
    $region33: #{tpu_custom_call.1} parent=1 // pred_fallthru
      _
    // Predicated region
    $region34: #{tpu_custom_call.1} parent=1 // pred_check
      _
    $region35: #{tpu_custom_call.1} parent=1 // pred_check_branch
      %125 = sbr.rel (0) target = $region37
    $region36: #{tpu_custom_call.1} parent=1 // pred_region
      %127 = vsyncadd [#allocation15], 0
      %s129 = sshll.u32 %s8, 4
      %s130 = int_to_ptr.hbm [resolvable:$true] %s129
      %s131 = sshll.u32 [#allocation14], 4
      %s132 = int_to_ptr.vmem [resolvable:$true] %s131
      %134 = dma.hbm_to_vmem [thread:$0]  %s130, 16, %s132, [#allocation15]
    $region37: #{tpu_custom_call.1} parent=1 // pred_fallthru
      _
    // Predicated region
    $region38: #{tpu_custom_call.1} parent=1 // pred_check
      _
    $region39: #{tpu_custom_call.1} parent=1 // pred_check_branch
      %136 = sbr.rel (0) target = $region41
    $region40: #{tpu_custom_call.1} parent=1 // pred_region
      _
    $region41: #{tpu_custom_call.1} parent=1 // pred_fallthru
      _
    // Predicated region
    $region42: #{tpu_custom_call.1} parent=1 // pred_check
      _
    $region43: #{tpu_custom_call.1} parent=1 // pred_check_branch
      %138 = sbr.rel (0) target = $region45
    $region44: #{tpu_custom_call.1} parent=1 // pred_region
      %140 = vsyncadd [#allocation15], 0
      %s142 = sshll.u32 %s10, 4
      %s143 = int_to_ptr.hbm [resolvable:$true] %s142
      %s144 = sshll.u32 [#allocation16], 4
      %s145 = int_to_ptr.vmem [resolvable:$true] %s144
      %147 = dma.hbm_to_vmem [thread:$0]  %s143, 16, %s145, [#allocation15]
    $region45: #{tpu_custom_call.1} parent=1 // pred_fallthru
      _
    // Predicated region
    $region46: #{tpu_custom_call.1} parent=1 // pred_check
      _
    $region47: #{tpu_custom_call.1} parent=1 // pred_check_branch
      %149 = sbr.rel (0) target = $region49
    $region48: #{tpu_custom_call.1} parent=1 // pred_region
      _
    $region49: #{tpu_custom_call.1} parent=1 // pred_fallthru
      _
    // Predicated region
    $region50: #{tpu_custom_call.1} parent=1 // pred_check
      _
    $region51: #{tpu_custom_call.1} parent=1 // pred_check_branch
      %151 = sbr.rel (0) target = $region53
    $region52: #{tpu_custom_call.1} parent=1 // pred_region
      %153 = vsyncadd [#allocation18], 0
      %s155 = sshll.u32 %s12, 4
      %s156 = int_to_ptr.hbm [resolvable:$true] %s155
      %s157 = sshll.u32 [#allocation17], 4
      %s158 = int_to_ptr.vmem [resolvable:$true] %s157
      %160 = dma.hbm_to_vmem [thread:$0]  %s156, 16, %s158, [#allocation18]
    $region53: #{tpu_custom_call.1} parent=1 // pred_fallthru
      _
    // Predicated region
    $region54: #{tpu_custom_call.1} parent=1 // pred_check
      _
    $region55: #{tpu_custom_call.1} parent=1 // pred_check_branch
      %162 = sbr.rel (0) target = $region57
    $region56: #{tpu_custom_call.1} parent=1 // pred_region
      %164 = vsyncadd [#allocation18], 0
      %s165 = sshll.u32 %s13, 4
      %s166 = int_to_ptr.hbm [resolvable:$true] %s165
      %s167 = sshll.u32 [#allocation19], 4
      %s168 = int_to_ptr.vmem [resolvable:$true] %s167
      %173 = dma.hbm_to_vmem [thread:$0]  %s166, 1152, %s168, [#allocation18], 128, 128, 8
    $region57: #{tpu_custom_call.1} parent=1 // pred_fallthru
      _
    // Predicated region
    $region58: #{tpu_custom_call.1} parent=1 // pred_check
      _
    $region59: #{tpu_custom_call.1} parent=1 // pred_check_branch
      %175 = sbr.rel (0) target = $region61
    $region60: #{tpu_custom_call.1} parent=1 // pred_region
      %177 = vsyncadd [#allocation21], 0
      %s179 = sshll.u32 %s14, 4
      %s180 = int_to_ptr.hbm [resolvable:$true] %s179
      %s181 = sshll.u32 [#allocation20], 4
      %s182 = int_to_ptr.vmem [resolvable:$true] %s181
      %184 = dma.hbm_to_vmem [thread:$0]  %s180, 16, %s182, [#allocation21]
    $region61: #{tpu_custom_call.1} parent=1 // pred_fallthru
      _
    // Predicated region
    $region62: #{tpu_custom_call.1} parent=1 // pred_check
      _
    $region63: #{tpu_custom_call.1} parent=1 // pred_check_branch
      %186 = sbr.rel (0) target = $region65
    $region64: #{tpu_custom_call.1} parent=1 // pred_region
      _
    $region65: #{tpu_custom_call.1} parent=1 // pred_fallthru
      _
    // Predicated region
    $region66: #{tpu_custom_call.1} parent=1 // pred_check
      _
    $region67: #{tpu_custom_call.1} parent=1 // pred_check_branch
      %188 = sbr.rel (0) target = $region69
    $region68: #{tpu_custom_call.1} parent=1 // pred_region
      %190 = vsyncadd [#allocation21], 0
      %s192 = sshll.u32 %s16, 4
      %s193 = int_to_ptr.hbm [resolvable:$true] %s192
      %s194 = sshll.u32 [#allocation22], 4
      %s195 = int_to_ptr.vmem [resolvable:$true] %s194
      %197 = dma.hbm_to_vmem [thread:$0]  %s193, 16, %s195, [#allocation21]
    $region69: #{tpu_custom_call.1} parent=1 // pred_fallthru
      _
    // Predicated region
    $region70: #{tpu_custom_call.1} parent=1 // pred_check
      _
    $region71: #{tpu_custom_call.1} parent=1 // pred_check_branch
      %199 = sbr.rel (0) target = $region73
    $region72: #{tpu_custom_call.1} parent=1 // pred_region
      _
    $region73: #{tpu_custom_call.1} parent=1 // pred_fallthru
      _
    // Predicated region
    $region74: #{tpu_custom_call.1} parent=1 // pred_check
      _
    $region75: #{tpu_custom_call.1} parent=1 // pred_check_branch
      %201 = sbr.rel (0) target = $region77
    $region76: #{tpu_custom_call.1} parent=1 // pred_region
      %203 = vsyncadd [#allocation24], 0
      %s205 = sshll.u32 %s18, 4
      %s206 = int_to_ptr.hbm [resolvable:$true] %s205
      %s207 = sshll.u32 [#allocation23], 4
      %s208 = int_to_ptr.vmem [resolvable:$true] %s207
      %210 = dma.hbm_to_vmem [thread:$0]  %s206, 16, %s208, [#allocation24]
    $region77: #{tpu_custom_call.1} parent=1 // pred_fallthru
      _
    // Predicated region
    $region78: #{tpu_custom_call.1} parent=1 // pred_check
      _
    $region79: #{tpu_custom_call.1} parent=1 // pred_check_branch
      %212 = sbr.rel (0) target = $region81
    $region80: #{tpu_custom_call.1} parent=1 // pred_region
      _
    $region81: #{tpu_custom_call.1} parent=1 // pred_fallthru
      _
    // Predicated region
    $region82: #{tpu_custom_call.1} parent=1 // pred_check
      _
    $region83: #{tpu_custom_call.1} parent=1 // pred_check_branch
      %214 = sbr.rel (0) target = $region85
    $region84: #{tpu_custom_call.1} parent=1 // pred_region
      _
    $region85: #{tpu_custom_call.1} parent=1 // pred_fallthru
      _
    // Predicated region
    $region86: #{tpu_custom_call.1} parent=1 // pred_check
      _
    $region87: #{tpu_custom_call.1} parent=1 // pred_check_branch
      %216 = sbr.rel (0) target = $region89
    $region88: #{tpu_custom_call.1} parent=1 // pred_region
      %218 = dma.done [#allocation3], 256
    $region89: #{tpu_custom_call.1} parent=1 // pred_fallthru
      _
    // Predicated region
    $region90: #{tpu_custom_call.1} parent=1 // pred_check
      _
    $region91: #{tpu_custom_call.1} parent=1 // pred_check_branch
      %220 = sbr.rel (0) target = $region93
    $region92: #{tpu_custom_call.1} parent=1 // pred_region
      %222 = dma.done [#allocation6], 8192
    $region93: #{tpu_custom_call.1} parent=1 // pred_fallthru
      _
    // Predicated region
    $region94: #{tpu_custom_call.1} parent=1 // pred_check
      _
    $region95: #{tpu_custom_call.1} parent=1 // pred_check_branch
      %224 = sbr.rel (0) target = $region97
    $region96: #{tpu_custom_call.1} parent=1 // pred_region
      %226 = dma.done [#allocation6], 4608
    $region97: #{tpu_custom_call.1} parent=1 // pred_fallthru
      _
    // Predicated region
    $region98: #{tpu_custom_call.1} parent=1 // pred_check
      _
    $region99: #{tpu_custom_call.1} parent=1 // pred_check_branch
      %228 = sbr.rel (0) target = $region101
    $region100: #{tpu_custom_call.1} parent=1 // pred_region
      %230 = dma.done [#allocation9], 64
    $region101: #{tpu_custom_call.1} parent=1 // pred_fallthru
      _
    // Predicated region
    $region102: #{tpu_custom_call.1} parent=1 // pred_check
      _
    $region103: #{tpu_custom_call.1} parent=1 // pred_check_branch
      %232 = sbr.rel (0) target = $region105
    $region104: #{tpu_custom_call.1} parent=1 // pred_region
      %234 = dma.done [#allocation9], 4608
    $region105: #{tpu_custom_call.1} parent=1 // pred_fallthru
      _
    // Predicated region
    $region106: #{tpu_custom_call.1} parent=1 // pred_check
      _
    $region107: #{tpu_custom_call.1} parent=1 // pred_check_branch
      %236 = sbr.rel (0) target = $region109
    $region108: #{tpu_custom_call.1} parent=1 // pred_region
      %238 = dma.done [#allocation12], 4608
    $region109: #{tpu_custom_call.1} parent=1 // pred_fallthru
      _
    // Predicated region
    $region110: #{tpu_custom_call.1} parent=1 // pred_check
      _
    $region111: #{tpu_custom_call.1} parent=1 // pred_check_branch
      %240 = sbr.rel (0) target = $region113
    $region112: #{tpu_custom_call.1} parent=1 // pred_region
      %242 = dma.done [#allocation12], 64
    $region113: #{tpu_custom_call.1} parent=1 // pred_fallthru
      _
    // Predicated region
    $region114: #{tpu_custom_call.1} parent=1 // pred_check
      _
    $region115: #{tpu_custom_call.1} parent=1 // pred_check_branch
      %244 = sbr.rel (0) target = $region117
    $region116: #{tpu_custom_call.1} parent=1 // pred_region
      %246 = dma.done [#allocation15], 16
    $region117: #{tpu_custom_call.1} parent=1 // pred_fallthru
      _
    // Predicated region
    $region118: #{tpu_custom_call.1} parent=1 // pred_check
      _
    $region119: #{tpu_custom_call.1} parent=1 // pred_check_branch
      %248 = sbr.rel (0) target = $region121
    $region120: #{tpu_custom_call.1} parent=1 // pred_region
      %250 = dma.done [#allocation15], 16
    $region121: #{tpu_custom_call.1} parent=1 // pred_fallthru
      _
    // Predicated region
    $region122: #{tpu_custom_call.1} parent=1 // pred_check
      _
    $region123: #{tpu_custom_call.1} parent=1 // pred_check_branch
      %252 = sbr.rel (0) target = $region125
    $region124: #{tpu_custom_call.1} parent=1 // pred_region
      %254 = dma.done [#allocation18], 16
    $region125: #{tpu_custom_call.1} parent=1 // pred_fallthru
      _
    // Predicated region
    $region126: #{tpu_custom_call.1} parent=1 // pred_check
      _
    $region127: #{tpu_custom_call.1} parent=1 // pred_check_branch
      %256 = sbr.rel (0) target = $region129
    $region128: #{tpu_custom_call.1} parent=1 // pred_region
      %258 = dma.done [#allocation18], 1152
    $region129: #{tpu_custom_call.1} parent=1 // pred_fallthru
      _
    // Predicated region
    $region130: #{tpu_custom_call.1} parent=1 // pred_check
      _
    $region131: #{tpu_custom_call.1} parent=1 // pred_check_branch
      %260 = sbr.rel (0) target = $region133
    $region132: #{tpu_custom_call.1} parent=1 // pred_region
      %262 = dma.done [#allocation21], 16
    $region133: #{tpu_custom_call.1} parent=1 // pred_fallthru
      _
    // Predicated region
    $region134: #{tpu_custom_call.1} parent=1 // pred_check
      _
    $region135: #{tpu_custom_call.1} parent=1 // pred_check_branch
      %264 = sbr.rel (0) target = $region137
    $region136: #{tpu_custom_call.1} parent=1 // pred_region
      %266 = dma.done [#allocation21], 16
    $region137: #{tpu_custom_call.1} parent=1 // pred_fallthru
      _
    // Predicated region
    $region138: #{tpu_custom_call.1} parent=1 // pred_check
      _
    $region139: #{tpu_custom_call.1} parent=1 // pred_check_branch
      %268 = sbr.rel (0) target = $region141
    $region140: #{tpu_custom_call.1} parent=1 // pred_region
      %270 = dma.done [#allocation24], 16
    $region141: #{tpu_custom_call.1} parent=1 // pred_fallthru
      _
    %v271 = vld [vmem:[#allocation2] sm:$0xff]
    %v272 = vld [vmem:[#allocation2 + $0x8] sm:$0xff]
    %v273 = vld [vmem:[#allocation5] sm:$0xff]
    %v274 = vld [vmem:[#allocation5 + $0x8] sm:$0xff]
    %v275 = vld [vmem:[#allocation5 + $0x10] sm:$0xff]
    %v276 = vld [vmem:[#allocation5 + $0x18] sm:$0xff]
    %v277 = vld [vmem:[#allocation5 + $0x20] sm:$0xff]
    %v278 = vld [vmem:[#allocation5 + $0x28] sm:$0xff]
    %v279 = vld [vmem:[#allocation5 + $0x30] sm:$0xff]
    %v280 = vld [vmem:[#allocation5 + $0x38] sm:$0xff]
    %v281 = vld [vmem:[#allocation5 + $0x40] sm:$0xff]
    %v282 = vld [vmem:[#allocation5 + $0x48] sm:$0xff]
    %v283 = vld [vmem:[#allocation5 + $0x50] sm:$0xff]
    %v284 = vld [vmem:[#allocation5 + $0x58] sm:$0xff]
    %v285 = vld [vmem:[#allocation5 + $0x60] sm:$0xff]
    %v286 = vld [vmem:[#allocation5 + $0x68] sm:$0xff]
    %v287 = vld [vmem:[#allocation5 + $0x70] sm:$0xff]
    %v288 = vld [vmem:[#allocation5 + $0x78] sm:$0xff]
    %v289 = vld [vmem:[#allocation5 + $0x80] sm:$0xff]
    %v290 = vld [vmem:[#allocation5 + $0x88] sm:$0xff]
    %v291 = vld [vmem:[#allocation5 + $0x90] sm:$0xff]
    %v292 = vld [vmem:[#allocation5 + $0x98] sm:$0xff]
    %v293 = vld [vmem:[#allocation5 + $0xa0] sm:$0xff]
    %v294 = vld [vmem:[#allocation5 + $0xa8] sm:$0xff]
    %v295 = vld [vmem:[#allocation5 + $0xb0] sm:$0xff]
    %v296 = vld [vmem:[#allocation5 + $0xb8] sm:$0xff]
    %v297 = vld [vmem:[#allocation5 + $0xc0] sm:$0xff]
    %v298 = vld [vmem:[#allocation5 + $0xc8] sm:$0xff]
    %v299 = vld [vmem:[#allocation5 + $0xd0] sm:$0xff]
    %v300 = vld [vmem:[#allocation5 + $0xd8] sm:$0xff]
    %v301 = vld [vmem:[#allocation5 + $0xe0] sm:$0xff]
    %v302 = vld [vmem:[#allocation5 + $0xe8] sm:$0xff]
    %v303 = vld [vmem:[#allocation5 + $0xf0] sm:$0xff]
    %v304 = vld [vmem:[#allocation5 + $0xf8] sm:$0xff]
    %v305 = vld [vmem:[#allocation5 + $0x100] sm:$0xff]
    %v306 = vld [vmem:[#allocation5 + $0x108] sm:$0xff]
    %v307 = vld [vmem:[#allocation5 + $0x110] sm:$0xff]
    %v308 = vld [vmem:[#allocation5 + $0x118] sm:$0xff]
    %v309 = vld [vmem:[#allocation5 + $0x120] sm:$0xff]
    %v310 = vld [vmem:[#allocation5 + $0x128] sm:$0xff]
    %v311 = vld [vmem:[#allocation5 + $0x130] sm:$0xff]
    %v312 = vld [vmem:[#allocation5 + $0x138] sm:$0xff]
    %v313 = vld [vmem:[#allocation5 + $0x140] sm:$0xff]
    %v314 = vld [vmem:[#allocation5 + $0x148] sm:$0xff]
    %v315 = vld [vmem:[#allocation5 + $0x150] sm:$0xff]
    %v316 = vld [vmem:[#allocation5 + $0x158] sm:$0xff]
    %v317 = vld [vmem:[#allocation5 + $0x160] sm:$0xff]
    %v318 = vld [vmem:[#allocation5 + $0x168] sm:$0xff]
    %v319 = vld [vmem:[#allocation5 + $0x170] sm:$0xff]
    %v320 = vld [vmem:[#allocation5 + $0x178] sm:$0xff]
    %v321 = vld [vmem:[#allocation5 + $0x180] sm:$0xff]
    %v322 = vld [vmem:[#allocation5 + $0x188] sm:$0xff]
    %v323 = vld [vmem:[#allocation5 + $0x190] sm:$0xff]
    %v324 = vld [vmem:[#allocation5 + $0x198] sm:$0xff]
    %v325 = vld [vmem:[#allocation5 + $0x1a0] sm:$0xff]
    %v326 = vld [vmem:[#allocation5 + $0x1a8] sm:$0xff]
    %v327 = vld [vmem:[#allocation5 + $0x1b0] sm:$0xff]
    %v328 = vld [vmem:[#allocation5 + $0x1b8] sm:$0xff]
    %v329 = vld [vmem:[#allocation5 + $0x1c0] sm:$0xff]
    %v330 = vld [vmem:[#allocation5 + $0x1c8] sm:$0xff]
    %v331 = vld [vmem:[#allocation5 + $0x1d0] sm:$0xff]
    %v332 = vld [vmem:[#allocation5 + $0x1d8] sm:$0xff]
    %v333 = vld [vmem:[#allocation5 + $0x1e0] sm:$0xff]
    %v334 = vld [vmem:[#allocation5 + $0x1e8] sm:$0xff]
    %v335 = vld [vmem:[#allocation5 + $0x1f0] sm:$0xff]
    %v336 = vld [vmem:[#allocation5 + $0x1f8] sm:$0xff]
    %v337 = vld [vmem:[#allocation8] sm:$0xf]
    %v339 = vperm.slane %v337, 0
    %v340 = vperm.slane %v337, 1
    %v341 = vperm.slane %v337, 2
    %v342 = vperm.slane %v337, 3
    %347 = vmatpush.msra.mxu0 %v333
    %348 = vmatpush.msra.mxu0 %v329
    %349 = vmatpush.msra.mxu0 %v325
    %350 = vmatpush.msra.mxu0 %v321
    %351 = vmatpush.msra.mxu0 %v317
    %352 = vmatpush.msra.mxu0 %v313
    %353 = vmatpush.msra.mxu0 %v309
    %354 = vmatpush.msra.mxu0 %v305
    %355 = vmatpush.msra.mxu0 %v301
    %356 = vmatpush.msra.mxu0 %v297
    %357 = vmatpush.msra.mxu0 %v293
    %358 = vmatpush.msra.mxu0 %v289
    %359 = vmatpush.msra.mxu0 %v285
    %360 = vmatpush.msra.mxu0 %v281
    %361 = vmatpush.msra.mxu0 %v277
    %362 = vmatpush.msra.mxu0 %v273
    %363 = vmatmul.f32.gmra.mxu0 %v271
    %v364 = vpop.f32.mrf.mxu0
    %v365 = vadd.f32 %v339, %v364
    %366 = vmatmul.f32.gmra.mxu0 %v272
    %v367 = vpop.f32.mrf.mxu0
    %v368 = vadd.f32 %v339, %v367
    %369 = vdwg.mxu0
    %370 = vmatpush.msra.mxu0 %v334
    %371 = vmatpush.msra.mxu0 %v330
    %372 = vmatpush.msra.mxu0 %v326
    %373 = vmatpush.msra.mxu0 %v322
    %374 = vmatpush.msra.mxu0 %v318
    %375 = vmatpush.msra.mxu0 %v314
    %376 = vmatpush.msra.mxu0 %v310
    %377 = vmatpush.msra.mxu0 %v306
    %378 = vmatpush.msra.mxu0 %v302
    %379 = vmatpush.msra.mxu0 %v298
    %380 = vmatpush.msra.mxu0 %v294
    %381 = vmatpush.msra.mxu0 %v290
    %382 = vmatpush.msra.mxu0 %v286
    %383 = vmatpush.msra.mxu0 %v282
    %384 = vmatpush.msra.mxu0 %v278
    %385 = vmatpush.msra.mxu0 %v274
    %386 = vmatmul.f32.gmra.mxu0 %v271
    %v387 = vpop.f32.mrf.mxu0
    %v388 = vadd.f32 %v340, %v387
    %389 = vmatmul.f32.gmra.mxu0 %v272
    %v390 = vpop.f32.mrf.mxu0
    %v391 = vadd.f32 %v340, %v390
    %392 = vdwg.mxu0
    %393 = vmatpush.msra.mxu0 %v335
    %394 = vmatpush.msra.mxu0 %v331
    %395 = vmatpush.msra.mxu0 %v327
    %396 = vmatpush.msra.mxu0 %v323
    %397 = vmatpush.msra.mxu0 %v319
    %398 = vmatpush.msra.mxu0 %v315
    %399 = vmatpush.msra.mxu0 %v311
    %400 = vmatpush.msra.mxu0 %v307
    %401 = vmatpush.msra.mxu0 %v303
    %402 = vmatpush.msra.mxu0 %v299
    %403 = vmatpush.msra.mxu0 %v295
    %404 = vmatpush.msra.mxu0 %v291
    %405 = vmatpush.msra.mxu0 %v287
    %406 = vmatpush.msra.mxu0 %v283
    %407 = vmatpush.msra.mxu0 %v279
    %408 = vmatpush.msra.mxu0 %v275
    %409 = vmatmul.f32.gmra.mxu0 %v271
    %v410 = vpop.f32.mrf.mxu0
    %v411 = vadd.f32 %v341, %v410
    %412 = vmatmul.f32.gmra.mxu0 %v272
    %v413 = vpop.f32.mrf.mxu0
    %v414 = vadd.f32 %v341, %v413
    %415 = vdwg.mxu0
    %416 = vmatpush.msra.mxu0 %v336
    %417 = vmatpush.msra.mxu0 %v332
    %418 = vmatpush.msra.mxu0 %v328
    %419 = vmatpush.msra.mxu0 %v324
    %420 = vmatpush.msra.mxu0 %v320
    %421 = vmatpush.msra.mxu0 %v316
    %422 = vmatpush.msra.mxu0 %v312
    %423 = vmatpush.msra.mxu0 %v308
    %424 = vmatpush.msra.mxu0 %v304
    %425 = vmatpush.msra.mxu0 %v300
    %426 = vmatpush.msra.mxu0 %v296
    %427 = vmatpush.msra.mxu0 %v292
    %428 = vmatpush.msra.mxu0 %v288
    %429 = vmatpush.msra.mxu0 %v284
    %430 = vmatpush.msra.mxu0 %v280
    %431 = vmatpush.msra.mxu0 %v276
    %432 = vmatmul.f32.gmra.mxu0 %v271
    %v433 = vpop.f32.mrf.mxu0
    %v434 = vadd.f32 %v342, %v433
    %435 = vmatmul.f32.gmra.mxu0 %v272
    %v436 = vpop.f32.mrf.mxu0
    %v437 = vadd.f32 %v342, %v436
    %438 = vdwg.mxu0
    %v439 = vld [vmem:[#allocation7] sm:$0xff]
    %v440 = vld [vmem:[#allocation7 + $0x8] sm:$0xff]
    %v441 = vld [vmem:[#allocation7 + $0x10] sm:$0xff]
    %v442 = vld [vmem:[#allocation7 + $0x18] sm:$0xff]
    %v443 = vld [vmem:[#allocation7 + $0x20] sm:$0xff]
    %v444 = vld [vmem:[#allocation7 + $0x28] sm:$0xff]
    %v445 = vld [vmem:[#allocation7 + $0x30] sm:$0xff]
    %v446 = vld [vmem:[#allocation7 + $0x38] sm:$0xff]
    %v447 = vld [vmem:[#allocation7 + $0x40] sm:$0xff]
    %v448 = vld [vmem:[#allocation7 + $0x48] sm:$0xff]
    %v449 = vld [vmem:[#allocation7 + $0x50] sm:$0xff]
    %v450 = vld [vmem:[#allocation7 + $0x58] sm:$0xff]
    %v451 = vld [vmem:[#allocation7 + $0x60] sm:$0xff]
    %v452 = vld [vmem:[#allocation7 + $0x68] sm:$0xff]
    %v453 = vld [vmem:[#allocation7 + $0x70] sm:$0xff]
    %v454 = vld [vmem:[#allocation7 + $0x78] sm:$0xff]
    %v455 = vld [vmem:[#allocation7 + $0x80] sm:$0xff]
    %v456 = vld [vmem:[#allocation7 + $0x88] sm:$0xff]
    %v457 = vld [vmem:[#allocation7 + $0x90] sm:$0xff]
    %v458 = vld [vmem:[#allocation7 + $0x98] sm:$0xff]
    %v459 = vld [vmem:[#allocation7 + $0xa0] sm:$0xff]
    %v460 = vld [vmem:[#allocation7 + $0xa8] sm:$0xff]
    %v461 = vld [vmem:[#allocation7 + $0xb0] sm:$0xff]
    %v462 = vld [vmem:[#allocation7 + $0xb8] sm:$0xff]
    %v463 = vld [vmem:[#allocation7 + $0xc0] sm:$0xff]
    %v464 = vld [vmem:[#allocation7 + $0xc8] sm:$0xff]
    %v465 = vld [vmem:[#allocation7 + $0xd0] sm:$0xff]
    %v466 = vld [vmem:[#allocation7 + $0xd8] sm:$0xff]
    %v467 = vld [vmem:[#allocation7 + $0xe0] sm:$0xff]
    %v468 = vld [vmem:[#allocation7 + $0xe8] sm:$0xff]
    %v469 = vld [vmem:[#allocation7 + $0xf0] sm:$0xff]
    %v470 = vld [vmem:[#allocation7 + $0xf8] sm:$0xff]
    %v471 = vld [vmem:[#allocation7 + $0x100] sm:$0xff]
    %v472 = vld [vmem:[#allocation7 + $0x108] sm:$0xff]
    %v473 = vld [vmem:[#allocation7 + $0x110] sm:$0xff]
    %v474 = vld [vmem:[#allocation7 + $0x118] sm:$0xff]
    %v475 = vld [vmem:[#allocation10] sm:$0xff]
    %v476 = vld [vmem:[#allocation10 + $0x8] sm:$0xff]
    %v477 = vld [vmem:[#allocation10 + $0x10] sm:$0xff]
    %v478 = vld [vmem:[#allocation10 + $0x18] sm:$0xff]
    %v479 = vld [vmem:[#allocation10 + $0x20] sm:$0xff]
    %v480 = vld [vmem:[#allocation10 + $0x28] sm:$0xff]
    %v481 = vld [vmem:[#allocation10 + $0x30] sm:$0xff]
    %v482 = vld [vmem:[#allocation10 + $0x38] sm:$0xff]
    %v483 = vld [vmem:[#allocation10 + $0x40] sm:$0xff]
    %v484 = vld [vmem:[#allocation10 + $0x48] sm:$0xff]
    %v485 = vld [vmem:[#allocation10 + $0x50] sm:$0xff]
    %v486 = vld [vmem:[#allocation10 + $0x58] sm:$0xff]
    %v487 = vld [vmem:[#allocation10 + $0x60] sm:$0xff]
    %v488 = vld [vmem:[#allocation10 + $0x68] sm:$0xff]
    %v489 = vld [vmem:[#allocation10 + $0x70] sm:$0xff]
    %v490 = vld [vmem:[#allocation10 + $0x78] sm:$0xff]
    %v491 = vld [vmem:[#allocation10 + $0x80] sm:$0xff]
    %v492 = vld [vmem:[#allocation10 + $0x88] sm:$0xff]
    %v493 = vld [vmem:[#allocation10 + $0x90] sm:$0xff]
    %v494 = vld [vmem:[#allocation10 + $0x98] sm:$0xff]
    %v495 = vld [vmem:[#allocation10 + $0xa0] sm:$0xff]
    %v496 = vld [vmem:[#allocation10 + $0xa8] sm:$0xff]
    %v497 = vld [vmem:[#allocation10 + $0xb0] sm:$0xff]
    %v498 = vld [vmem:[#allocation10 + $0xb8] sm:$0xff]
    %v499 = vld [vmem:[#allocation10 + $0xc0] sm:$0xff]
    %v500 = vld [vmem:[#allocation10 + $0xc8] sm:$0xff]
    %v501 = vld [vmem:[#allocation10 + $0xd0] sm:$0xff]
    %v502 = vld [vmem:[#allocation10 + $0xd8] sm:$0xff]
    %v503 = vld [vmem:[#allocation10 + $0xe0] sm:$0xff]
    %v504 = vld [vmem:[#allocation10 + $0xe8] sm:$0xff]
    %v505 = vld [vmem:[#allocation10 + $0xf0] sm:$0xff]
    %v506 = vld [vmem:[#allocation10 + $0xf8] sm:$0xff]
    %v507 = vld [vmem:[#allocation10 + $0x100] sm:$0xff]
    %v508 = vld [vmem:[#allocation10 + $0x108] sm:$0xff]
    %v509 = vld [vmem:[#allocation10 + $0x110] sm:$0xff]
    %v510 = vld [vmem:[#allocation10 + $0x118] sm:$0xff]
    %v511 = vld [vmem:[#allocation11] sm:$0xff]
    %v512 = vld [vmem:[#allocation11 + $0x8] sm:$0xff]
    %v513 = vld [vmem:[#allocation11 + $0x10] sm:$0xff]
    %v514 = vld [vmem:[#allocation11 + $0x18] sm:$0xff]
    %v515 = vld [vmem:[#allocation11 + $0x20] sm:$0xff]
    %v516 = vld [vmem:[#allocation11 + $0x28] sm:$0xff]
    %v517 = vld [vmem:[#allocation11 + $0x30] sm:$0xff]
    %v518 = vld [vmem:[#allocation11 + $0x38] sm:$0xff]
    %v519 = vld [vmem:[#allocation11 + $0x40] sm:$0xff]
    %v520 = vld [vmem:[#allocation11 + $0x48] sm:$0xff]
    %v521 = vld [vmem:[#allocation11 + $0x50] sm:$0xff]
    %v522 = vld [vmem:[#allocation11 + $0x58] sm:$0xff]
    %v523 = vld [vmem:[#allocation11 + $0x60] sm:$0xff]
    %v524 = vld [vmem:[#allocation11 + $0x68] sm:$0xff]
    %v525 = vld [vmem:[#allocation11 + $0x70] sm:$0xff]
    %v526 = vld [vmem:[#allocation11 + $0x78] sm:$0xff]
    %v527 = vld [vmem:[#allocation11 + $0x80] sm:$0xff]
    %v528 = vld [vmem:[#allocation11 + $0x88] sm:$0xff]
    %v529 = vld [vmem:[#allocation11 + $0x90] sm:$0xff]
    %v530 = vld [vmem:[#allocation11 + $0x98] sm:$0xff]
    %v531 = vld [vmem:[#allocation11 + $0xa0] sm:$0xff]
    %v532 = vld [vmem:[#allocation11 + $0xa8] sm:$0xff]
    %v533 = vld [vmem:[#allocation11 + $0xb0] sm:$0xff]
    %v534 = vld [vmem:[#allocation11 + $0xb8] sm:$0xff]
    %v535 = vld [vmem:[#allocation11 + $0xc0] sm:$0xff]
    %v536 = vld [vmem:[#allocation11 + $0xc8] sm:$0xff]
    %v537 = vld [vmem:[#allocation11 + $0xd0] sm:$0xff]
    %v538 = vld [vmem:[#allocation11 + $0xd8] sm:$0xff]
    %v539 = vld [vmem:[#allocation11 + $0xe0] sm:$0xff]
    %v540 = vld [vmem:[#allocation11 + $0xe8] sm:$0xff]
    %v541 = vld [vmem:[#allocation11 + $0xf0] sm:$0xff]
    %v542 = vld [vmem:[#allocation11 + $0xf8] sm:$0xff]
    %v543 = vld [vmem:[#allocation11 + $0x100] sm:$0xff]
    %v544 = vld [vmem:[#allocation11 + $0x108] sm:$0xff]
    %v545 = vld [vmem:[#allocation11 + $0x110] sm:$0xff]
    %v546 = vld [vmem:[#allocation11 + $0x118] sm:$0xff]
    %v547 = vld [vmem:[#allocation13] sm:$0xf]
    %vm548 = vcmask 588800
    %v550 = vsel %vm548, 0.0, 0
    %552 = vmatpush.msra.mxu0 0.0
    %553 = vmatpush.msra.mxu0 0.0
    %554 = vmatpush.msra.mxu0 0.0
    %555 = vmatpush.msra.mxu0 0.0
    %556 = vmatpush.msra.mxu0 0.0
    %557 = vmatpush.msra.mxu0 0.0
    %558 = vmatpush.msra.mxu0 0.0
    %559 = vmatpush.msra.mxu0 %v471
    %560 = vmatpush.msra.mxu0 %v467
    %561 = vmatpush.msra.mxu0 %v463
    %562 = vmatpush.msra.mxu0 %v459
    %563 = vmatpush.msra.mxu0 %v455
    %564 = vmatpush.msra.mxu0 %v451
    %565 = vmatpush.msra.mxu0 %v447
    %566 = vmatpush.msra.mxu0 %v443
    %567 = vmatpush.msra.mxu0 %v439
    %568 = vmatmul.f32.gmra.mxu0 %v550
    %v569 = vpop.f32.mrf.mxu0
    %v570 = vadd.f32 0.0, %v569
    %571 = vdwg.mxu0
    %572 = vmatpush.msra.mxu0 0.0
    %573 = vmatpush.msra.mxu0 0.0
    %574 = vmatpush.msra.mxu0 0.0
    %575 = vmatpush.msra.mxu0 0.0
    %576 = vmatpush.msra.mxu0 0.0
    %577 = vmatpush.msra.mxu0 0.0
    %578 = vmatpush.msra.mxu0 0.0
    %579 = vmatpush.msra.mxu0 %v472
    %580 = vmatpush.msra.mxu0 %v468
    %581 = vmatpush.msra.mxu0 %v464
    %582 = vmatpush.msra.mxu0 %v460
    %583 = vmatpush.msra.mxu0 %v456
    %584 = vmatpush.msra.mxu0 %v452
    %585 = vmatpush.msra.mxu0 %v448
    %586 = vmatpush.msra.mxu0 %v444
    %587 = vmatpush.msra.mxu0 %v440
    %588 = vmatmul.f32.gmra.mxu0 %v550
    %v589 = vpop.f32.mrf.mxu0
    %v590 = vadd.f32 0.0, %v589
    %591 = vdwg.mxu0
    %592 = vmatpush.msra.mxu0 0.0
    %593 = vmatpush.msra.mxu0 0.0
    %594 = vmatpush.msra.mxu0 0.0
    %595 = vmatpush.msra.mxu0 0.0
    %596 = vmatpush.msra.mxu0 0.0
    %597 = vmatpush.msra.mxu0 0.0
    %598 = vmatpush.msra.mxu0 0.0
    %599 = vmatpush.msra.mxu0 %v473
    %600 = vmatpush.msra.mxu0 %v469
    %601 = vmatpush.msra.mxu0 %v465
    %602 = vmatpush.msra.mxu0 %v461
    %603 = vmatpush.msra.mxu0 %v457
    %604 = vmatpush.msra.mxu0 %v453
    %605 = vmatpush.msra.mxu0 %v449
    %606 = vmatpush.msra.mxu0 %v445
    %607 = vmatpush.msra.mxu0 %v441
    %608 = vmatmul.f32.gmra.mxu0 %v550
    %v609 = vpop.f32.mrf.mxu0
    %v610 = vadd.f32 0.0, %v609
    %611 = vdwg.mxu0
    %612 = vmatpush.msra.mxu0 0.0
    %613 = vmatpush.msra.mxu0 0.0
    %614 = vmatpush.msra.mxu0 0.0
    %615 = vmatpush.msra.mxu0 0.0
    %616 = vmatpush.msra.mxu0 0.0
    %617 = vmatpush.msra.mxu0 0.0
    %618 = vmatpush.msra.mxu0 0.0
    %619 = vmatpush.msra.mxu0 %v474
    %620 = vmatpush.msra.mxu0 %v470
    %621 = vmatpush.msra.mxu0 %v466
    %622 = vmatpush.msra.mxu0 %v462
    %623 = vmatpush.msra.mxu0 %v458
    %624 = vmatpush.msra.mxu0 %v454
    %625 = vmatpush.msra.mxu0 %v450
    %626 = vmatpush.msra.mxu0 %v446
    %627 = vmatpush.msra.mxu0 %v442
    %628 = vmatmul.f32.gmra.mxu0 %v550
    %v629 = vpop.f32.mrf.mxu0
    %v630 = vadd.f32 0.0, %v629
    %631 = vdwg.mxu0
    %v636 = vrot.slane %v570, 1
    %v637 = vrot.slane %v590, 1
    %v638 = vrot.slane %v610, 1
    %v639 = vrot.slane %v630, 1
    %v648 = vadd.f32 %v365, %v570
    %v649 = vadd.f32 %v388, %v590
    %v650 = vadd.f32 %v411, %v610
    %v651 = vadd.f32 %v434, %v630
    %v652 = vadd.f32 %v368, %v636
    %v653 = vadd.f32 %v391, %v637
    %v654 = vadd.f32 %v414, %v638
    %v655 = vadd.f32 %v437, %v639
    %v656 = vxor.u32 %v648, 2147483648
    %v657 = vxor.u32 %v649, 2147483648
    %v658 = vxor.u32 %v650, 2147483648
    %v659 = vxor.u32 %v652, 2147483648
    %v660 = vxor.u32 %v653, 2147483648
    %v661 = vxor.u32 %v654, 2147483648
    %v662 = vmul.f32 %v656, 1.442695
    %v663 = vpow.pop %v662
    %v664 = vmul.f32 %v657, 1.442695
    %v665 = vpow.pop %v664
    %v666 = vmul.f32 %v658, 1.442695
    %v667 = vpow.pop %v666
    %v668 = vmul.f32 %v659, 1.442695
    %v669 = vpow.pop %v668
    %v670 = vmul.f32 %v660, 1.442695
    %v671 = vpow.pop %v670
    %v672 = vmul.f32 %v661, 1.442695
    %v673 = vpow.pop %v672
    %v674 = vadd.f32 %v663, 1.0
    %v675 = vadd.f32 %v665, 1.0
    %v676 = vadd.f32 %v667, 1.0
    %v677 = vadd.f32 %v669, 1.0
    %v678 = vadd.f32 %v671, 1.0
    %v679 = vadd.f32 %v673, 1.0
    %v680 = vrcp.pop %v674
    %v681 = vmul.f32 %v674, %v680
    %v682 = vsub.f32 1.0, %v681
    %v683 = vmul.f32 %v680, %v682
    %v684 = vadd.f32 %v680, %v683
    %vm685 = vweird.f32 %v674
    %vm686 = vweird.f32 %v680
    %vm687 = vmor %vm685, %vm686
    %v688 = vsel %vm687, %v680, %v684
    %v689 = vand.u32 2147483647, %v674
    %vm690 = vcmp.eq.f32.partialorder %v689, 8.507059e+37
    %v691 = vand.u32 %v674, 2147483648
    %v692 = vor.u32 1.1754944e-38, %v691
    %v693 = vsel %vm690, %v692, %v688
    %v694 = vmul.f32 1.0, %v693
    %v695 = vrcp.pop %v675
    %v696 = vmul.f32 %v675, %v695
    %v697 = vsub.f32 1.0, %v696
    %v698 = vmul.f32 %v695, %v697
    %v699 = vadd.f32 %v695, %v698
    %vm700 = vweird.f32 %v675
    %vm701 = vweird.f32 %v695
    %vm702 = vmor %vm700, %vm701
    %v703 = vsel %vm702, %v695, %v699
    %v704 = vand.u32 2147483647, %v675
    %vm705 = vcmp.eq.f32.partialorder %v704, 8.507059e+37
    %v706 = vand.u32 %v675, 2147483648
    %v707 = vor.u32 1.1754944e-38, %v706
    %v708 = vsel %vm705, %v707, %v703
    %v709 = vmul.f32 1.0, %v708
    %v710 = vrcp.pop %v676
    %v711 = vmul.f32 %v676, %v710
    %v712 = vsub.f32 1.0, %v711
    %v713 = vmul.f32 %v710, %v712
    %v714 = vadd.f32 %v710, %v713
    %vm715 = vweird.f32 %v676
    %vm716 = vweird.f32 %v710
    %vm717 = vmor %vm715, %vm716
    %v718 = vsel %vm717, %v710, %v714
    %v719 = vand.u32 2147483647, %v676
    %vm720 = vcmp.eq.f32.partialorder %v719, 8.507059e+37
    %v721 = vand.u32 %v676, 2147483648
    %v722 = vor.u32 1.1754944e-38, %v721
    %v723 = vsel %vm720, %v722, %v718
    %v724 = vmul.f32 1.0, %v723
    %v725 = vrcp.pop %v677
    %v726 = vmul.f32 %v677, %v725
    %v727 = vsub.f32 1.0, %v726
    %v728 = vmul.f32 %v725, %v727
    %v729 = vadd.f32 %v725, %v728
    %vm730 = vweird.f32 %v677
    %vm731 = vweird.f32 %v725
    %vm732 = vmor %vm730, %vm731
    %v733 = vsel %vm732, %v725, %v729
    %v734 = vand.u32 2147483647, %v677
    %vm735 = vcmp.eq.f32.partialorder %v734, 8.507059e+37
    %v736 = vand.u32 %v677, 2147483648
    %v737 = vor.u32 1.1754944e-38, %v736
    %v738 = vsel %vm735, %v737, %v733
    %v739 = vmul.f32 1.0, %v738
    %v740 = vrcp.pop %v678
    %v741 = vmul.f32 %v678, %v740
    %v742 = vsub.f32 1.0, %v741
    %v743 = vmul.f32 %v740, %v742
    %v744 = vadd.f32 %v740, %v743
    %vm745 = vweird.f32 %v678
    %vm746 = vweird.f32 %v740
    %vm747 = vmor %vm745, %vm746
    %v748 = vsel %vm747, %v740, %v744
    %v749 = vand.u32 2147483647, %v678
    %vm750 = vcmp.eq.f32.partialorder %v749, 8.507059e+37
    %v751 = vand.u32 %v678, 2147483648
    %v752 = vor.u32 1.1754944e-38, %v751
    %v753 = vsel %vm750, %v752, %v748
    %v754 = vmul.f32 1.0, %v753
    %v755 = vrcp.pop %v679
    %v756 = vmul.f32 %v679, %v755
    %v757 = vsub.f32 1.0, %v756
    %v758 = vmul.f32 %v755, %v757
    %v759 = vadd.f32 %v755, %v758
    %vm760 = vweird.f32 %v679
    %vm761 = vweird.f32 %v755
    %vm762 = vmor %vm760, %vm761
    %v763 = vsel %vm762, %v755, %v759
    %v764 = vand.u32 2147483647, %v679
    %vm765 = vcmp.eq.f32.partialorder %v764, 8.507059e+37
    %v766 = vand.u32 %v679, 2147483648
    %v767 = vor.u32 1.1754944e-38, %v766
    %v768 = vsel %vm765, %v767, %v763
    %v769 = vmul.f32 1.0, %v768
    %v770 = vtanh.pop %v651
    %v771 = vtanh.pop %v655
    %v772 = vmul.f32 %v709, 0.0
    %v773 = vmul.f32 %v754, 0.0
    %v774 = vmul.f32 %v694, %v770
    %v775 = vmul.f32 %v739, %v771
    %v776 = vadd.f32 %v772, %v774
    %v777 = vadd.f32 %v773, %v775
    %v778 = vtanh.pop %v776
    %v779 = vtanh.pop %v777
    %v780 = vmul.f32 %v724, %v778
    %v781 = vmul.f32 %v769, %v779
    %v784 = vrot.slane %v781, 7
    %vm785 = vcmask 1041409
    %v786 = vsel %vm785, %v784, %v780
    %v787 = vsel %vm548, %v786, 0
    %789 = vmatpush.msra.mxu0 0.0
    %790 = vmatpush.msra.mxu0 0.0
    %791 = vmatpush.msra.mxu0 0.0
    %792 = vmatpush.msra.mxu0 0.0
    %793 = vmatpush.msra.mxu0 0.0
    %794 = vmatpush.msra.mxu0 0.0
    %795 = vmatpush.msra.mxu0 0.0
    %796 = vmatpush.msra.mxu0 %v471
    %797 = vmatpush.msra.mxu0 %v467
    %798 = vmatpush.msra.mxu0 %v463
    %799 = vmatpush.msra.mxu0 %v459
    %800 = vmatpush.msra.mxu0 %v455
    %801 = vmatpush.msra.mxu0 %v451
    %802 = vmatpush.msra.mxu0 %v447
    %803 = vmatpush.msra.mxu0 %v443
    %804 = vmatpush.msra.mxu0 %v439
    %805 = vmatmul.f32.gmra.mxu0 %v787
    %v806 = vpop.f32.mrf.mxu0
    %v807 = vadd.f32 0.0, %v806
    %808 = vdwg.mxu0
    %809 = vmatpush.msra.mxu0 0.0
    %810 = vmatpush.msra.mxu0 0.0
    %811 = vmatpush.msra.mxu0 0.0
    %812 = vmatpush.msra.mxu0 0.0
    %813 = vmatpush.msra.mxu0 0.0
    %814 = vmatpush.msra.mxu0 0.0
    %815 = vmatpush.msra.mxu0 0.0
    %816 = vmatpush.msra.mxu0 %v472
    %817 = vmatpush.msra.mxu0 %v468
    %818 = vmatpush.msra.mxu0 %v464
    %819 = vmatpush.msra.mxu0 %v460
    %820 = vmatpush.msra.mxu0 %v456
    %821 = vmatpush.msra.mxu0 %v452
    %822 = vmatpush.msra.mxu0 %v448
    %823 = vmatpush.msra.mxu0 %v444
    %824 = vmatpush.msra.mxu0 %v440
    %825 = vmatmul.f32.gmra.mxu0 %v787
    %v826 = vpop.f32.mrf.mxu0
    %v827 = vadd.f32 0.0, %v826
    %828 = vdwg.mxu0
    %829 = vmatpush.msra.mxu0 0.0
    %830 = vmatpush.msra.mxu0 0.0
    %831 = vmatpush.msra.mxu0 0.0
    %832 = vmatpush.msra.mxu0 0.0
    %833 = vmatpush.msra.mxu0 0.0
    %834 = vmatpush.msra.mxu0 0.0
    %835 = vmatpush.msra.mxu0 0.0
    %836 = vmatpush.msra.mxu0 %v473
    %837 = vmatpush.msra.mxu0 %v469
    %838 = vmatpush.msra.mxu0 %v465
    %839 = vmatpush.msra.mxu0 %v461
    %840 = vmatpush.msra.mxu0 %v457
    %841 = vmatpush.msra.mxu0 %v453
    %842 = vmatpush.msra.mxu0 %v449
    %843 = vmatpush.msra.mxu0 %v445
    %844 = vmatpush.msra.mxu0 %v441
    %845 = vmatmul.f32.gmra.mxu0 %v787
    %v846 = vpop.f32.mrf.mxu0
    %v847 = vadd.f32 0.0, %v846
    %848 = vdwg.mxu0
    %849 = vmatpush.msra.mxu0 0.0
    %850 = vmatpush.msra.mxu0 0.0
    %851 = vmatpush.msra.mxu0 0.0
    %852 = vmatpush.msra.mxu0 0.0
    %853 = vmatpush.msra.mxu0 0.0
    %854 = vmatpush.msra.mxu0 0.0
    %855 = vmatpush.msra.mxu0 0.0
    %856 = vmatpush.msra.mxu0 %v474
    %857 = vmatpush.msra.mxu0 %v470
    %858 = vmatpush.msra.mxu0 %v466
    %859 = vmatpush.msra.mxu0 %v462
    %860 = vmatpush.msra.mxu0 %v458
    %861 = vmatpush.msra.mxu0 %v454
    %862 = vmatpush.msra.mxu0 %v450
    %863 = vmatpush.msra.mxu0 %v446
    %864 = vmatpush.msra.mxu0 %v442
    %865 = vmatmul.f32.gmra.mxu0 %v787
    %v866 = vpop.f32.mrf.mxu0
    %v867 = vadd.f32 0.0, %v866
    %868 = vdwg.mxu0
    %v873 = vrot.slane %v807, 7
    %v874 = vrot.slane %v827, 7
    %v875 = vrot.slane %v847, 7
    %v876 = vrot.slane %v867, 7
    %v885 = vadd.f32 %v365, %v873
    %v886 = vadd.f32 %v388, %v874
    %v887 = vadd.f32 %v411, %v875
    %v888 = vadd.f32 %v434, %v876
    %v889 = vadd.f32 %v368, %v807
    %v890 = vadd.f32 %v391, %v827
    %v891 = vadd.f32 %v414, %v847
    %v892 = vadd.f32 %v437, %v867
    %v893 = vxor.u32 %v885, 2147483648
    %v894 = vxor.u32 %v886, 2147483648
    %v895 = vxor.u32 %v887, 2147483648
    %v896 = vxor.u32 %v889, 2147483648
    %v897 = vxor.u32 %v890, 2147483648
    %v898 = vxor.u32 %v891, 2147483648
    %v899 = vmul.f32 %v893, 1.442695
    %v900 = vpow.pop %v899
    %v901 = vmul.f32 %v894, 1.442695
    %v902 = vpow.pop %v901
    %v903 = vmul.f32 %v895, 1.442695
    %v904 = vpow.pop %v903
    %v905 = vmul.f32 %v896, 1.442695
    %v906 = vpow.pop %v905
    %v907 = vmul.f32 %v897, 1.442695
    %v908 = vpow.pop %v907
    %v909 = vmul.f32 %v898, 1.442695
    %v910 = vpow.pop %v909
    %v911 = vadd.f32 %v900, 1.0
    %v912 = vadd.f32 %v902, 1.0
    %v913 = vadd.f32 %v904, 1.0
    %v914 = vadd.f32 %v906, 1.0
    %v915 = vadd.f32 %v908, 1.0
    %v916 = vadd.f32 %v910, 1.0
    %v917 = vrcp.pop %v911
    %v918 = vmul.f32 %v911, %v917
    %v919 = vsub.f32 1.0, %v918
    %v920 = vmul.f32 %v917, %v919
    %v921 = vadd.f32 %v917, %v920
    %vm922 = vweird.f32 %v911
    %vm923 = vweird.f32 %v917
    %vm924 = vmor %vm922, %vm923
    %v925 = vsel %vm924, %v917, %v921
    %v926 = vand.u32 2147483647, %v911
    %vm927 = vcmp.eq.f32.partialorder %v926, 8.507059e+37
    %v928 = vand.u32 %v911, 2147483648
    %v929 = vor.u32 1.1754944e-38, %v928
    %v930 = vsel %vm927, %v929, %v925
    %v931 = vmul.f32 1.0, %v930
    %v932 = vrcp.pop %v912
    %v933 = vmul.f32 %v912, %v932
    %v934 = vsub.f32 1.0, %v933
    %v935 = vmul.f32 %v932, %v934
    %v936 = vadd.f32 %v932, %v935
    %vm937 = vweird.f32 %v912
    %vm938 = vweird.f32 %v932
    %vm939 = vmor %vm937, %vm938
    %v940 = vsel %vm939, %v932, %v936
    %v941 = vand.u32 2147483647, %v912
    %vm942 = vcmp.eq.f32.partialorder %v941, 8.507059e+37
    %v943 = vand.u32 %v912, 2147483648
    %v944 = vor.u32 1.1754944e-38, %v943
    %v945 = vsel %vm942, %v944, %v940
    %v946 = vmul.f32 1.0, %v945
    %v947 = vrcp.pop %v913
    %v948 = vmul.f32 %v913, %v947
    %v949 = vsub.f32 1.0, %v948
    %v950 = vmul.f32 %v947, %v949
    %v951 = vadd.f32 %v947, %v950
    %vm952 = vweird.f32 %v913
    %vm953 = vweird.f32 %v947
    %vm954 = vmor %vm952, %vm953
    %v955 = vsel %vm954, %v947, %v951
    %v956 = vand.u32 2147483647, %v913
    %vm957 = vcmp.eq.f32.partialorder %v956, 8.507059e+37
    %v958 = vand.u32 %v913, 2147483648
    %v959 = vor.u32 1.1754944e-38, %v958
    %v960 = vsel %vm957, %v959, %v955
    %v961 = vmul.f32 1.0, %v960
    %v962 = vrcp.pop %v914
    %v963 = vmul.f32 %v914, %v962
    %v964 = vsub.f32 1.0, %v963
    %v965 = vmul.f32 %v962, %v964
    %v966 = vadd.f32 %v962, %v965
    %vm967 = vweird.f32 %v914
    %vm968 = vweird.f32 %v962
    %vm969 = vmor %vm967, %vm968
    %v970 = vsel %vm969, %v962, %v966
    %v971 = vand.u32 2147483647, %v914
    %vm972 = vcmp.eq.f32.partialorder %v971, 8.507059e+37
    %v973 = vand.u32 %v914, 2147483648
    %v974 = vor.u32 1.1754944e-38, %v973
    %v975 = vsel %vm972, %v974, %v970
    %v976 = vmul.f32 1.0, %v975
    %v977 = vrcp.pop %v915
    %v978 = vmul.f32 %v915, %v977
    %v979 = vsub.f32 1.0, %v978
    %v980 = vmul.f32 %v977, %v979
    %v981 = vadd.f32 %v977, %v980
    %vm982 = vweird.f32 %v915
    %vm983 = vweird.f32 %v977
    %vm984 = vmor %vm982, %vm983
    %v985 = vsel %vm984, %v977, %v981
    %v986 = vand.u32 2147483647, %v915
    %vm987 = vcmp.eq.f32.partialorder %v986, 8.507059e+37
    %v988 = vand.u32 %v915, 2147483648
    %v989 = vor.u32 1.1754944e-38, %v988
    %v990 = vsel %vm987, %v989, %v985
    %v991 = vmul.f32 1.0, %v990
    %v992 = vrcp.pop %v916
    %v993 = vmul.f32 %v916, %v992
    %v994 = vsub.f32 1.0, %v993
    %v995 = vmul.f32 %v992, %v994
    %v996 = vadd.f32 %v992, %v995
    %vm997 = vweird.f32 %v916
    %vm998 = vweird.f32 %v992
    %vm999 = vmor %vm997, %vm998
    %v1000 = vsel %vm999, %v992, %v996
    %v1001 = vand.u32 2147483647, %v916
    %vm1002 = vcmp.eq.f32.partialorder %v1001, 8.507059e+37
    %v1003 = vand.u32 %v916, 2147483648
    %v1004 = vor.u32 1.1754944e-38, %v1003
    %v1005 = vsel %vm1002, %v1004, %v1000
    %v1006 = vmul.f32 1.0, %v1005
    %v1007 = vtanh.pop %v888
    %v1008 = vtanh.pop %v892
    %v1011 = vrot.slane %v776, 7
    %v1012 = vrot.slane %v777, 7
    %v1015 = vmul.f32 %v946, %v1011
    %v1016 = vmul.f32 %v991, %v1012
    %v1017 = vmul.f32 %v931, %v1007
    %v1018 = vmul.f32 %v976, %v1008
    %v1019 = vadd.f32 %v1015, %v1017
    %v1020 = vadd.f32 %v1016, %v1018
    %v1021 = vtanh.pop %v1019
    %v1022 = vtanh.pop %v1020
    %v1023 = vmul.f32 %v961, %v1021
    %v1024 = vmul.f32 %v1006, %v1022
    %v1026 = vperm.slane %v547, 0
    %v1027 = vperm.slane %v547, 1
    %v1028 = vperm.slane %v547, 2
    %v1029 = vperm.slane %v547, 3
    %1034 = vmatpush.msra.mxu0 0.0
    %1035 = vmatpush.msra.mxu0 0.0
    %1036 = vmatpush.msra.mxu0 0.0
    %1037 = vmatpush.msra.mxu0 0.0
    %1038 = vmatpush.msra.mxu0 0.0
    %1039 = vmatpush.msra.mxu0 0.0
    %1040 = vmatpush.msra.mxu0 0.0
    %1041 = vmatpush.msra.mxu0 %v507
    %1042 = vmatpush.msra.mxu0 %v503
    %1043 = vmatpush.msra.mxu0 %v499
    %1044 = vmatpush.msra.mxu0 %v495
    %1045 = vmatpush.msra.mxu0 %v491
    %1046 = vmatpush.msra.mxu0 %v487
    %1047 = vmatpush.msra.mxu0 %v483
    %1048 = vmatpush.msra.mxu0 %v479
    %1049 = vmatpush.msra.mxu0 %v475
    %1050 = vmatmul.f32.gmra.mxu0 %v787
    %v1051 = vpop.f32.mrf.mxu0
    %v1052 = vadd.f32 %v1026, %v1051
    %1053 = vdwg.mxu0
    %1054 = vmatpush.msra.mxu0 0.0
    %1055 = vmatpush.msra.mxu0 0.0
    %1056 = vmatpush.msra.mxu0 0.0
    %1057 = vmatpush.msra.mxu0 0.0
    %1058 = vmatpush.msra.mxu0 0.0
    %1059 = vmatpush.msra.mxu0 0.0
    %1060 = vmatpush.msra.mxu0 0.0
    %1061 = vmatpush.msra.mxu0 %v508
    %1062 = vmatpush.msra.mxu0 %v504
    %1063 = vmatpush.msra.mxu0 %v500
    %1064 = vmatpush.msra.mxu0 %v496
    %1065 = vmatpush.msra.mxu0 %v492
    %1066 = vmatpush.msra.mxu0 %v488
    %1067 = vmatpush.msra.mxu0 %v484
    %1068 = vmatpush.msra.mxu0 %v480
    %1069 = vmatpush.msra.mxu0 %v476
    %1070 = vmatmul.f32.gmra.mxu0 %v787
    %v1071 = vpop.f32.mrf.mxu0
    %v1072 = vadd.f32 %v1027, %v1071
    %1073 = vdwg.mxu0
    %1074 = vmatpush.msra.mxu0 0.0
    %1075 = vmatpush.msra.mxu0 0.0
    %1076 = vmatpush.msra.mxu0 0.0
    %1077 = vmatpush.msra.mxu0 0.0
    %1078 = vmatpush.msra.mxu0 0.0
    %1079 = vmatpush.msra.mxu0 0.0
    %1080 = vmatpush.msra.mxu0 0.0
    %1081 = vmatpush.msra.mxu0 %v509
    %1082 = vmatpush.msra.mxu0 %v505
    %1083 = vmatpush.msra.mxu0 %v501
    %1084 = vmatpush.msra.mxu0 %v497
    %1085 = vmatpush.msra.mxu0 %v493
    %1086 = vmatpush.msra.mxu0 %v489
    %1087 = vmatpush.msra.mxu0 %v485
    %1088 = vmatpush.msra.mxu0 %v481
    %1089 = vmatpush.msra.mxu0 %v477
    %1090 = vmatmul.f32.gmra.mxu0 %v787
    %v1091 = vpop.f32.mrf.mxu0
    %v1092 = vadd.f32 %v1028, %v1091
    %1093 = vdwg.mxu0
    %1094 = vmatpush.msra.mxu0 0.0
    %1095 = vmatpush.msra.mxu0 0.0
    %1096 = vmatpush.msra.mxu0 0.0
    %1097 = vmatpush.msra.mxu0 0.0
    %1098 = vmatpush.msra.mxu0 0.0
    %1099 = vmatpush.msra.mxu0 0.0
    %1100 = vmatpush.msra.mxu0 0.0
    %1101 = vmatpush.msra.mxu0 %v510
    %1102 = vmatpush.msra.mxu0 %v506
    %1103 = vmatpush.msra.mxu0 %v502
    %1104 = vmatpush.msra.mxu0 %v498
    %1105 = vmatpush.msra.mxu0 %v494
    %1106 = vmatpush.msra.mxu0 %v490
    %1107 = vmatpush.msra.mxu0 %v486
    %1108 = vmatpush.msra.mxu0 %v482
    %1109 = vmatpush.msra.mxu0 %v478
    %1110 = vmatmul.f32.gmra.mxu0 %v787
    %v1111 = vpop.f32.mrf.mxu0
    %v1112 = vadd.f32 %v1029, %v1111
    %1113 = vdwg.mxu0
    %1114 = vmatpush.msra.mxu0 0.0
    %1115 = vmatpush.msra.mxu0 0.0
    %1116 = vmatpush.msra.mxu0 0.0
    %1117 = vmatpush.msra.mxu0 0.0
    %1118 = vmatpush.msra.mxu0 0.0
    %1119 = vmatpush.msra.mxu0 0.0
    %1120 = vmatpush.msra.mxu0 0.0
    %1121 = vmatpush.msra.mxu0 %v543
    %1122 = vmatpush.msra.mxu0 %v539
    %1123 = vmatpush.msra.mxu0 %v535
    %1124 = vmatpush.msra.mxu0 %v531
    %1125 = vmatpush.msra.mxu0 %v527
    %1126 = vmatpush.msra.mxu0 %v523
    %1127 = vmatpush.msra.mxu0 %v519
    %1128 = vmatpush.msra.mxu0 %v515
    %1129 = vmatpush.msra.mxu0 %v511
    %1130 = vmatmul.f32.gmra.mxu0 %v550
    %v1131 = vpop.f32.mrf.mxu0
    %v1132 = vadd.f32 0.0, %v1131
    %1133 = vdwg.mxu0
    %1134 = vmatpush.msra.mxu0 0.0
    %1135 = vmatpush.msra.mxu0 0.0
    %1136 = vmatpush.msra.mxu0 0.0
    %1137 = vmatpush.msra.mxu0 0.0
    %1138 = vmatpush.msra.mxu0 0.0
    %1139 = vmatpush.msra.mxu0 0.0
    %1140 = vmatpush.msra.mxu0 0.0
    %1141 = vmatpush.msra.mxu0 %v544
    %1142 = vmatpush.msra.mxu0 %v540
    %1143 = vmatpush.msra.mxu0 %v536
    %1144 = vmatpush.msra.mxu0 %v532
    %1145 = vmatpush.msra.mxu0 %v528
    %1146 = vmatpush.msra.mxu0 %v524
    %1147 = vmatpush.msra.mxu0 %v520
    %1148 = vmatpush.msra.mxu0 %v516
    %1149 = vmatpush.msra.mxu0 %v512
    %1150 = vmatmul.f32.gmra.mxu0 %v550
    %v1151 = vpop.f32.mrf.mxu0
    %v1152 = vadd.f32 0.0, %v1151
    %1153 = vdwg.mxu0
    %1154 = vmatpush.msra.mxu0 0.0
    %1155 = vmatpush.msra.mxu0 0.0
    %1156 = vmatpush.msra.mxu0 0.0
    %1157 = vmatpush.msra.mxu0 0.0
    %1158 = vmatpush.msra.mxu0 0.0
    %1159 = vmatpush.msra.mxu0 0.0
    %1160 = vmatpush.msra.mxu0 0.0
    %1161 = vmatpush.msra.mxu0 %v545
    %1162 = vmatpush.msra.mxu0 %v541
    %1163 = vmatpush.msra.mxu0 %v537
    %1164 = vmatpush.msra.mxu0 %v533
    %1165 = vmatpush.msra.mxu0 %v529
    %1166 = vmatpush.msra.mxu0 %v525
    %1167 = vmatpush.msra.mxu0 %v521
    %1168 = vmatpush.msra.mxu0 %v517
    %1169 = vmatpush.msra.mxu0 %v513
    %1170 = vmatmul.f32.gmra.mxu0 %v550
    %v1171 = vpop.f32.mrf.mxu0
    %v1172 = vadd.f32 0.0, %v1171
    %1173 = vdwg.mxu0
    %1174 = vmatpush.msra.mxu0 0.0
    %1175 = vmatpush.msra.mxu0 0.0
    %1176 = vmatpush.msra.mxu0 0.0
    %1177 = vmatpush.msra.mxu0 0.0
    %1178 = vmatpush.msra.mxu0 0.0
    %1179 = vmatpush.msra.mxu0 0.0
    %1180 = vmatpush.msra.mxu0 0.0
    %1181 = vmatpush.msra.mxu0 %v546
    %1182 = vmatpush.msra.mxu0 %v542
    %1183 = vmatpush.msra.mxu0 %v538
    %1184 = vmatpush.msra.mxu0 %v534
    %1185 = vmatpush.msra.mxu0 %v530
    %1186 = vmatpush.msra.mxu0 %v526
    %1187 = vmatpush.msra.mxu0 %v522
    %1188 = vmatpush.msra.mxu0 %v518
    %1189 = vmatpush.msra.mxu0 %v514
    %1190 = vmatmul.f32.gmra.mxu0 %v550
    %v1191 = vpop.f32.mrf.mxu0
    %v1192 = vadd.f32 0.0, %v1191
    %1193 = vdwg.mxu0
    %v1194 = vadd.f32 %v1052, %v1132
    %v1195 = vadd.f32 %v1072, %v1152
    %v1196 = vadd.f32 %v1092, %v1172
    %v1197 = vadd.f32 %v1112, %v1192
    %v1198 = vxor.u32 %v1194, 2147483648
    %v1199 = vxor.u32 %v1195, 2147483648
    %v1200 = vxor.u32 %v1196, 2147483648
    %v1201 = vmul.f32 %v1198, 1.442695
    %v1202 = vpow.pop %v1201
    %v1203 = vmul.f32 %v1199, 1.442695
    %v1204 = vpow.pop %v1203
    %v1205 = vmul.f32 %v1200, 1.442695
    %v1206 = vpow.pop %v1205
    %v1207 = vadd.f32 %v1202, 1.0
    %v1208 = vadd.f32 %v1204, 1.0
    %v1209 = vadd.f32 %v1206, 1.0
    %v1210 = vrcp.pop %v1207
    %v1211 = vmul.f32 %v1207, %v1210
    %v1212 = vsub.f32 1.0, %v1211
    %v1213 = vmul.f32 %v1210, %v1212
    %v1214 = vadd.f32 %v1210, %v1213
    %vm1215 = vweird.f32 %v1207
    %vm1216 = vweird.f32 %v1210
    %vm1217 = vmor %vm1215, %vm1216
    %v1218 = vsel %vm1217, %v1210, %v1214
    %v1219 = vand.u32 2147483647, %v1207
    %vm1220 = vcmp.eq.f32.partialorder %v1219, 8.507059e+37
    %v1221 = vand.u32 %v1207, 2147483648
    %v1222 = vor.u32 1.1754944e-38, %v1221
    %v1223 = vsel %vm1220, %v1222, %v1218
    %v1224 = vmul.f32 1.0, %v1223
    %v1225 = vrcp.pop %v1208
    %v1226 = vmul.f32 %v1208, %v1225
    %v1227 = vsub.f32 1.0, %v1226
    %v1228 = vmul.f32 %v1225, %v1227
    %v1229 = vadd.f32 %v1225, %v1228
    %vm1230 = vweird.f32 %v1208
    %vm1231 = vweird.f32 %v1225
    %vm1232 = vmor %vm1230, %vm1231
    %v1233 = vsel %vm1232, %v1225, %v1229
    %v1234 = vand.u32 2147483647, %v1208
    %vm1235 = vcmp.eq.f32.partialorder %v1234, 8.507059e+37
    %v1236 = vand.u32 %v1208, 2147483648
    %v1237 = vor.u32 1.1754944e-38, %v1236
    %v1238 = vsel %vm1235, %v1237, %v1233
    %v1239 = vmul.f32 1.0, %v1238
    %v1240 = vrcp.pop %v1209
    %v1241 = vmul.f32 %v1209, %v1240
    %v1242 = vsub.f32 1.0, %v1241
    %v1243 = vmul.f32 %v1240, %v1242
    %v1244 = vadd.f32 %v1240, %v1243
    %vm1245 = vweird.f32 %v1209
    %vm1246 = vweird.f32 %v1240
    %vm1247 = vmor %vm1245, %vm1246
    %v1248 = vsel %vm1247, %v1240, %v1244
    %v1249 = vand.u32 2147483647, %v1209
    %vm1250 = vcmp.eq.f32.partialorder %v1249, 8.507059e+37
    %v1251 = vand.u32 %v1209, 2147483648
    %v1252 = vor.u32 1.1754944e-38, %v1251
    %v1253 = vsel %vm1250, %v1252, %v1248
    %v1254 = vmul.f32 1.0, %v1253
    %v1255 = vtanh.pop %v1197
    %v1256 = vmul.f32 %v1239, 0.0
    %v1257 = vmul.f32 %v1224, %v1255
    %v1258 = vadd.f32 %v1256, %v1257
    %v1259 = vtanh.pop %v1258
    %v1260 = vmul.f32 %v1254, %v1259
    %v1263 = vrot.slane %v1023, 1
    %v1264 = vsel %vm785, %v1024, %v1263
    %v1265 = vsel %vm548, %v1264, 0
    %1267 = vmatpush.msra.mxu0 0.0
    %1268 = vmatpush.msra.mxu0 0.0
    %1269 = vmatpush.msra.mxu0 0.0
    %1270 = vmatpush.msra.mxu0 0.0
    %1271 = vmatpush.msra.mxu0 0.0
    %1272 = vmatpush.msra.mxu0 0.0
    %1273 = vmatpush.msra.mxu0 0.0
    %1274 = vmatpush.msra.mxu0 %v471
    %1275 = vmatpush.msra.mxu0 %v467
    %1276 = vmatpush.msra.mxu0 %v463
    %1277 = vmatpush.msra.mxu0 %v459
    %1278 = vmatpush.msra.mxu0 %v455
    %1279 = vmatpush.msra.mxu0 %v451
    %1280 = vmatpush.msra.mxu0 %v447
    %1281 = vmatpush.msra.mxu0 %v443
    %1282 = vmatpush.msra.mxu0 %v439
    %1283 = vmatmul.f32.gmra.mxu0 %v1265
    %v1284 = vpop.f32.mrf.mxu0
    %v1285 = vadd.f32 0.0, %v1284
    %1286 = vdwg.mxu0
    %1287 = vmatpush.msra.mxu0 0.0
    %1288 = vmatpush.msra.mxu0 0.0
    %1289 = vmatpush.msra.mxu0 0.0
    %1290 = vmatpush.msra.mxu0 0.0
    %1291 = vmatpush.msra.mxu0 0.0
    %1292 = vmatpush.msra.mxu0 0.0
    %1293 = vmatpush.msra.mxu0 0.0
    %1294 = vmatpush.msra.mxu0 %v472
    %1295 = vmatpush.msra.mxu0 %v468
    %1296 = vmatpush.msra.mxu0 %v464
    %1297 = vmatpush.msra.mxu0 %v460
    %1298 = vmatpush.msra.mxu0 %v456
    %1299 = vmatpush.msra.mxu0 %v452
    %1300 = vmatpush.msra.mxu0 %v448
    %1301 = vmatpush.msra.mxu0 %v444
    %1302 = vmatpush.msra.mxu0 %v440
    %1303 = vmatmul.f32.gmra.mxu0 %v1265
    %v1304 = vpop.f32.mrf.mxu0
    %v1305 = vadd.f32 0.0, %v1304
    %1306 = vdwg.mxu0
    %1307 = vmatpush.msra.mxu0 0.0
    %1308 = vmatpush.msra.mxu0 0.0
    %1309 = vmatpush.msra.mxu0 0.0
    %1310 = vmatpush.msra.mxu0 0.0
    %1311 = vmatpush.msra.mxu0 0.0
    %1312 = vmatpush.msra.mxu0 0.0
    %1313 = vmatpush.msra.mxu0 0.0
    %1314 = vmatpush.msra.mxu0 %v473
    %1315 = vmatpush.msra.mxu0 %v469
    %1316 = vmatpush.msra.mxu0 %v465
    %1317 = vmatpush.msra.mxu0 %v461
    %1318 = vmatpush.msra.mxu0 %v457
    %1319 = vmatpush.msra.mxu0 %v453
    %1320 = vmatpush.msra.mxu0 %v449
    %1321 = vmatpush.msra.mxu0 %v445
    %1322 = vmatpush.msra.mxu0 %v441
    %1323 = vmatmul.f32.gmra.mxu0 %v1265
    %v1324 = vpop.f32.mrf.mxu0
    %v1325 = vadd.f32 0.0, %v1324
    %1326 = vdwg.mxu0
    %1327 = vmatpush.msra.mxu0 0.0
    %1328 = vmatpush.msra.mxu0 0.0
    %1329 = vmatpush.msra.mxu0 0.0
    %1330 = vmatpush.msra.mxu0 0.0
    %1331 = vmatpush.msra.mxu0 0.0
    %1332 = vmatpush.msra.mxu0 0.0
    %1333 = vmatpush.msra.mxu0 0.0
    %1334 = vmatpush.msra.mxu0 %v474
    %1335 = vmatpush.msra.mxu0 %v470
    %1336 = vmatpush.msra.mxu0 %v466
    %1337 = vmatpush.msra.mxu0 %v462
    %1338 = vmatpush.msra.mxu0 %v458
    %1339 = vmatpush.msra.mxu0 %v454
    %1340 = vmatpush.msra.mxu0 %v450
    %1341 = vmatpush.msra.mxu0 %v446
    %1342 = vmatpush.msra.mxu0 %v442
    %1343 = vmatmul.f32.gmra.mxu0 %v1265
    %v1344 = vpop.f32.mrf.mxu0
    %v1345 = vadd.f32 0.0, %v1344
    %1346 = vdwg.mxu0
    %v1351 = vrot.slane %v1285, 6
    %v1352 = vrot.slane %v1305, 6
    %v1353 = vrot.slane %v1325, 6
    %v1354 = vrot.slane %v1345, 6
    %v1355 = vrot.slane %v1285, 7
    %v1356 = vrot.slane %v1305, 7
    %v1357 = vrot.slane %v1325, 7
    %v1358 = vrot.slane %v1345, 7
    %v1367 = vadd.f32 %v365, %v1351
    %v1368 = vadd.f32 %v388, %v1352
    %v1369 = vadd.f32 %v411, %v1353
    %v1370 = vadd.f32 %v434, %v1354
    %v1371 = vadd.f32 %v368, %v1355
    %v1372 = vadd.f32 %v391, %v1356
    %v1373 = vadd.f32 %v414, %v1357
    %v1374 = vadd.f32 %v437, %v1358
    %v1375 = vxor.u32 %v1367, 2147483648
    %v1376 = vxor.u32 %v1368, 2147483648
    %v1377 = vxor.u32 %v1369, 2147483648
    %v1378 = vxor.u32 %v1371, 2147483648
    %v1379 = vxor.u32 %v1372, 2147483648
    %v1380 = vxor.u32 %v1373, 2147483648
    %v1381 = vmul.f32 %v1375, 1.442695
    %v1382 = vpow.pop %v1381
    %v1383 = vmul.f32 %v1376, 1.442695
    %v1384 = vpow.pop %v1383
    %v1385 = vmul.f32 %v1377, 1.442695
    %v1386 = vpow.pop %v1385
    %v1387 = vmul.f32 %v1378, 1.442695
    %v1388 = vpow.pop %v1387
    %v1389 = vmul.f32 %v1379, 1.442695
    %v1390 = vpow.pop %v1389
    %v1391 = vmul.f32 %v1380, 1.442695
    %v1392 = vpow.pop %v1391
    %v1393 = vadd.f32 %v1382, 1.0
    %v1394 = vadd.f32 %v1384, 1.0
    %v1395 = vadd.f32 %v1386, 1.0
    %v1396 = vadd.f32 %v1388, 1.0
    %v1397 = vadd.f32 %v1390, 1.0
    %v1398 = vadd.f32 %v1392, 1.0
    %v1399 = vrcp.pop %v1393
    %v1400 = vmul.f32 %v1393, %v1399
    %v1401 = vsub.f32 1.0, %v1400
    %v1402 = vmul.f32 %v1399, %v1401
    %v1403 = vadd.f32 %v1399, %v1402
    %vm1404 = vweird.f32 %v1393
    %vm1405 = vweird.f32 %v1399
    %vm1406 = vmor %vm1404, %vm1405
    %v1407 = vsel %vm1406, %v1399, %v1403
    %v1408 = vand.u32 2147483647, %v1393
    %vm1409 = vcmp.eq.f32.partialorder %v1408, 8.507059e+37
    %v1410 = vand.u32 %v1393, 2147483648
    %v1411 = vor.u32 1.1754944e-38, %v1410
    %v1412 = vsel %vm1409, %v1411, %v1407
    %v1413 = vmul.f32 1.0, %v1412
    %v1414 = vrcp.pop %v1394
    %v1415 = vmul.f32 %v1394, %v1414
    %v1416 = vsub.f32 1.0, %v1415
    %v1417 = vmul.f32 %v1414, %v1416
    %v1418 = vadd.f32 %v1414, %v1417
    %vm1419 = vweird.f32 %v1394
    %vm1420 = vweird.f32 %v1414
    %vm1421 = vmor %vm1419, %vm1420
    %v1422 = vsel %vm1421, %v1414, %v1418
    %v1423 = vand.u32 2147483647, %v1394
    %vm1424 = vcmp.eq.f32.partialorder %v1423, 8.507059e+37
    %v1425 = vand.u32 %v1394, 2147483648
    %v1426 = vor.u32 1.1754944e-38, %v1425
    %v1427 = vsel %vm1424, %v1426, %v1422
    %v1428 = vmul.f32 1.0, %v1427
    %v1429 = vrcp.pop %v1395
    %v1430 = vmul.f32 %v1395, %v1429
    %v1431 = vsub.f32 1.0, %v1430
    %v1432 = vmul.f32 %v1429, %v1431
    %v1433 = vadd.f32 %v1429, %v1432
    %vm1434 = vweird.f32 %v1395
    %vm1435 = vweird.f32 %v1429
    %vm1436 = vmor %vm1434, %vm1435
    %v1437 = vsel %vm1436, %v1429, %v1433
    %v1438 = vand.u32 2147483647, %v1395
    %vm1439 = vcmp.eq.f32.partialorder %v1438, 8.507059e+37
    %v1440 = vand.u32 %v1395, 2147483648
    %v1441 = vor.u32 1.1754944e-38, %v1440
    %v1442 = vsel %vm1439, %v1441, %v1437
    %v1443 = vmul.f32 1.0, %v1442
    %v1444 = vrcp.pop %v1396
    %v1445 = vmul.f32 %v1396, %v1444
    %v1446 = vsub.f32 1.0, %v1445
    %v1447 = vmul.f32 %v1444, %v1446
    %v1448 = vadd.f32 %v1444, %v1447
    %vm1449 = vweird.f32 %v1396
    %vm1450 = vweird.f32 %v1444
    %vm1451 = vmor %vm1449, %vm1450
    %v1452 = vsel %vm1451, %v1444, %v1448
    %v1453 = vand.u32 2147483647, %v1396
    %vm1454 = vcmp.eq.f32.partialorder %v1453, 8.507059e+37
    %v1455 = vand.u32 %v1396, 2147483648
    %v1456 = vor.u32 1.1754944e-38, %v1455
    %v1457 = vsel %vm1454, %v1456, %v1452
    %v1458 = vmul.f32 1.0, %v1457
    %v1459 = vrcp.pop %v1397
    %v1460 = vmul.f32 %v1397, %v1459
    %v1461 = vsub.f32 1.0, %v1460
    %v1462 = vmul.f32 %v1459, %v1461
    %v1463 = vadd.f32 %v1459, %v1462
    %vm1464 = vweird.f32 %v1397
    %vm1465 = vweird.f32 %v1459
    %vm1466 = vmor %vm1464, %vm1465
    %v1467 = vsel %vm1466, %v1459, %v1463
    %v1468 = vand.u32 2147483647, %v1397
    %vm1469 = vcmp.eq.f32.partialorder %v1468, 8.507059e+37
    %v1470 = vand.u32 %v1397, 2147483648
    %v1471 = vor.u32 1.1754944e-38, %v1470
    %v1472 = vsel %vm1469, %v1471, %v1467
    %v1473 = vmul.f32 1.0, %v1472
    %v1474 = vrcp.pop %v1398
    %v1475 = vmul.f32 %v1398, %v1474
    %v1476 = vsub.f32 1.0, %v1475
    %v1477 = vmul.f32 %v1474, %v1476
    %v1478 = vadd.f32 %v1474, %v1477
    %vm1479 = vweird.f32 %v1398
    %vm1480 = vweird.f32 %v1474
    %vm1481 = vmor %vm1479, %vm1480
    %v1482 = vsel %vm1481, %v1474, %v1478
    %v1483 = vand.u32 2147483647, %v1398
    %vm1484 = vcmp.eq.f32.partialorder %v1483, 8.507059e+37
    %v1485 = vand.u32 %v1398, 2147483648
    %v1486 = vor.u32 1.1754944e-38, %v1485
    %v1487 = vsel %vm1484, %v1486, %v1482
    %v1488 = vmul.f32 1.0, %v1487
    %v1489 = vtanh.pop %v1370
    %v1490 = vtanh.pop %v1374
    %v1493 = vrot.slane %v1019, 7
    %v1494 = vrot.slane %v1020, 7
    %v1497 = vmul.f32 %v1428, %v1493
    %v1498 = vmul.f32 %v1473, %v1494
    %v1499 = vmul.f32 %v1413, %v1489
    %v1500 = vmul.f32 %v1458, %v1490
    %v1501 = vadd.f32 %v1497, %v1499
    %v1502 = vadd.f32 %v1498, %v1500
    %v1503 = vtanh.pop %v1501
    %v1504 = vtanh.pop %v1502
    %v1505 = vmul.f32 %v1443, %v1503
    %v1506 = vmul.f32 %v1488, %v1504
    %1507 = vmatpush.msra.mxu0 0.0
    %1508 = vmatpush.msra.mxu0 0.0
    %1509 = vmatpush.msra.mxu0 0.0
    %1510 = vmatpush.msra.mxu0 0.0
    %1511 = vmatpush.msra.mxu0 0.0
    %1512 = vmatpush.msra.mxu0 0.0
    %1513 = vmatpush.msra.mxu0 0.0
    %1514 = vmatpush.msra.mxu0 %v507
    %1515 = vmatpush.msra.mxu0 %v503
    %1516 = vmatpush.msra.mxu0 %v499
    %1517 = vmatpush.msra.mxu0 %v495
    %1518 = vmatpush.msra.mxu0 %v491
    %1519 = vmatpush.msra.mxu0 %v487
    %1520 = vmatpush.msra.mxu0 %v483
    %1521 = vmatpush.msra.mxu0 %v479
    %1522 = vmatpush.msra.mxu0 %v475
    %1523 = vmatmul.f32.gmra.mxu0 %v1265
    %v1524 = vpop.f32.mrf.mxu0
    %v1525 = vadd.f32 %v1026, %v1524
    %1526 = vdwg.mxu0
    %1527 = vmatpush.msra.mxu0 0.0
    %1528 = vmatpush.msra.mxu0 0.0
    %1529 = vmatpush.msra.mxu0 0.0
    %1530 = vmatpush.msra.mxu0 0.0
    %1531 = vmatpush.msra.mxu0 0.0
    %1532 = vmatpush.msra.mxu0 0.0
    %1533 = vmatpush.msra.mxu0 0.0
    %1534 = vmatpush.msra.mxu0 %v508
    %1535 = vmatpush.msra.mxu0 %v504
    %1536 = vmatpush.msra.mxu0 %v500
    %1537 = vmatpush.msra.mxu0 %v496
    %1538 = vmatpush.msra.mxu0 %v492
    %1539 = vmatpush.msra.mxu0 %v488
    %1540 = vmatpush.msra.mxu0 %v484
    %1541 = vmatpush.msra.mxu0 %v480
    %1542 = vmatpush.msra.mxu0 %v476
    %1543 = vmatmul.f32.gmra.mxu0 %v1265
    %v1544 = vpop.f32.mrf.mxu0
    %v1545 = vadd.f32 %v1027, %v1544
    %1546 = vdwg.mxu0
    %1547 = vmatpush.msra.mxu0 0.0
    %1548 = vmatpush.msra.mxu0 0.0
    %1549 = vmatpush.msra.mxu0 0.0
    %1550 = vmatpush.msra.mxu0 0.0
    %1551 = vmatpush.msra.mxu0 0.0
    %1552 = vmatpush.msra.mxu0 0.0
    %1553 = vmatpush.msra.mxu0 0.0
    %1554 = vmatpush.msra.mxu0 %v509
    %1555 = vmatpush.msra.mxu0 %v505
    %1556 = vmatpush.msra.mxu0 %v501
    %1557 = vmatpush.msra.mxu0 %v497
    %1558 = vmatpush.msra.mxu0 %v493
    %1559 = vmatpush.msra.mxu0 %v489
    %1560 = vmatpush.msra.mxu0 %v485
    %1561 = vmatpush.msra.mxu0 %v481
    %1562 = vmatpush.msra.mxu0 %v477
    %1563 = vmatmul.f32.gmra.mxu0 %v1265
    %v1564 = vpop.f32.mrf.mxu0
    %v1565 = vadd.f32 %v1028, %v1564
    %1566 = vdwg.mxu0
    %1567 = vmatpush.msra.mxu0 0.0
    %1568 = vmatpush.msra.mxu0 0.0
    %1569 = vmatpush.msra.mxu0 0.0
    %1570 = vmatpush.msra.mxu0 0.0
    %1571 = vmatpush.msra.mxu0 0.0
    %1572 = vmatpush.msra.mxu0 0.0
    %1573 = vmatpush.msra.mxu0 0.0
    %1574 = vmatpush.msra.mxu0 %v510
    %1575 = vmatpush.msra.mxu0 %v506
    %1576 = vmatpush.msra.mxu0 %v502
    %1577 = vmatpush.msra.mxu0 %v498
    %1578 = vmatpush.msra.mxu0 %v494
    %1579 = vmatpush.msra.mxu0 %v490
    %1580 = vmatpush.msra.mxu0 %v486
    %1581 = vmatpush.msra.mxu0 %v482
    %1582 = vmatpush.msra.mxu0 %v478
    %1583 = vmatmul.f32.gmra.mxu0 %v1265
    %v1584 = vpop.f32.mrf.mxu0
    %v1585 = vadd.f32 %v1029, %v1584
    %1586 = vdwg.mxu0
    %v1588 = vsel %vm548, %v1260, 0
    %1590 = vmatpush.msra.mxu0 0.0
    %1591 = vmatpush.msra.mxu0 0.0
    %1592 = vmatpush.msra.mxu0 0.0
    %1593 = vmatpush.msra.mxu0 0.0
    %1594 = vmatpush.msra.mxu0 0.0
    %1595 = vmatpush.msra.mxu0 0.0
    %1596 = vmatpush.msra.mxu0 0.0
    %1597 = vmatpush.msra.mxu0 %v543
    %1598 = vmatpush.msra.mxu0 %v539
    %1599 = vmatpush.msra.mxu0 %v535
    %1600 = vmatpush.msra.mxu0 %v531
    %1601 = vmatpush.msra.mxu0 %v527
    %1602 = vmatpush.msra.mxu0 %v523
    %1603 = vmatpush.msra.mxu0 %v519
    %1604 = vmatpush.msra.mxu0 %v515
    %1605 = vmatpush.msra.mxu0 %v511
    %1606 = vmatmul.f32.gmra.mxu0 %v1588
    %v1607 = vpop.f32.mrf.mxu0
    %v1608 = vadd.f32 0.0, %v1607
    %1609 = vdwg.mxu0
    %1610 = vmatpush.msra.mxu0 0.0
    %1611 = vmatpush.msra.mxu0 0.0
    %1612 = vmatpush.msra.mxu0 0.0
    %1613 = vmatpush.msra.mxu0 0.0
    %1614 = vmatpush.msra.mxu0 0.0
    %1615 = vmatpush.msra.mxu0 0.0
    %1616 = vmatpush.msra.mxu0 0.0
    %1617 = vmatpush.msra.mxu0 %v544
    %1618 = vmatpush.msra.mxu0 %v540
    %1619 = vmatpush.msra.mxu0 %v536
    %1620 = vmatpush.msra.mxu0 %v532
    %1621 = vmatpush.msra.mxu0 %v528
    %1622 = vmatpush.msra.mxu0 %v524
    %1623 = vmatpush.msra.mxu0 %v520
    %1624 = vmatpush.msra.mxu0 %v516
    %1625 = vmatpush.msra.mxu0 %v512
    %1626 = vmatmul.f32.gmra.mxu0 %v1588
    %v1627 = vpop.f32.mrf.mxu0
    %v1628 = vadd.f32 0.0, %v1627
    %1629 = vdwg.mxu0
    %1630 = vmatpush.msra.mxu0 0.0
    %1631 = vmatpush.msra.mxu0 0.0
    %1632 = vmatpush.msra.mxu0 0.0
    %1633 = vmatpush.msra.mxu0 0.0
    %1634 = vmatpush.msra.mxu0 0.0
    %1635 = vmatpush.msra.mxu0 0.0
    %1636 = vmatpush.msra.mxu0 0.0
    %1637 = vmatpush.msra.mxu0 %v545
    %1638 = vmatpush.msra.mxu0 %v541
    %1639 = vmatpush.msra.mxu0 %v537
    %1640 = vmatpush.msra.mxu0 %v533
    %1641 = vmatpush.msra.mxu0 %v529
    %1642 = vmatpush.msra.mxu0 %v525
    %1643 = vmatpush.msra.mxu0 %v521
    %1644 = vmatpush.msra.mxu0 %v517
    %1645 = vmatpush.msra.mxu0 %v513
    %1646 = vmatmul.f32.gmra.mxu0 %v1588
    %v1647 = vpop.f32.mrf.mxu0
    %v1648 = vadd.f32 0.0, %v1647
    %1649 = vdwg.mxu0
    %1650 = vmatpush.msra.mxu0 0.0
    %1651 = vmatpush.msra.mxu0 0.0
    %1652 = vmatpush.msra.mxu0 0.0
    %1653 = vmatpush.msra.mxu0 0.0
    %1654 = vmatpush.msra.mxu0 0.0
    %1655 = vmatpush.msra.mxu0 0.0
    %1656 = vmatpush.msra.mxu0 0.0
    %1657 = vmatpush.msra.mxu0 %v546
    %1658 = vmatpush.msra.mxu0 %v542
    %1659 = vmatpush.msra.mxu0 %v538
    %1660 = vmatpush.msra.mxu0 %v534
    %1661 = vmatpush.msra.mxu0 %v530
    %1662 = vmatpush.msra.mxu0 %v526
    %1663 = vmatpush.msra.mxu0 %v522
    %1664 = vmatpush.msra.mxu0 %v518
    %1665 = vmatpush.msra.mxu0 %v514
    %1666 = vmatmul.f32.gmra.mxu0 %v1588
    %v1667 = vpop.f32.mrf.mxu0
    %v1668 = vadd.f32 0.0, %v1667
    %1669 = vdwg.mxu0
    %v1670 = vadd.f32 %v1525, %v1608
    %v1671 = vadd.f32 %v1545, %v1628
    %v1672 = vadd.f32 %v1565, %v1648
    %v1673 = vadd.f32 %v1585, %v1668
    %v1674 = vxor.u32 %v1670, 2147483648
    %v1675 = vxor.u32 %v1671, 2147483648
    %v1676 = vxor.u32 %v1672, 2147483648
    %v1677 = vmul.f32 %v1674, 1.442695
    %v1678 = vpow.pop %v1677
    %v1679 = vmul.f32 %v1675, 1.442695
    %v1680 = vpow.pop %v1679
    %v1681 = vmul.f32 %v1676, 1.442695
    %v1682 = vpow.pop %v1681
    %v1683 = vadd.f32 %v1678, 1.0
    %v1684 = vadd.f32 %v1680, 1.0
    %v1685 = vadd.f32 %v1682, 1.0
    %v1686 = vrcp.pop %v1683
    %v1687 = vmul.f32 %v1683, %v1686
    %v1688 = vsub.f32 1.0, %v1687
    %v1689 = vmul.f32 %v1686, %v1688
    %v1690 = vadd.f32 %v1686, %v1689
    %vm1691 = vweird.f32 %v1683
    %vm1692 = vweird.f32 %v1686
    %vm1693 = vmor %vm1691, %vm1692
    %v1694 = vsel %vm1693, %v1686, %v1690
    %v1695 = vand.u32 2147483647, %v1683
    %vm1696 = vcmp.eq.f32.partialorder %v1695, 8.507059e+37
    %v1697 = vand.u32 %v1683, 2147483648
    %v1698 = vor.u32 1.1754944e-38, %v1697
    %v1699 = vsel %vm1696, %v1698, %v1694
    %v1700 = vmul.f32 1.0, %v1699
    %v1701 = vrcp.pop %v1684
    %v1702 = vmul.f32 %v1684, %v1701
    %v1703 = vsub.f32 1.0, %v1702
    %v1704 = vmul.f32 %v1701, %v1703
    %v1705 = vadd.f32 %v1701, %v1704
    %vm1706 = vweird.f32 %v1684
    %vm1707 = vweird.f32 %v1701
    %vm1708 = vmor %vm1706, %vm1707
    %v1709 = vsel %vm1708, %v1701, %v1705
    %v1710 = vand.u32 2147483647, %v1684
    %vm1711 = vcmp.eq.f32.partialorder %v1710, 8.507059e+37
    %v1712 = vand.u32 %v1684, 2147483648
    %v1713 = vor.u32 1.1754944e-38, %v1712
    %v1714 = vsel %vm1711, %v1713, %v1709
    %v1715 = vmul.f32 1.0, %v1714
    %v1716 = vrcp.pop %v1685
    %v1717 = vmul.f32 %v1685, %v1716
    %v1718 = vsub.f32 1.0, %v1717
    %v1719 = vmul.f32 %v1716, %v1718
    %v1720 = vadd.f32 %v1716, %v1719
    %vm1721 = vweird.f32 %v1685
    %vm1722 = vweird.f32 %v1716
    %vm1723 = vmor %vm1721, %vm1722
    %v1724 = vsel %vm1723, %v1716, %v1720
    %v1725 = vand.u32 2147483647, %v1685
    %vm1726 = vcmp.eq.f32.partialorder %v1725, 8.507059e+37
    %v1727 = vand.u32 %v1685, 2147483648
    %v1728 = vor.u32 1.1754944e-38, %v1727
    %v1729 = vsel %vm1726, %v1728, %v1724
    %v1730 = vmul.f32 1.0, %v1729
    %v1731 = vtanh.pop %v1673
    %v1732 = vmul.f32 %v1715, %v1258
    %v1733 = vmul.f32 %v1700, %v1731
    %v1734 = vadd.f32 %v1732, %v1733
    %v1735 = vtanh.pop %v1734
    %v1736 = vmul.f32 %v1730, %v1735
    %v1739 = vrot.slane %v1505, 2
    %v1740 = vrot.slane %v1506, 1
    %v1741 = vsel %vm785, %v1740, %v1739
    %v1742 = vsel %vm548, %v1741, 0
    %1744 = vmatpush.msra.mxu0 0.0
    %1745 = vmatpush.msra.mxu0 0.0
    %1746 = vmatpush.msra.mxu0 0.0
    %1747 = vmatpush.msra.mxu0 0.0
    %1748 = vmatpush.msra.mxu0 0.0
    %1749 = vmatpush.msra.mxu0 0.0
    %1750 = vmatpush.msra.mxu0 0.0
    %1751 = vmatpush.msra.mxu0 %v471
    %1752 = vmatpush.msra.mxu0 %v467
    %1753 = vmatpush.msra.mxu0 %v463
    %1754 = vmatpush.msra.mxu0 %v459
    %1755 = vmatpush.msra.mxu0 %v455
    %1756 = vmatpush.msra.mxu0 %v451
    %1757 = vmatpush.msra.mxu0 %v447
    %1758 = vmatpush.msra.mxu0 %v443
    %1759 = vmatpush.msra.mxu0 %v439
    %1760 = vmatmul.f32.gmra.mxu0 %v1742
    %v1761 = vpop.f32.mrf.mxu0
    %v1762 = vadd.f32 0.0, %v1761
    %1763 = vdwg.mxu0
    %1764 = vmatpush.msra.mxu0 0.0
    %1765 = vmatpush.msra.mxu0 0.0
    %1766 = vmatpush.msra.mxu0 0.0
    %1767 = vmatpush.msra.mxu0 0.0
    %1768 = vmatpush.msra.mxu0 0.0
    %1769 = vmatpush.msra.mxu0 0.0
    %1770 = vmatpush.msra.mxu0 0.0
    %1771 = vmatpush.msra.mxu0 %v472
    %1772 = vmatpush.msra.mxu0 %v468
    %1773 = vmatpush.msra.mxu0 %v464
    %1774 = vmatpush.msra.mxu0 %v460
    %1775 = vmatpush.msra.mxu0 %v456
    %1776 = vmatpush.msra.mxu0 %v452
    %1777 = vmatpush.msra.mxu0 %v448
    %1778 = vmatpush.msra.mxu0 %v444
    %1779 = vmatpush.msra.mxu0 %v440
    %1780 = vmatmul.f32.gmra.mxu0 %v1742
    %v1781 = vpop.f32.mrf.mxu0
    %v1782 = vadd.f32 0.0, %v1781
    %1783 = vdwg.mxu0
    %1784 = vmatpush.msra.mxu0 0.0
    %1785 = vmatpush.msra.mxu0 0.0
    %1786 = vmatpush.msra.mxu0 0.0
    %1787 = vmatpush.msra.mxu0 0.0
    %1788 = vmatpush.msra.mxu0 0.0
    %1789 = vmatpush.msra.mxu0 0.0
    %1790 = vmatpush.msra.mxu0 0.0
    %1791 = vmatpush.msra.mxu0 %v473
    %1792 = vmatpush.msra.mxu0 %v469
    %1793 = vmatpush.msra.mxu0 %v465
    %1794 = vmatpush.msra.mxu0 %v461
    %1795 = vmatpush.msra.mxu0 %v457
    %1796 = vmatpush.msra.mxu0 %v453
    %1797 = vmatpush.msra.mxu0 %v449
    %1798 = vmatpush.msra.mxu0 %v445
    %1799 = vmatpush.msra.mxu0 %v441
    %1800 = vmatmul.f32.gmra.mxu0 %v1742
    %v1801 = vpop.f32.mrf.mxu0
    %v1802 = vadd.f32 0.0, %v1801
    %1803 = vdwg.mxu0
    %1804 = vmatpush.msra.mxu0 0.0
    %1805 = vmatpush.msra.mxu0 0.0
    %1806 = vmatpush.msra.mxu0 0.0
    %1807 = vmatpush.msra.mxu0 0.0
    %1808 = vmatpush.msra.mxu0 0.0
    %1809 = vmatpush.msra.mxu0 0.0
    %1810 = vmatpush.msra.mxu0 0.0
    %1811 = vmatpush.msra.mxu0 %v474
    %1812 = vmatpush.msra.mxu0 %v470
    %1813 = vmatpush.msra.mxu0 %v466
    %1814 = vmatpush.msra.mxu0 %v462
    %1815 = vmatpush.msra.mxu0 %v458
    %1816 = vmatpush.msra.mxu0 %v454
    %1817 = vmatpush.msra.mxu0 %v450
    %1818 = vmatpush.msra.mxu0 %v446
    %1819 = vmatpush.msra.mxu0 %v442
    %1820 = vmatmul.f32.gmra.mxu0 %v1742
    %v1821 = vpop.f32.mrf.mxu0
    %v1822 = vadd.f32 0.0, %v1821
    %1823 = vdwg.mxu0
    %v1828 = vrot.slane %v1762, 5
    %v1829 = vrot.slane %v1782, 5
    %v1830 = vrot.slane %v1802, 5
    %v1831 = vrot.slane %v1822, 5
    %v1832 = vrot.slane %v1762, 6
    %v1833 = vrot.slane %v1782, 6
    %v1834 = vrot.slane %v1802, 6
    %v1835 = vrot.slane %v1822, 6
    %v1844 = vadd.f32 %v365, %v1828
    %v1845 = vadd.f32 %v388, %v1829
    %v1846 = vadd.f32 %v411, %v1830
    %v1847 = vadd.f32 %v434, %v1831
    %v1848 = vadd.f32 %v368, %v1832
    %v1849 = vadd.f32 %v391, %v1833
    %v1850 = vadd.f32 %v414, %v1834
    %v1851 = vadd.f32 %v437, %v1835
    %v1852 = vxor.u32 %v1844, 2147483648
    %v1853 = vxor.u32 %v1845, 2147483648
    %v1854 = vxor.u32 %v1846, 2147483648
    %v1855 = vxor.u32 %v1848, 2147483648
    %v1856 = vxor.u32 %v1849, 2147483648
    %v1857 = vxor.u32 %v1850, 2147483648
    %v1858 = vmul.f32 %v1852, 1.442695
    %v1859 = vpow.pop %v1858
    %v1860 = vmul.f32 %v1853, 1.442695
    %v1861 = vpow.pop %v1860
    %v1862 = vmul.f32 %v1854, 1.442695
    %v1863 = vpow.pop %v1862
    %v1864 = vmul.f32 %v1855, 1.442695
    %v1865 = vpow.pop %v1864
    %v1866 = vmul.f32 %v1856, 1.442695
    %v1867 = vpow.pop %v1866
    %v1868 = vmul.f32 %v1857, 1.442695
    %v1869 = vpow.pop %v1868
    %v1870 = vadd.f32 %v1859, 1.0
    %v1871 = vadd.f32 %v1861, 1.0
    %v1872 = vadd.f32 %v1863, 1.0
    %v1873 = vadd.f32 %v1865, 1.0
    %v1874 = vadd.f32 %v1867, 1.0
    %v1875 = vadd.f32 %v1869, 1.0
    %v1876 = vrcp.pop %v1870
    %v1877 = vmul.f32 %v1870, %v1876
    %v1878 = vsub.f32 1.0, %v1877
    %v1879 = vmul.f32 %v1876, %v1878
    %v1880 = vadd.f32 %v1876, %v1879
    %vm1881 = vweird.f32 %v1870
    %vm1882 = vweird.f32 %v1876
    %vm1883 = vmor %vm1881, %vm1882
    %v1884 = vsel %vm1883, %v1876, %v1880
    %v1885 = vand.u32 2147483647, %v1870
    %vm1886 = vcmp.eq.f32.partialorder %v1885, 8.507059e+37
    %v1887 = vand.u32 %v1870, 2147483648
    %v1888 = vor.u32 1.1754944e-38, %v1887
    %v1889 = vsel %vm1886, %v1888, %v1884
    %v1890 = vmul.f32 1.0, %v1889
    %v1891 = vrcp.pop %v1871
    %v1892 = vmul.f32 %v1871, %v1891
    %v1893 = vsub.f32 1.0, %v1892
    %v1894 = vmul.f32 %v1891, %v1893
    %v1895 = vadd.f32 %v1891, %v1894
    %vm1896 = vweird.f32 %v1871
    %vm1897 = vweird.f32 %v1891
    %vm1898 = vmor %vm1896, %vm1897
    %v1899 = vsel %vm1898, %v1891, %v1895
    %v1900 = vand.u32 2147483647, %v1871
    %vm1901 = vcmp.eq.f32.partialorder %v1900, 8.507059e+37
    %v1902 = vand.u32 %v1871, 2147483648
    %v1903 = vor.u32 1.1754944e-38, %v1902
    %v1904 = vsel %vm1901, %v1903, %v1899
    %v1905 = vmul.f32 1.0, %v1904
    %v1906 = vrcp.pop %v1872
    %v1907 = vmul.f32 %v1872, %v1906
    %v1908 = vsub.f32 1.0, %v1907
    %v1909 = vmul.f32 %v1906, %v1908
    %v1910 = vadd.f32 %v1906, %v1909
    %vm1911 = vweird.f32 %v1872
    %vm1912 = vweird.f32 %v1906
    %vm1913 = vmor %vm1911, %vm1912
    %v1914 = vsel %vm1913, %v1906, %v1910
    %v1915 = vand.u32 2147483647, %v1872
    %vm1916 = vcmp.eq.f32.partialorder %v1915, 8.507059e+37
    %v1917 = vand.u32 %v1872, 2147483648
    %v1918 = vor.u32 1.1754944e-38, %v1917
    %v1919 = vsel %vm1916, %v1918, %v1914
    %v1920 = vmul.f32 1.0, %v1919
    %v1921 = vrcp.pop %v1873
    %v1922 = vmul.f32 %v1873, %v1921
    %v1923 = vsub.f32 1.0, %v1922
    %v1924 = vmul.f32 %v1921, %v1923
    %v1925 = vadd.f32 %v1921, %v1924
    %vm1926 = vweird.f32 %v1873
    %vm1927 = vweird.f32 %v1921
    %vm1928 = vmor %vm1926, %vm1927
    %v1929 = vsel %vm1928, %v1921, %v1925
    %v1930 = vand.u32 2147483647, %v1873
    %vm1931 = vcmp.eq.f32.partialorder %v1930, 8.507059e+37
    %v1932 = vand.u32 %v1873, 2147483648
    %v1933 = vor.u32 1.1754944e-38, %v1932
    %v1934 = vsel %vm1931, %v1933, %v1929
    %v1935 = vmul.f32 1.0, %v1934
    %v1936 = vrcp.pop %v1874
    %v1937 = vmul.f32 %v1874, %v1936
    %v1938 = vsub.f32 1.0, %v1937
    %v1939 = vmul.f32 %v1936, %v1938
    %v1940 = vadd.f32 %v1936, %v1939
    %vm1941 = vweird.f32 %v1874
    %vm1942 = vweird.f32 %v1936
    %vm1943 = vmor %vm1941, %vm1942
    %v1944 = vsel %vm1943, %v1936, %v1940
    %v1945 = vand.u32 2147483647, %v1874
    %vm1946 = vcmp.eq.f32.partialorder %v1945, 8.507059e+37
    %v1947 = vand.u32 %v1874, 2147483648
    %v1948 = vor.u32 1.1754944e-38, %v1947
    %v1949 = vsel %vm1946, %v1948, %v1944
    %v1950 = vmul.f32 1.0, %v1949
    %v1951 = vrcp.pop %v1875
    %v1952 = vmul.f32 %v1875, %v1951
    %v1953 = vsub.f32 1.0, %v1952
    %v1954 = vmul.f32 %v1951, %v1953
    %v1955 = vadd.f32 %v1951, %v1954
    %vm1956 = vweird.f32 %v1875
    %vm1957 = vweird.f32 %v1951
    %vm1958 = vmor %vm1956, %vm1957
    %v1959 = vsel %vm1958, %v1951, %v1955
    %v1960 = vand.u32 2147483647, %v1875
    %vm1961 = vcmp.eq.f32.partialorder %v1960, 8.507059e+37
    %v1962 = vand.u32 %v1875, 2147483648
    %v1963 = vor.u32 1.1754944e-38, %v1962
    %v1964 = vsel %vm1961, %v1963, %v1959
    %v1965 = vmul.f32 1.0, %v1964
    %v1966 = vtanh.pop %v1847
    %v1967 = vtanh.pop %v1851
    %v1970 = vrot.slane %v1501, 7
    %v1971 = vrot.slane %v1502, 7
    %v1974 = vmul.f32 %v1905, %v1970
    %v1975 = vmul.f32 %v1950, %v1971
    %v1976 = vmul.f32 %v1890, %v1966
    %v1977 = vmul.f32 %v1935, %v1967
    %v1978 = vadd.f32 %v1974, %v1976
    %v1979 = vadd.f32 %v1975, %v1977
    %v1980 = vtanh.pop %v1978
    %v1981 = vtanh.pop %v1979
    %v1982 = vmul.f32 %v1920, %v1980
    %v1983 = vmul.f32 %v1965, %v1981
    %1984 = vmatpush.msra.mxu0 0.0
    %1985 = vmatpush.msra.mxu0 0.0
    %1986 = vmatpush.msra.mxu0 0.0
    %1987 = vmatpush.msra.mxu0 0.0
    %1988 = vmatpush.msra.mxu0 0.0
    %1989 = vmatpush.msra.mxu0 0.0
    %1990 = vmatpush.msra.mxu0 0.0
    %1991 = vmatpush.msra.mxu0 %v507
    %1992 = vmatpush.msra.mxu0 %v503
    %1993 = vmatpush.msra.mxu0 %v499
    %1994 = vmatpush.msra.mxu0 %v495
    %1995 = vmatpush.msra.mxu0 %v491
    %1996 = vmatpush.msra.mxu0 %v487
    %1997 = vmatpush.msra.mxu0 %v483
    %1998 = vmatpush.msra.mxu0 %v479
    %1999 = vmatpush.msra.mxu0 %v475
    %2000 = vmatmul.f32.gmra.mxu0 %v1742
    %v2001 = vpop.f32.mrf.mxu0
    %v2002 = vadd.f32 %v1026, %v2001
    %2003 = vdwg.mxu0
    %2004 = vmatpush.msra.mxu0 0.0
    %2005 = vmatpush.msra.mxu0 0.0
    %2006 = vmatpush.msra.mxu0 0.0
    %2007 = vmatpush.msra.mxu0 0.0
    %2008 = vmatpush.msra.mxu0 0.0
    %2009 = vmatpush.msra.mxu0 0.0
    %2010 = vmatpush.msra.mxu0 0.0
    %2011 = vmatpush.msra.mxu0 %v508
    %2012 = vmatpush.msra.mxu0 %v504
    %2013 = vmatpush.msra.mxu0 %v500
    %2014 = vmatpush.msra.mxu0 %v496
    %2015 = vmatpush.msra.mxu0 %v492
    %2016 = vmatpush.msra.mxu0 %v488
    %2017 = vmatpush.msra.mxu0 %v484
    %2018 = vmatpush.msra.mxu0 %v480
    %2019 = vmatpush.msra.mxu0 %v476
    %2020 = vmatmul.f32.gmra.mxu0 %v1742
    %v2021 = vpop.f32.mrf.mxu0
    %v2022 = vadd.f32 %v1027, %v2021
    %2023 = vdwg.mxu0
    %2024 = vmatpush.msra.mxu0 0.0
    %2025 = vmatpush.msra.mxu0 0.0
    %2026 = vmatpush.msra.mxu0 0.0
    %2027 = vmatpush.msra.mxu0 0.0
    %2028 = vmatpush.msra.mxu0 0.0
    %2029 = vmatpush.msra.mxu0 0.0
    %2030 = vmatpush.msra.mxu0 0.0
    %2031 = vmatpush.msra.mxu0 %v509
    %2032 = vmatpush.msra.mxu0 %v505
    %2033 = vmatpush.msra.mxu0 %v501
    %2034 = vmatpush.msra.mxu0 %v497
    %2035 = vmatpush.msra.mxu0 %v493
    %2036 = vmatpush.msra.mxu0 %v489
    %2037 = vmatpush.msra.mxu0 %v485
    %2038 = vmatpush.msra.mxu0 %v481
    %2039 = vmatpush.msra.mxu0 %v477
    %2040 = vmatmul.f32.gmra.mxu0 %v1742
    %v2041 = vpop.f32.mrf.mxu0
    %v2042 = vadd.f32 %v1028, %v2041
    %2043 = vdwg.mxu0
    %2044 = vmatpush.msra.mxu0 0.0
    %2045 = vmatpush.msra.mxu0 0.0
    %2046 = vmatpush.msra.mxu0 0.0
    %2047 = vmatpush.msra.mxu0 0.0
    %2048 = vmatpush.msra.mxu0 0.0
    %2049 = vmatpush.msra.mxu0 0.0
    %2050 = vmatpush.msra.mxu0 0.0
    %2051 = vmatpush.msra.mxu0 %v510
    %2052 = vmatpush.msra.mxu0 %v506
    %2053 = vmatpush.msra.mxu0 %v502
    %2054 = vmatpush.msra.mxu0 %v498
    %2055 = vmatpush.msra.mxu0 %v494
    %2056 = vmatpush.msra.mxu0 %v490
    %2057 = vmatpush.msra.mxu0 %v486
    %2058 = vmatpush.msra.mxu0 %v482
    %2059 = vmatpush.msra.mxu0 %v478
    %2060 = vmatmul.f32.gmra.mxu0 %v1742
    %v2061 = vpop.f32.mrf.mxu0
    %v2062 = vadd.f32 %v1029, %v2061
    %2063 = vdwg.mxu0
    %v2065 = vsel %vm548, %v1736, 0
    %2067 = vmatpush.msra.mxu0 0.0
    %2068 = vmatpush.msra.mxu0 0.0
    %2069 = vmatpush.msra.mxu0 0.0
    %2070 = vmatpush.msra.mxu0 0.0
    %2071 = vmatpush.msra.mxu0 0.0
    %2072 = vmatpush.msra.mxu0 0.0
    %2073 = vmatpush.msra.mxu0 0.0
    %2074 = vmatpush.msra.mxu0 %v543
    %2075 = vmatpush.msra.mxu0 %v539
    %2076 = vmatpush.msra.mxu0 %v535
    %2077 = vmatpush.msra.mxu0 %v531
    %2078 = vmatpush.msra.mxu0 %v527
    %2079 = vmatpush.msra.mxu0 %v523
    %2080 = vmatpush.msra.mxu0 %v519
    %2081 = vmatpush.msra.mxu0 %v515
    %2082 = vmatpush.msra.mxu0 %v511
    %2083 = vmatmul.f32.gmra.mxu0 %v2065
    %v2084 = vpop.f32.mrf.mxu0
    %v2085 = vadd.f32 0.0, %v2084
    %2086 = vdwg.mxu0
    %2087 = vmatpush.msra.mxu0 0.0
    %2088 = vmatpush.msra.mxu0 0.0
    %2089 = vmatpush.msra.mxu0 0.0
    %2090 = vmatpush.msra.mxu0 0.0
    %2091 = vmatpush.msra.mxu0 0.0
    %2092 = vmatpush.msra.mxu0 0.0
    %2093 = vmatpush.msra.mxu0 0.0
    %2094 = vmatpush.msra.mxu0 %v544
    %2095 = vmatpush.msra.mxu0 %v540
    %2096 = vmatpush.msra.mxu0 %v536
    %2097 = vmatpush.msra.mxu0 %v532
    %2098 = vmatpush.msra.mxu0 %v528
    %2099 = vmatpush.msra.mxu0 %v524
    %2100 = vmatpush.msra.mxu0 %v520
    %2101 = vmatpush.msra.mxu0 %v516
    %2102 = vmatpush.msra.mxu0 %v512
    %2103 = vmatmul.f32.gmra.mxu0 %v2065
    %v2104 = vpop.f32.mrf.mxu0
    %v2105 = vadd.f32 0.0, %v2104
    %2106 = vdwg.mxu0
    %2107 = vmatpush.msra.mxu0 0.0
    %2108 = vmatpush.msra.mxu0 0.0
    %2109 = vmatpush.msra.mxu0 0.0
    %2110 = vmatpush.msra.mxu0 0.0
    %2111 = vmatpush.msra.mxu0 0.0
    %2112 = vmatpush.msra.mxu0 0.0
    %2113 = vmatpush.msra.mxu0 0.0
    %2114 = vmatpush.msra.mxu0 %v545
    %2115 = vmatpush.msra.mxu0 %v541
    %2116 = vmatpush.msra.mxu0 %v537
    %2117 = vmatpush.msra.mxu0 %v533
    %2118 = vmatpush.msra.mxu0 %v529
    %2119 = vmatpush.msra.mxu0 %v525
    %2120 = vmatpush.msra.mxu0 %v521
    %2121 = vmatpush.msra.mxu0 %v517
    %2122 = vmatpush.msra.mxu0 %v513
    %2123 = vmatmul.f32.gmra.mxu0 %v2065
    %v2124 = vpop.f32.mrf.mxu0
    %v2125 = vadd.f32 0.0, %v2124
    %2126 = vdwg.mxu0
    %2127 = vmatpush.msra.mxu0 0.0
    %2128 = vmatpush.msra.mxu0 0.0
    %2129 = vmatpush.msra.mxu0 0.0
    %2130 = vmatpush.msra.mxu0 0.0
    %2131 = vmatpush.msra.mxu0 0.0
    %2132 = vmatpush.msra.mxu0 0.0
    %2133 = vmatpush.msra.mxu0 0.0
    %2134 = vmatpush.msra.mxu0 %v546
    %2135 = vmatpush.msra.mxu0 %v542
    %2136 = vmatpush.msra.mxu0 %v538
    %2137 = vmatpush.msra.mxu0 %v534
    %2138 = vmatpush.msra.mxu0 %v530
    %2139 = vmatpush.msra.mxu0 %v526
    %2140 = vmatpush.msra.mxu0 %v522
    %2141 = vmatpush.msra.mxu0 %v518
    %2142 = vmatpush.msra.mxu0 %v514
    %2143 = vmatmul.f32.gmra.mxu0 %v2065
    %v2144 = vpop.f32.mrf.mxu0
    %v2145 = vadd.f32 0.0, %v2144
    %2146 = vdwg.mxu0
    %v2147 = vadd.f32 %v2002, %v2085
    %v2148 = vadd.f32 %v2022, %v2105
    %v2149 = vadd.f32 %v2042, %v2125
    %v2150 = vadd.f32 %v2062, %v2145
    %v2151 = vxor.u32 %v2147, 2147483648
    %v2152 = vxor.u32 %v2148, 2147483648
    %v2153 = vxor.u32 %v2149, 2147483648
    %v2154 = vmul.f32 %v2151, 1.442695
    %v2155 = vpow.pop %v2154
    %v2156 = vmul.f32 %v2152, 1.442695
    %v2157 = vpow.pop %v2156
    %v2158 = vmul.f32 %v2153, 1.442695
    %v2159 = vpow.pop %v2158
    %v2160 = vadd.f32 %v2155, 1.0
    %v2161 = vadd.f32 %v2157, 1.0
    %v2162 = vadd.f32 %v2159, 1.0
    %v2163 = vrcp.pop %v2160
    %v2164 = vmul.f32 %v2160, %v2163
    %v2165 = vsub.f32 1.0, %v2164
    %v2166 = vmul.f32 %v2163, %v2165
    %v2167 = vadd.f32 %v2163, %v2166
    %vm2168 = vweird.f32 %v2160
    %vm2169 = vweird.f32 %v2163
    %vm2170 = vmor %vm2168, %vm2169
    %v2171 = vsel %vm2170, %v2163, %v2167
    %v2172 = vand.u32 2147483647, %v2160
    %vm2173 = vcmp.eq.f32.partialorder %v2172, 8.507059e+37
    %v2174 = vand.u32 %v2160, 2147483648
    %v2175 = vor.u32 1.1754944e-38, %v2174
    %v2176 = vsel %vm2173, %v2175, %v2171
    %v2177 = vmul.f32 1.0, %v2176
    %v2178 = vrcp.pop %v2161
    %v2179 = vmul.f32 %v2161, %v2178
    %v2180 = vsub.f32 1.0, %v2179
    %v2181 = vmul.f32 %v2178, %v2180
    %v2182 = vadd.f32 %v2178, %v2181
    %vm2183 = vweird.f32 %v2161
    %vm2184 = vweird.f32 %v2178
    %vm2185 = vmor %vm2183, %vm2184
    %v2186 = vsel %vm2185, %v2178, %v2182
    %v2187 = vand.u32 2147483647, %v2161
    %vm2188 = vcmp.eq.f32.partialorder %v2187, 8.507059e+37
    %v2189 = vand.u32 %v2161, 2147483648
    %v2190 = vor.u32 1.1754944e-38, %v2189
    %v2191 = vsel %vm2188, %v2190, %v2186
    %v2192 = vmul.f32 1.0, %v2191
    %v2193 = vrcp.pop %v2162
    %v2194 = vmul.f32 %v2162, %v2193
    %v2195 = vsub.f32 1.0, %v2194
    %v2196 = vmul.f32 %v2193, %v2195
    %v2197 = vadd.f32 %v2193, %v2196
    %vm2198 = vweird.f32 %v2162
    %vm2199 = vweird.f32 %v2193
    %vm2200 = vmor %vm2198, %vm2199
    %v2201 = vsel %vm2200, %v2193, %v2197
    %v2202 = vand.u32 2147483647, %v2162
    %vm2203 = vcmp.eq.f32.partialorder %v2202, 8.507059e+37
    %v2204 = vand.u32 %v2162, 2147483648
    %v2205 = vor.u32 1.1754944e-38, %v2204
    %v2206 = vsel %vm2203, %v2205, %v2201
    %v2207 = vmul.f32 1.0, %v2206
    %v2208 = vtanh.pop %v2150
    %v2209 = vmul.f32 %v2192, %v1734
    %v2210 = vmul.f32 %v2177, %v2208
    %v2211 = vadd.f32 %v2209, %v2210
    %v2212 = vtanh.pop %v2211
    %v2213 = vmul.f32 %v2207, %v2212
    %v2216 = vrot.slane %v1982, 3
    %v2217 = vrot.slane %v1983, 2
    %v2218 = vsel %vm785, %v2217, %v2216
    %v2219 = vsel %vm548, %v2218, 0
    %2221 = vmatpush.msra.mxu0 0.0
    %2222 = vmatpush.msra.mxu0 0.0
    %2223 = vmatpush.msra.mxu0 0.0
    %2224 = vmatpush.msra.mxu0 0.0
    %2225 = vmatpush.msra.mxu0 0.0
    %2226 = vmatpush.msra.mxu0 0.0
    %2227 = vmatpush.msra.mxu0 0.0
    %2228 = vmatpush.msra.mxu0 %v471
    %2229 = vmatpush.msra.mxu0 %v467
    %2230 = vmatpush.msra.mxu0 %v463
    %2231 = vmatpush.msra.mxu0 %v459
    %2232 = vmatpush.msra.mxu0 %v455
    %2233 = vmatpush.msra.mxu0 %v451
    %2234 = vmatpush.msra.mxu0 %v447
    %2235 = vmatpush.msra.mxu0 %v443
    %2236 = vmatpush.msra.mxu0 %v439
    %2237 = vmatmul.f32.gmra.mxu0 %v2219
    %v2238 = vpop.f32.mrf.mxu0
    %v2239 = vadd.f32 0.0, %v2238
    %2240 = vdwg.mxu0
    %2241 = vmatpush.msra.mxu0 0.0
    %2242 = vmatpush.msra.mxu0 0.0
    %2243 = vmatpush.msra.mxu0 0.0
    %2244 = vmatpush.msra.mxu0 0.0
    %2245 = vmatpush.msra.mxu0 0.0
    %2246 = vmatpush.msra.mxu0 0.0
    %2247 = vmatpush.msra.mxu0 0.0
    %2248 = vmatpush.msra.mxu0 %v472
    %2249 = vmatpush.msra.mxu0 %v468
    %2250 = vmatpush.msra.mxu0 %v464
    %2251 = vmatpush.msra.mxu0 %v460
    %2252 = vmatpush.msra.mxu0 %v456
    %2253 = vmatpush.msra.mxu0 %v452
    %2254 = vmatpush.msra.mxu0 %v448
    %2255 = vmatpush.msra.mxu0 %v444
    %2256 = vmatpush.msra.mxu0 %v440
    %2257 = vmatmul.f32.gmra.mxu0 %v2219
    %v2258 = vpop.f32.mrf.mxu0
    %v2259 = vadd.f32 0.0, %v2258
    %2260 = vdwg.mxu0
    %2261 = vmatpush.msra.mxu0 0.0
    %2262 = vmatpush.msra.mxu0 0.0
    %2263 = vmatpush.msra.mxu0 0.0
    %2264 = vmatpush.msra.mxu0 0.0
    %2265 = vmatpush.msra.mxu0 0.0
    %2266 = vmatpush.msra.mxu0 0.0
    %2267 = vmatpush.msra.mxu0 0.0
    %2268 = vmatpush.msra.mxu0 %v473
    %2269 = vmatpush.msra.mxu0 %v469
    %2270 = vmatpush.msra.mxu0 %v465
    %2271 = vmatpush.msra.mxu0 %v461
    %2272 = vmatpush.msra.mxu0 %v457
    %2273 = vmatpush.msra.mxu0 %v453
    %2274 = vmatpush.msra.mxu0 %v449
    %2275 = vmatpush.msra.mxu0 %v445
    %2276 = vmatpush.msra.mxu0 %v441
    %2277 = vmatmul.f32.gmra.mxu0 %v2219
    %v2278 = vpop.f32.mrf.mxu0
    %v2279 = vadd.f32 0.0, %v2278
    %2280 = vdwg.mxu0
    %2281 = vmatpush.msra.mxu0 0.0
    %2282 = vmatpush.msra.mxu0 0.0
    %2283 = vmatpush.msra.mxu0 0.0
    %2284 = vmatpush.msra.mxu0 0.0
    %2285 = vmatpush.msra.mxu0 0.0
    %2286 = vmatpush.msra.mxu0 0.0
    %2287 = vmatpush.msra.mxu0 0.0
    %2288 = vmatpush.msra.mxu0 %v474
    %2289 = vmatpush.msra.mxu0 %v470
    %2290 = vmatpush.msra.mxu0 %v466
    %2291 = vmatpush.msra.mxu0 %v462
    %2292 = vmatpush.msra.mxu0 %v458
    %2293 = vmatpush.msra.mxu0 %v454
    %2294 = vmatpush.msra.mxu0 %v450
    %2295 = vmatpush.msra.mxu0 %v446
    %2296 = vmatpush.msra.mxu0 %v442
    %2297 = vmatmul.f32.gmra.mxu0 %v2219
    %v2298 = vpop.f32.mrf.mxu0
    %v2299 = vadd.f32 0.0, %v2298
    %2300 = vdwg.mxu0
    %v2305 = vrot.slane %v2239, 4
    %v2306 = vrot.slane %v2259, 4
    %v2307 = vrot.slane %v2279, 4
    %v2308 = vrot.slane %v2299, 4
    %v2309 = vrot.slane %v2239, 5
    %v2310 = vrot.slane %v2259, 5
    %v2311 = vrot.slane %v2279, 5
    %v2312 = vrot.slane %v2299, 5
    %v2321 = vadd.f32 %v365, %v2305
    %v2322 = vadd.f32 %v388, %v2306
    %v2323 = vadd.f32 %v411, %v2307
    %v2324 = vadd.f32 %v434, %v2308
    %v2325 = vadd.f32 %v368, %v2309
    %v2326 = vadd.f32 %v391, %v2310
    %v2327 = vadd.f32 %v414, %v2311
    %v2328 = vadd.f32 %v437, %v2312
    %v2329 = vxor.u32 %v2321, 2147483648
    %v2330 = vxor.u32 %v2322, 2147483648
    %v2331 = vxor.u32 %v2323, 2147483648
    %v2332 = vxor.u32 %v2325, 2147483648
    %v2333 = vxor.u32 %v2326, 2147483648
    %v2334 = vxor.u32 %v2327, 2147483648
    %v2335 = vmul.f32 %v2329, 1.442695
    %v2336 = vpow.pop %v2335
    %v2337 = vmul.f32 %v2330, 1.442695
    %v2338 = vpow.pop %v2337
    %v2339 = vmul.f32 %v2331, 1.442695
    %v2340 = vpow.pop %v2339
    %v2341 = vmul.f32 %v2332, 1.442695
    %v2342 = vpow.pop %v2341
    %v2343 = vmul.f32 %v2333, 1.442695
    %v2344 = vpow.pop %v2343
    %v2345 = vmul.f32 %v2334, 1.442695
    %v2346 = vpow.pop %v2345
    %v2347 = vadd.f32 %v2336, 1.0
    %v2348 = vadd.f32 %v2338, 1.0
    %v2349 = vadd.f32 %v2340, 1.0
    %v2350 = vadd.f32 %v2342, 1.0
    %v2351 = vadd.f32 %v2344, 1.0
    %v2352 = vadd.f32 %v2346, 1.0
    %v2353 = vrcp.pop %v2347
    %v2354 = vmul.f32 %v2347, %v2353
    %v2355 = vsub.f32 1.0, %v2354
    %v2356 = vmul.f32 %v2353, %v2355
    %v2357 = vadd.f32 %v2353, %v2356
    %vm2358 = vweird.f32 %v2347
    %vm2359 = vweird.f32 %v2353
    %vm2360 = vmor %vm2358, %vm2359
    %v2361 = vsel %vm2360, %v2353, %v2357
    %v2362 = vand.u32 2147483647, %v2347
    %vm2363 = vcmp.eq.f32.partialorder %v2362, 8.507059e+37
    %v2364 = vand.u32 %v2347, 2147483648
    %v2365 = vor.u32 1.1754944e-38, %v2364
    %v2366 = vsel %vm2363, %v2365, %v2361
    %v2367 = vmul.f32 1.0, %v2366
    %v2368 = vrcp.pop %v2348
    %v2369 = vmul.f32 %v2348, %v2368
    %v2370 = vsub.f32 1.0, %v2369
    %v2371 = vmul.f32 %v2368, %v2370
    %v2372 = vadd.f32 %v2368, %v2371
    %vm2373 = vweird.f32 %v2348
    %vm2374 = vweird.f32 %v2368
    %vm2375 = vmor %vm2373, %vm2374
    %v2376 = vsel %vm2375, %v2368, %v2372
    %v2377 = vand.u32 2147483647, %v2348
    %vm2378 = vcmp.eq.f32.partialorder %v2377, 8.507059e+37
    %v2379 = vand.u32 %v2348, 2147483648
    %v2380 = vor.u32 1.1754944e-38, %v2379
    %v2381 = vsel %vm2378, %v2380, %v2376
    %v2382 = vmul.f32 1.0, %v2381
    %v2383 = vrcp.pop %v2349
    %v2384 = vmul.f32 %v2349, %v2383
    %v2385 = vsub.f32 1.0, %v2384
    %v2386 = vmul.f32 %v2383, %v2385
    %v2387 = vadd.f32 %v2383, %v2386
    %vm2388 = vweird.f32 %v2349
    %vm2389 = vweird.f32 %v2383
    %vm2390 = vmor %vm2388, %vm2389
    %v2391 = vsel %vm2390, %v2383, %v2387
    %v2392 = vand.u32 2147483647, %v2349
    %vm2393 = vcmp.eq.f32.partialorder %v2392, 8.507059e+37
    %v2394 = vand.u32 %v2349, 2147483648
    %v2395 = vor.u32 1.1754944e-38, %v2394
    %v2396 = vsel %vm2393, %v2395, %v2391
    %v2397 = vmul.f32 1.0, %v2396
    %v2398 = vrcp.pop %v2350
    %v2399 = vmul.f32 %v2350, %v2398
    %v2400 = vsub.f32 1.0, %v2399
    %v2401 = vmul.f32 %v2398, %v2400
    %v2402 = vadd.f32 %v2398, %v2401
    %vm2403 = vweird.f32 %v2350
    %vm2404 = vweird.f32 %v2398
    %vm2405 = vmor %vm2403, %vm2404
    %v2406 = vsel %vm2405, %v2398, %v2402
    %v2407 = vand.u32 2147483647, %v2350
    %vm2408 = vcmp.eq.f32.partialorder %v2407, 8.507059e+37
    %v2409 = vand.u32 %v2350, 2147483648
    %v2410 = vor.u32 1.1754944e-38, %v2409
    %v2411 = vsel %vm2408, %v2410, %v2406
    %v2412 = vmul.f32 1.0, %v2411
    %v2413 = vrcp.pop %v2351
    %v2414 = vmul.f32 %v2351, %v2413
    %v2415 = vsub.f32 1.0, %v2414
    %v2416 = vmul.f32 %v2413, %v2415
    %v2417 = vadd.f32 %v2413, %v2416
    %vm2418 = vweird.f32 %v2351
    %vm2419 = vweird.f32 %v2413
    %vm2420 = vmor %vm2418, %vm2419
    %v2421 = vsel %vm2420, %v2413, %v2417
    %v2422 = vand.u32 2147483647, %v2351
    %vm2423 = vcmp.eq.f32.partialorder %v2422, 8.507059e+37
    %v2424 = vand.u32 %v2351, 2147483648
    %v2425 = vor.u32 1.1754944e-38, %v2424
    %v2426 = vsel %vm2423, %v2425, %v2421
    %v2427 = vmul.f32 1.0, %v2426
    %v2428 = vrcp.pop %v2352
    %v2429 = vmul.f32 %v2352, %v2428
    %v2430 = vsub.f32 1.0, %v2429
    %v2431 = vmul.f32 %v2428, %v2430
    %v2432 = vadd.f32 %v2428, %v2431
    %vm2433 = vweird.f32 %v2352
    %vm2434 = vweird.f32 %v2428
    %vm2435 = vmor %vm2433, %vm2434
    %v2436 = vsel %vm2435, %v2428, %v2432
    %v2437 = vand.u32 2147483647, %v2352
    %vm2438 = vcmp.eq.f32.partialorder %v2437, 8.507059e+37
    %v2439 = vand.u32 %v2352, 2147483648
    %v2440 = vor.u32 1.1754944e-38, %v2439
    %v2441 = vsel %vm2438, %v2440, %v2436
    %v2442 = vmul.f32 1.0, %v2441
    %v2443 = vtanh.pop %v2324
    %v2444 = vtanh.pop %v2328
    %v2447 = vrot.slane %v1978, 7
    %v2448 = vrot.slane %v1979, 7
    %v2451 = vmul.f32 %v2382, %v2447
    %v2452 = vmul.f32 %v2427, %v2448
    %v2453 = vmul.f32 %v2367, %v2443
    %v2454 = vmul.f32 %v2412, %v2444
    %v2455 = vadd.f32 %v2451, %v2453
    %v2456 = vadd.f32 %v2452, %v2454
    %v2457 = vtanh.pop %v2455
    %v2458 = vtanh.pop %v2456
    %v2459 = vmul.f32 %v2397, %v2457
    %v2460 = vmul.f32 %v2442, %v2458
    %2461 = vmatpush.msra.mxu0 0.0
    %2462 = vmatpush.msra.mxu0 0.0
    %2463 = vmatpush.msra.mxu0 0.0
    %2464 = vmatpush.msra.mxu0 0.0
    %2465 = vmatpush.msra.mxu0 0.0
    %2466 = vmatpush.msra.mxu0 0.0
    %2467 = vmatpush.msra.mxu0 0.0
    %2468 = vmatpush.msra.mxu0 %v507
    %2469 = vmatpush.msra.mxu0 %v503
    %2470 = vmatpush.msra.mxu0 %v499
    %2471 = vmatpush.msra.mxu0 %v495
    %2472 = vmatpush.msra.mxu0 %v491
    %2473 = vmatpush.msra.mxu0 %v487
    %2474 = vmatpush.msra.mxu0 %v483
    %2475 = vmatpush.msra.mxu0 %v479
    %2476 = vmatpush.msra.mxu0 %v475
    %2477 = vmatmul.f32.gmra.mxu0 %v2219
    %v2478 = vpop.f32.mrf.mxu0
    %v2479 = vadd.f32 %v1026, %v2478
    %2480 = vdwg.mxu0
    %2481 = vmatpush.msra.mxu0 0.0
    %2482 = vmatpush.msra.mxu0 0.0
    %2483 = vmatpush.msra.mxu0 0.0
    %2484 = vmatpush.msra.mxu0 0.0
    %2485 = vmatpush.msra.mxu0 0.0
    %2486 = vmatpush.msra.mxu0 0.0
    %2487 = vmatpush.msra.mxu0 0.0
    %2488 = vmatpush.msra.mxu0 %v508
    %2489 = vmatpush.msra.mxu0 %v504
    %2490 = vmatpush.msra.mxu0 %v500
    %2491 = vmatpush.msra.mxu0 %v496
    %2492 = vmatpush.msra.mxu0 %v492
    %2493 = vmatpush.msra.mxu0 %v488
    %2494 = vmatpush.msra.mxu0 %v484
    %2495 = vmatpush.msra.mxu0 %v480
    %2496 = vmatpush.msra.mxu0 %v476
    %2497 = vmatmul.f32.gmra.mxu0 %v2219
    %v2498 = vpop.f32.mrf.mxu0
    %v2499 = vadd.f32 %v1027, %v2498
    %2500 = vdwg.mxu0
    %2501 = vmatpush.msra.mxu0 0.0
    %2502 = vmatpush.msra.mxu0 0.0
    %2503 = vmatpush.msra.mxu0 0.0
    %2504 = vmatpush.msra.mxu0 0.0
    %2505 = vmatpush.msra.mxu0 0.0
    %2506 = vmatpush.msra.mxu0 0.0
    %2507 = vmatpush.msra.mxu0 0.0
    %2508 = vmatpush.msra.mxu0 %v509
    %2509 = vmatpush.msra.mxu0 %v505
    %2510 = vmatpush.msra.mxu0 %v501
    %2511 = vmatpush.msra.mxu0 %v497
    %2512 = vmatpush.msra.mxu0 %v493
    %2513 = vmatpush.msra.mxu0 %v489
    %2514 = vmatpush.msra.mxu0 %v485
    %2515 = vmatpush.msra.mxu0 %v481
    %2516 = vmatpush.msra.mxu0 %v477
    %2517 = vmatmul.f32.gmra.mxu0 %v2219
    %v2518 = vpop.f32.mrf.mxu0
    %v2519 = vadd.f32 %v1028, %v2518
    %2520 = vdwg.mxu0
    %2521 = vmatpush.msra.mxu0 0.0
    %2522 = vmatpush.msra.mxu0 0.0
    %2523 = vmatpush.msra.mxu0 0.0
    %2524 = vmatpush.msra.mxu0 0.0
    %2525 = vmatpush.msra.mxu0 0.0
    %2526 = vmatpush.msra.mxu0 0.0
    %2527 = vmatpush.msra.mxu0 0.0
    %2528 = vmatpush.msra.mxu0 %v510
    %2529 = vmatpush.msra.mxu0 %v506
    %2530 = vmatpush.msra.mxu0 %v502
    %2531 = vmatpush.msra.mxu0 %v498
    %2532 = vmatpush.msra.mxu0 %v494
    %2533 = vmatpush.msra.mxu0 %v490
    %2534 = vmatpush.msra.mxu0 %v486
    %2535 = vmatpush.msra.mxu0 %v482
    %2536 = vmatpush.msra.mxu0 %v478
    %2537 = vmatmul.f32.gmra.mxu0 %v2219
    %v2538 = vpop.f32.mrf.mxu0
    %v2539 = vadd.f32 %v1029, %v2538
    %2540 = vdwg.mxu0
    %v2542 = vsel %vm548, %v2213, 0
    %2544 = vmatpush.msra.mxu0 0.0
    %2545 = vmatpush.msra.mxu0 0.0
    %2546 = vmatpush.msra.mxu0 0.0
    %2547 = vmatpush.msra.mxu0 0.0
    %2548 = vmatpush.msra.mxu0 0.0
    %2549 = vmatpush.msra.mxu0 0.0
    %2550 = vmatpush.msra.mxu0 0.0
    %2551 = vmatpush.msra.mxu0 %v543
    %2552 = vmatpush.msra.mxu0 %v539
    %2553 = vmatpush.msra.mxu0 %v535
    %2554 = vmatpush.msra.mxu0 %v531
    %2555 = vmatpush.msra.mxu0 %v527
    %2556 = vmatpush.msra.mxu0 %v523
    %2557 = vmatpush.msra.mxu0 %v519
    %2558 = vmatpush.msra.mxu0 %v515
    %2559 = vmatpush.msra.mxu0 %v511
    %2560 = vmatmul.f32.gmra.mxu0 %v2542
    %v2561 = vpop.f32.mrf.mxu0
    %v2562 = vadd.f32 0.0, %v2561
    %2563 = vdwg.mxu0
    %2564 = vmatpush.msra.mxu0 0.0
    %2565 = vmatpush.msra.mxu0 0.0
    %2566 = vmatpush.msra.mxu0 0.0
    %2567 = vmatpush.msra.mxu0 0.0
    %2568 = vmatpush.msra.mxu0 0.0
    %2569 = vmatpush.msra.mxu0 0.0
    %2570 = vmatpush.msra.mxu0 0.0
    %2571 = vmatpush.msra.mxu0 %v544
    %2572 = vmatpush.msra.mxu0 %v540
    %2573 = vmatpush.msra.mxu0 %v536
    %2574 = vmatpush.msra.mxu0 %v532
    %2575 = vmatpush.msra.mxu0 %v528
    %2576 = vmatpush.msra.mxu0 %v524
    %2577 = vmatpush.msra.mxu0 %v520
    %2578 = vmatpush.msra.mxu0 %v516
    %2579 = vmatpush.msra.mxu0 %v512
    %2580 = vmatmul.f32.gmra.mxu0 %v2542
    %v2581 = vpop.f32.mrf.mxu0
    %v2582 = vadd.f32 0.0, %v2581
    %2583 = vdwg.mxu0
    %2584 = vmatpush.msra.mxu0 0.0
    %2585 = vmatpush.msra.mxu0 0.0
    %2586 = vmatpush.msra.mxu0 0.0
    %2587 = vmatpush.msra.mxu0 0.0
    %2588 = vmatpush.msra.mxu0 0.0
    %2589 = vmatpush.msra.mxu0 0.0
    %2590 = vmatpush.msra.mxu0 0.0
    %2591 = vmatpush.msra.mxu0 %v545
    %2592 = vmatpush.msra.mxu0 %v541
    %2593 = vmatpush.msra.mxu0 %v537
    %2594 = vmatpush.msra.mxu0 %v533
    %2595 = vmatpush.msra.mxu0 %v529
    %2596 = vmatpush.msra.mxu0 %v525
    %2597 = vmatpush.msra.mxu0 %v521
    %2598 = vmatpush.msra.mxu0 %v517
    %2599 = vmatpush.msra.mxu0 %v513
    %2600 = vmatmul.f32.gmra.mxu0 %v2542
    %v2601 = vpop.f32.mrf.mxu0
    %v2602 = vadd.f32 0.0, %v2601
    %2603 = vdwg.mxu0
    %2604 = vmatpush.msra.mxu0 0.0
    %2605 = vmatpush.msra.mxu0 0.0
    %2606 = vmatpush.msra.mxu0 0.0
    %2607 = vmatpush.msra.mxu0 0.0
    %2608 = vmatpush.msra.mxu0 0.0
    %2609 = vmatpush.msra.mxu0 0.0
    %2610 = vmatpush.msra.mxu0 0.0
    %2611 = vmatpush.msra.mxu0 %v546
    %2612 = vmatpush.msra.mxu0 %v542
    %2613 = vmatpush.msra.mxu0 %v538
    %2614 = vmatpush.msra.mxu0 %v534
    %2615 = vmatpush.msra.mxu0 %v530
    %2616 = vmatpush.msra.mxu0 %v526
    %2617 = vmatpush.msra.mxu0 %v522
    %2618 = vmatpush.msra.mxu0 %v518
    %2619 = vmatpush.msra.mxu0 %v514
    %2620 = vmatmul.f32.gmra.mxu0 %v2542
    %v2621 = vpop.f32.mrf.mxu0
    %v2622 = vadd.f32 0.0, %v2621
    %2623 = vdwg.mxu0
    %v2624 = vadd.f32 %v2479, %v2562
    %v2625 = vadd.f32 %v2499, %v2582
    %v2626 = vadd.f32 %v2519, %v2602
    %v2627 = vadd.f32 %v2539, %v2622
    %v2628 = vxor.u32 %v2624, 2147483648
    %v2629 = vxor.u32 %v2625, 2147483648
    %v2630 = vxor.u32 %v2626, 2147483648
    %v2631 = vmul.f32 %v2628, 1.442695
    %v2632 = vpow.pop %v2631
    %v2633 = vmul.f32 %v2629, 1.442695
    %v2634 = vpow.pop %v2633
    %v2635 = vmul.f32 %v2630, 1.442695
    %v2636 = vpow.pop %v2635
    %v2637 = vadd.f32 %v2632, 1.0
    %v2638 = vadd.f32 %v2634, 1.0
    %v2639 = vadd.f32 %v2636, 1.0
    %v2640 = vrcp.pop %v2637
    %v2641 = vmul.f32 %v2637, %v2640
    %v2642 = vsub.f32 1.0, %v2641
    %v2643 = vmul.f32 %v2640, %v2642
    %v2644 = vadd.f32 %v2640, %v2643
    %vm2645 = vweird.f32 %v2637
    %vm2646 = vweird.f32 %v2640
    %vm2647 = vmor %vm2645, %vm2646
    %v2648 = vsel %vm2647, %v2640, %v2644
    %v2649 = vand.u32 2147483647, %v2637
    %vm2650 = vcmp.eq.f32.partialorder %v2649, 8.507059e+37
    %v2651 = vand.u32 %v2637, 2147483648
    %v2652 = vor.u32 1.1754944e-38, %v2651
    %v2653 = vsel %vm2650, %v2652, %v2648
    %v2654 = vmul.f32 1.0, %v2653
    %v2655 = vrcp.pop %v2638
    %v2656 = vmul.f32 %v2638, %v2655
    %v2657 = vsub.f32 1.0, %v2656
    %v2658 = vmul.f32 %v2655, %v2657
    %v2659 = vadd.f32 %v2655, %v2658
    %vm2660 = vweird.f32 %v2638
    %vm2661 = vweird.f32 %v2655
    %vm2662 = vmor %vm2660, %vm2661
    %v2663 = vsel %vm2662, %v2655, %v2659
    %v2664 = vand.u32 2147483647, %v2638
    %vm2665 = vcmp.eq.f32.partialorder %v2664, 8.507059e+37
    %v2666 = vand.u32 %v2638, 2147483648
    %v2667 = vor.u32 1.1754944e-38, %v2666
    %v2668 = vsel %vm2665, %v2667, %v2663
    %v2669 = vmul.f32 1.0, %v2668
    %v2670 = vrcp.pop %v2639
    %v2671 = vmul.f32 %v2639, %v2670
    %v2672 = vsub.f32 1.0, %v2671
    %v2673 = vmul.f32 %v2670, %v2672
    %v2674 = vadd.f32 %v2670, %v2673
    %vm2675 = vweird.f32 %v2639
    %vm2676 = vweird.f32 %v2670
    %vm2677 = vmor %vm2675, %vm2676
    %v2678 = vsel %vm2677, %v2670, %v2674
    %v2679 = vand.u32 2147483647, %v2639
    %vm2680 = vcmp.eq.f32.partialorder %v2679, 8.507059e+37
    %v2681 = vand.u32 %v2639, 2147483648
    %v2682 = vor.u32 1.1754944e-38, %v2681
    %v2683 = vsel %vm2680, %v2682, %v2678
    %v2684 = vmul.f32 1.0, %v2683
    %v2685 = vtanh.pop %v2627
    %v2686 = vmul.f32 %v2669, %v2211
    %v2687 = vmul.f32 %v2654, %v2685
    %v2688 = vadd.f32 %v2686, %v2687
    %v2689 = vtanh.pop %v2688
    %v2690 = vmul.f32 %v2684, %v2689
    %v2693 = vrot.slane %v2459, 4
    %v2694 = vrot.slane %v2460, 3
    %v2695 = vsel %vm785, %v2694, %v2693
    %v2696 = vsel %vm548, %v2695, 0
    %2698 = vmatpush.msra.mxu0 0.0
    %2699 = vmatpush.msra.mxu0 0.0
    %2700 = vmatpush.msra.mxu0 0.0
    %2701 = vmatpush.msra.mxu0 0.0
    %2702 = vmatpush.msra.mxu0 0.0
    %2703 = vmatpush.msra.mxu0 0.0
    %2704 = vmatpush.msra.mxu0 0.0
    %2705 = vmatpush.msra.mxu0 %v471
    %2706 = vmatpush.msra.mxu0 %v467
    %2707 = vmatpush.msra.mxu0 %v463
    %2708 = vmatpush.msra.mxu0 %v459
    %2709 = vmatpush.msra.mxu0 %v455
    %2710 = vmatpush.msra.mxu0 %v451
    %2711 = vmatpush.msra.mxu0 %v447
    %2712 = vmatpush.msra.mxu0 %v443
    %2713 = vmatpush.msra.mxu0 %v439
    %2714 = vmatmul.f32.gmra.mxu0 %v2696
    %v2715 = vpop.f32.mrf.mxu0
    %v2716 = vadd.f32 0.0, %v2715
    %2717 = vdwg.mxu0
    %2718 = vmatpush.msra.mxu0 0.0
    %2719 = vmatpush.msra.mxu0 0.0
    %2720 = vmatpush.msra.mxu0 0.0
    %2721 = vmatpush.msra.mxu0 0.0
    %2722 = vmatpush.msra.mxu0 0.0
    %2723 = vmatpush.msra.mxu0 0.0
    %2724 = vmatpush.msra.mxu0 0.0
    %2725 = vmatpush.msra.mxu0 %v472
    %2726 = vmatpush.msra.mxu0 %v468
    %2727 = vmatpush.msra.mxu0 %v464
    %2728 = vmatpush.msra.mxu0 %v460
    %2729 = vmatpush.msra.mxu0 %v456
    %2730 = vmatpush.msra.mxu0 %v452
    %2731 = vmatpush.msra.mxu0 %v448
    %2732 = vmatpush.msra.mxu0 %v444
    %2733 = vmatpush.msra.mxu0 %v440
    %2734 = vmatmul.f32.gmra.mxu0 %v2696
    %v2735 = vpop.f32.mrf.mxu0
    %v2736 = vadd.f32 0.0, %v2735
    %2737 = vdwg.mxu0
    %2738 = vmatpush.msra.mxu0 0.0
    %2739 = vmatpush.msra.mxu0 0.0
    %2740 = vmatpush.msra.mxu0 0.0
    %2741 = vmatpush.msra.mxu0 0.0
    %2742 = vmatpush.msra.mxu0 0.0
    %2743 = vmatpush.msra.mxu0 0.0
    %2744 = vmatpush.msra.mxu0 0.0
    %2745 = vmatpush.msra.mxu0 %v473
    %2746 = vmatpush.msra.mxu0 %v469
    %2747 = vmatpush.msra.mxu0 %v465
    %2748 = vmatpush.msra.mxu0 %v461
    %2749 = vmatpush.msra.mxu0 %v457
    %2750 = vmatpush.msra.mxu0 %v453
    %2751 = vmatpush.msra.mxu0 %v449
    %2752 = vmatpush.msra.mxu0 %v445
    %2753 = vmatpush.msra.mxu0 %v441
    %2754 = vmatmul.f32.gmra.mxu0 %v2696
    %v2755 = vpop.f32.mrf.mxu0
    %v2756 = vadd.f32 0.0, %v2755
    %2757 = vdwg.mxu0
    %2758 = vmatpush.msra.mxu0 0.0
    %2759 = vmatpush.msra.mxu0 0.0
    %2760 = vmatpush.msra.mxu0 0.0
    %2761 = vmatpush.msra.mxu0 0.0
    %2762 = vmatpush.msra.mxu0 0.0
    %2763 = vmatpush.msra.mxu0 0.0
    %2764 = vmatpush.msra.mxu0 0.0
    %2765 = vmatpush.msra.mxu0 %v474
    %2766 = vmatpush.msra.mxu0 %v470
    %2767 = vmatpush.msra.mxu0 %v466
    %2768 = vmatpush.msra.mxu0 %v462
    %2769 = vmatpush.msra.mxu0 %v458
    %2770 = vmatpush.msra.mxu0 %v454
    %2771 = vmatpush.msra.mxu0 %v450
    %2772 = vmatpush.msra.mxu0 %v446
    %2773 = vmatpush.msra.mxu0 %v442
    %2774 = vmatmul.f32.gmra.mxu0 %v2696
    %v2775 = vpop.f32.mrf.mxu0
    %v2776 = vadd.f32 0.0, %v2775
    %2777 = vdwg.mxu0
    %v2782 = vrot.slane %v2716, 3
    %v2783 = vrot.slane %v2736, 3
    %v2784 = vrot.slane %v2756, 3
    %v2785 = vrot.slane %v2776, 3
    %v2786 = vrot.slane %v2716, 4
    %v2787 = vrot.slane %v2736, 4
    %v2788 = vrot.slane %v2756, 4
    %v2789 = vrot.slane %v2776, 4
    %v2798 = vadd.f32 %v365, %v2782
    %v2799 = vadd.f32 %v388, %v2783
    %v2800 = vadd.f32 %v411, %v2784
    %v2801 = vadd.f32 %v434, %v2785
    %v2802 = vadd.f32 %v368, %v2786
    %v2803 = vadd.f32 %v391, %v2787
    %v2804 = vadd.f32 %v414, %v2788
    %v2805 = vadd.f32 %v437, %v2789
    %v2806 = vxor.u32 %v2798, 2147483648
    %v2807 = vxor.u32 %v2799, 2147483648
    %v2808 = vxor.u32 %v2800, 2147483648
    %v2809 = vxor.u32 %v2802, 2147483648
    %v2810 = vxor.u32 %v2803, 2147483648
    %v2811 = vxor.u32 %v2804, 2147483648
    %v2812 = vmul.f32 %v2806, 1.442695
    %v2813 = vpow.pop %v2812
    %v2814 = vmul.f32 %v2807, 1.442695
    %v2815 = vpow.pop %v2814
    %v2816 = vmul.f32 %v2808, 1.442695
    %v2817 = vpow.pop %v2816
    %v2818 = vmul.f32 %v2809, 1.442695
    %v2819 = vpow.pop %v2818
    %v2820 = vmul.f32 %v2810, 1.442695
    %v2821 = vpow.pop %v2820
    %v2822 = vmul.f32 %v2811, 1.442695
    %v2823 = vpow.pop %v2822
    %v2824 = vadd.f32 %v2813, 1.0
    %v2825 = vadd.f32 %v2815, 1.0
    %v2826 = vadd.f32 %v2817, 1.0
    %v2827 = vadd.f32 %v2819, 1.0
    %v2828 = vadd.f32 %v2821, 1.0
    %v2829 = vadd.f32 %v2823, 1.0
    %v2830 = vrcp.pop %v2824
    %v2831 = vmul.f32 %v2824, %v2830
    %v2832 = vsub.f32 1.0, %v2831
    %v2833 = vmul.f32 %v2830, %v2832
    %v2834 = vadd.f32 %v2830, %v2833
    %vm2835 = vweird.f32 %v2824
    %vm2836 = vweird.f32 %v2830
    %vm2837 = vmor %vm2835, %vm2836
    %v2838 = vsel %vm2837, %v2830, %v2834
    %v2839 = vand.u32 2147483647, %v2824
    %vm2840 = vcmp.eq.f32.partialorder %v2839, 8.507059e+37
    %v2841 = vand.u32 %v2824, 2147483648
    %v2842 = vor.u32 1.1754944e-38, %v2841
    %v2843 = vsel %vm2840, %v2842, %v2838
    %v2844 = vmul.f32 1.0, %v2843
    %v2845 = vrcp.pop %v2825
    %v2846 = vmul.f32 %v2825, %v2845
    %v2847 = vsub.f32 1.0, %v2846
    %v2848 = vmul.f32 %v2845, %v2847
    %v2849 = vadd.f32 %v2845, %v2848
    %vm2850 = vweird.f32 %v2825
    %vm2851 = vweird.f32 %v2845
    %vm2852 = vmor %vm2850, %vm2851
    %v2853 = vsel %vm2852, %v2845, %v2849
    %v2854 = vand.u32 2147483647, %v2825
    %vm2855 = vcmp.eq.f32.partialorder %v2854, 8.507059e+37
    %v2856 = vand.u32 %v2825, 2147483648
    %v2857 = vor.u32 1.1754944e-38, %v2856
    %v2858 = vsel %vm2855, %v2857, %v2853
    %v2859 = vmul.f32 1.0, %v2858
    %v2860 = vrcp.pop %v2826
    %v2861 = vmul.f32 %v2826, %v2860
    %v2862 = vsub.f32 1.0, %v2861
    %v2863 = vmul.f32 %v2860, %v2862
    %v2864 = vadd.f32 %v2860, %v2863
    %vm2865 = vweird.f32 %v2826
    %vm2866 = vweird.f32 %v2860
    %vm2867 = vmor %vm2865, %vm2866
    %v2868 = vsel %vm2867, %v2860, %v2864
    %v2869 = vand.u32 2147483647, %v2826
    %vm2870 = vcmp.eq.f32.partialorder %v2869, 8.507059e+37
    %v2871 = vand.u32 %v2826, 2147483648
    %v2872 = vor.u32 1.1754944e-38, %v2871
    %v2873 = vsel %vm2870, %v2872, %v2868
    %v2874 = vmul.f32 1.0, %v2873
    %v2875 = vrcp.pop %v2827
    %v2876 = vmul.f32 %v2827, %v2875
    %v2877 = vsub.f32 1.0, %v2876
    %v2878 = vmul.f32 %v2875, %v2877
    %v2879 = vadd.f32 %v2875, %v2878
    %vm2880 = vweird.f32 %v2827
    %vm2881 = vweird.f32 %v2875
    %vm2882 = vmor %vm2880, %vm2881
    %v2883 = vsel %vm2882, %v2875, %v2879
    %v2884 = vand.u32 2147483647, %v2827
    %vm2885 = vcmp.eq.f32.partialorder %v2884, 8.507059e+37
    %v2886 = vand.u32 %v2827, 2147483648
    %v2887 = vor.u32 1.1754944e-38, %v2886
    %v2888 = vsel %vm2885, %v2887, %v2883
    %v2889 = vmul.f32 1.0, %v2888
    %v2890 = vrcp.pop %v2828
    %v2891 = vmul.f32 %v2828, %v2890
    %v2892 = vsub.f32 1.0, %v2891
    %v2893 = vmul.f32 %v2890, %v2892
    %v2894 = vadd.f32 %v2890, %v2893
    %vm2895 = vweird.f32 %v2828
    %vm2896 = vweird.f32 %v2890
    %vm2897 = vmor %vm2895, %vm2896
    %v2898 = vsel %vm2897, %v2890, %v2894
    %v2899 = vand.u32 2147483647, %v2828
    %vm2900 = vcmp.eq.f32.partialorder %v2899, 8.507059e+37
    %v2901 = vand.u32 %v2828, 2147483648
    %v2902 = vor.u32 1.1754944e-38, %v2901
    %v2903 = vsel %vm2900, %v2902, %v2898
    %v2904 = vmul.f32 1.0, %v2903
    %v2905 = vrcp.pop %v2829
    %v2906 = vmul.f32 %v2829, %v2905
    %v2907 = vsub.f32 1.0, %v2906
    %v2908 = vmul.f32 %v2905, %v2907
    %v2909 = vadd.f32 %v2905, %v2908
    %vm2910 = vweird.f32 %v2829
    %vm2911 = vweird.f32 %v2905
    %vm2912 = vmor %vm2910, %vm2911
    %v2913 = vsel %vm2912, %v2905, %v2909
    %v2914 = vand.u32 2147483647, %v2829
    %vm2915 = vcmp.eq.f32.partialorder %v2914, 8.507059e+37
    %v2916 = vand.u32 %v2829, 2147483648
    %v2917 = vor.u32 1.1754944e-38, %v2916
    %v2918 = vsel %vm2915, %v2917, %v2913
    %v2919 = vmul.f32 1.0, %v2918
    %v2920 = vtanh.pop %v2801
    %v2921 = vtanh.pop %v2805
    %v2924 = vrot.slane %v2455, 7
    %v2925 = vrot.slane %v2456, 7
    %v2928 = vmul.f32 %v2859, %v2924
    %v2929 = vmul.f32 %v2904, %v2925
    %v2930 = vmul.f32 %v2844, %v2920
    %v2931 = vmul.f32 %v2889, %v2921
    %v2932 = vadd.f32 %v2928, %v2930
    %v2933 = vadd.f32 %v2929, %v2931
    %v2934 = vtanh.pop %v2932
    %v2935 = vtanh.pop %v2933
    %v2936 = vmul.f32 %v2874, %v2934
    %v2937 = vmul.f32 %v2919, %v2935
    %2938 = vmatpush.msra.mxu0 0.0
    %2939 = vmatpush.msra.mxu0 0.0
    %2940 = vmatpush.msra.mxu0 0.0
    %2941 = vmatpush.msra.mxu0 0.0
    %2942 = vmatpush.msra.mxu0 0.0
    %2943 = vmatpush.msra.mxu0 0.0
    %2944 = vmatpush.msra.mxu0 0.0
    %2945 = vmatpush.msra.mxu0 %v507
    %2946 = vmatpush.msra.mxu0 %v503
    %2947 = vmatpush.msra.mxu0 %v499
    %2948 = vmatpush.msra.mxu0 %v495
    %2949 = vmatpush.msra.mxu0 %v491
    %2950 = vmatpush.msra.mxu0 %v487
    %2951 = vmatpush.msra.mxu0 %v483
    %2952 = vmatpush.msra.mxu0 %v479
    %2953 = vmatpush.msra.mxu0 %v475
    %2954 = vmatmul.f32.gmra.mxu0 %v2696
    %v2955 = vpop.f32.mrf.mxu0
    %v2956 = vadd.f32 %v1026, %v2955
    %2957 = vdwg.mxu0
    %2958 = vmatpush.msra.mxu0 0.0
    %2959 = vmatpush.msra.mxu0 0.0
    %2960 = vmatpush.msra.mxu0 0.0
    %2961 = vmatpush.msra.mxu0 0.0
    %2962 = vmatpush.msra.mxu0 0.0
    %2963 = vmatpush.msra.mxu0 0.0
    %2964 = vmatpush.msra.mxu0 0.0
    %2965 = vmatpush.msra.mxu0 %v508
    %2966 = vmatpush.msra.mxu0 %v504
    %2967 = vmatpush.msra.mxu0 %v500
    %2968 = vmatpush.msra.mxu0 %v496
    %2969 = vmatpush.msra.mxu0 %v492
    %2970 = vmatpush.msra.mxu0 %v488
    %2971 = vmatpush.msra.mxu0 %v484
    %2972 = vmatpush.msra.mxu0 %v480
    %2973 = vmatpush.msra.mxu0 %v476
    %2974 = vmatmul.f32.gmra.mxu0 %v2696
    %v2975 = vpop.f32.mrf.mxu0
    %v2976 = vadd.f32 %v1027, %v2975
    %2977 = vdwg.mxu0
    %2978 = vmatpush.msra.mxu0 0.0
    %2979 = vmatpush.msra.mxu0 0.0
    %2980 = vmatpush.msra.mxu0 0.0
    %2981 = vmatpush.msra.mxu0 0.0
    %2982 = vmatpush.msra.mxu0 0.0
    %2983 = vmatpush.msra.mxu0 0.0
    %2984 = vmatpush.msra.mxu0 0.0
    %2985 = vmatpush.msra.mxu0 %v509
    %2986 = vmatpush.msra.mxu0 %v505
    %2987 = vmatpush.msra.mxu0 %v501
    %2988 = vmatpush.msra.mxu0 %v497
    %2989 = vmatpush.msra.mxu0 %v493
    %2990 = vmatpush.msra.mxu0 %v489
    %2991 = vmatpush.msra.mxu0 %v485
    %2992 = vmatpush.msra.mxu0 %v481
    %2993 = vmatpush.msra.mxu0 %v477
    %2994 = vmatmul.f32.gmra.mxu0 %v2696
    %v2995 = vpop.f32.mrf.mxu0
    %v2996 = vadd.f32 %v1028, %v2995
    %2997 = vdwg.mxu0
    %2998 = vmatpush.msra.mxu0 0.0
    %2999 = vmatpush.msra.mxu0 0.0
    %3000 = vmatpush.msra.mxu0 0.0
    %3001 = vmatpush.msra.mxu0 0.0
    %3002 = vmatpush.msra.mxu0 0.0
    %3003 = vmatpush.msra.mxu0 0.0
    %3004 = vmatpush.msra.mxu0 0.0
    %3005 = vmatpush.msra.mxu0 %v510
    %3006 = vmatpush.msra.mxu0 %v506
    %3007 = vmatpush.msra.mxu0 %v502
    %3008 = vmatpush.msra.mxu0 %v498
    %3009 = vmatpush.msra.mxu0 %v494
    %3010 = vmatpush.msra.mxu0 %v490
    %3011 = vmatpush.msra.mxu0 %v486
    %3012 = vmatpush.msra.mxu0 %v482
    %3013 = vmatpush.msra.mxu0 %v478
    %3014 = vmatmul.f32.gmra.mxu0 %v2696
    %v3015 = vpop.f32.mrf.mxu0
    %v3016 = vadd.f32 %v1029, %v3015
    %3017 = vdwg.mxu0
    %v3019 = vsel %vm548, %v2690, 0
    %3021 = vmatpush.msra.mxu0 0.0
    %3022 = vmatpush.msra.mxu0 0.0
    %3023 = vmatpush.msra.mxu0 0.0
    %3024 = vmatpush.msra.mxu0 0.0
    %3025 = vmatpush.msra.mxu0 0.0
    %3026 = vmatpush.msra.mxu0 0.0
    %3027 = vmatpush.msra.mxu0 0.0
    %3028 = vmatpush.msra.mxu0 %v543
    %3029 = vmatpush.msra.mxu0 %v539
    %3030 = vmatpush.msra.mxu0 %v535
    %3031 = vmatpush.msra.mxu0 %v531
    %3032 = vmatpush.msra.mxu0 %v527
    %3033 = vmatpush.msra.mxu0 %v523
    %3034 = vmatpush.msra.mxu0 %v519
    %3035 = vmatpush.msra.mxu0 %v515
    %3036 = vmatpush.msra.mxu0 %v511
    %3037 = vmatmul.f32.gmra.mxu0 %v3019
    %v3038 = vpop.f32.mrf.mxu0
    %v3039 = vadd.f32 0.0, %v3038
    %3040 = vdwg.mxu0
    %3041 = vmatpush.msra.mxu0 0.0
    %3042 = vmatpush.msra.mxu0 0.0
    %3043 = vmatpush.msra.mxu0 0.0
    %3044 = vmatpush.msra.mxu0 0.0
    %3045 = vmatpush.msra.mxu0 0.0
    %3046 = vmatpush.msra.mxu0 0.0
    %3047 = vmatpush.msra.mxu0 0.0
    %3048 = vmatpush.msra.mxu0 %v544
    %3049 = vmatpush.msra.mxu0 %v540
    %3050 = vmatpush.msra.mxu0 %v536
    %3051 = vmatpush.msra.mxu0 %v532
    %3052 = vmatpush.msra.mxu0 %v528
    %3053 = vmatpush.msra.mxu0 %v524
    %3054 = vmatpush.msra.mxu0 %v520
    %3055 = vmatpush.msra.mxu0 %v516
    %3056 = vmatpush.msra.mxu0 %v512
    %3057 = vmatmul.f32.gmra.mxu0 %v3019
    %v3058 = vpop.f32.mrf.mxu0
    %v3059 = vadd.f32 0.0, %v3058
    %3060 = vdwg.mxu0
    %3061 = vmatpush.msra.mxu0 0.0
    %3062 = vmatpush.msra.mxu0 0.0
    %3063 = vmatpush.msra.mxu0 0.0
    %3064 = vmatpush.msra.mxu0 0.0
    %3065 = vmatpush.msra.mxu0 0.0
    %3066 = vmatpush.msra.mxu0 0.0
    %3067 = vmatpush.msra.mxu0 0.0
    %3068 = vmatpush.msra.mxu0 %v545
    %3069 = vmatpush.msra.mxu0 %v541
    %3070 = vmatpush.msra.mxu0 %v537
    %3071 = vmatpush.msra.mxu0 %v533
    %3072 = vmatpush.msra.mxu0 %v529
    %3073 = vmatpush.msra.mxu0 %v525
    %3074 = vmatpush.msra.mxu0 %v521
    %3075 = vmatpush.msra.mxu0 %v517
    %3076 = vmatpush.msra.mxu0 %v513
    %3077 = vmatmul.f32.gmra.mxu0 %v3019
    %v3078 = vpop.f32.mrf.mxu0
    %v3079 = vadd.f32 0.0, %v3078
    %3080 = vdwg.mxu0
    %3081 = vmatpush.msra.mxu0 0.0
    %3082 = vmatpush.msra.mxu0 0.0
    %3083 = vmatpush.msra.mxu0 0.0
    %3084 = vmatpush.msra.mxu0 0.0
    %3085 = vmatpush.msra.mxu0 0.0
    %3086 = vmatpush.msra.mxu0 0.0
    %3087 = vmatpush.msra.mxu0 0.0
    %3088 = vmatpush.msra.mxu0 %v546
    %3089 = vmatpush.msra.mxu0 %v542
    %3090 = vmatpush.msra.mxu0 %v538
    %3091 = vmatpush.msra.mxu0 %v534
    %3092 = vmatpush.msra.mxu0 %v530
    %3093 = vmatpush.msra.mxu0 %v526
    %3094 = vmatpush.msra.mxu0 %v522
    %3095 = vmatpush.msra.mxu0 %v518
    %3096 = vmatpush.msra.mxu0 %v514
    %3097 = vmatmul.f32.gmra.mxu0 %v3019
    %v3098 = vpop.f32.mrf.mxu0
    %v3099 = vadd.f32 0.0, %v3098
    %3100 = vdwg.mxu0
    %v3101 = vadd.f32 %v2956, %v3039
    %v3102 = vadd.f32 %v2976, %v3059
    %v3103 = vadd.f32 %v2996, %v3079
    %v3104 = vadd.f32 %v3016, %v3099
    %v3105 = vxor.u32 %v3101, 2147483648
    %v3106 = vxor.u32 %v3102, 2147483648
    %v3107 = vxor.u32 %v3103, 2147483648
    %v3108 = vmul.f32 %v3105, 1.442695
    %v3109 = vpow.pop %v3108
    %v3110 = vmul.f32 %v3106, 1.442695
    %v3111 = vpow.pop %v3110
    %v3112 = vmul.f32 %v3107, 1.442695
    %v3113 = vpow.pop %v3112
    %v3114 = vadd.f32 %v3109, 1.0
    %v3115 = vadd.f32 %v3111, 1.0
    %v3116 = vadd.f32 %v3113, 1.0
    %v3117 = vrcp.pop %v3114
    %v3118 = vmul.f32 %v3114, %v3117
    %v3119 = vsub.f32 1.0, %v3118
    %v3120 = vmul.f32 %v3117, %v3119
    %v3121 = vadd.f32 %v3117, %v3120
    %vm3122 = vweird.f32 %v3114
    %vm3123 = vweird.f32 %v3117
    %vm3124 = vmor %vm3122, %vm3123
    %v3125 = vsel %vm3124, %v3117, %v3121
    %v3126 = vand.u32 2147483647, %v3114
    %vm3127 = vcmp.eq.f32.partialorder %v3126, 8.507059e+37
    %v3128 = vand.u32 %v3114, 2147483648
    %v3129 = vor.u32 1.1754944e-38, %v3128
    %v3130 = vsel %vm3127, %v3129, %v3125
    %v3131 = vmul.f32 1.0, %v3130
    %v3132 = vrcp.pop %v3115
    %v3133 = vmul.f32 %v3115, %v3132
    %v3134 = vsub.f32 1.0, %v3133
    %v3135 = vmul.f32 %v3132, %v3134
    %v3136 = vadd.f32 %v3132, %v3135
    %vm3137 = vweird.f32 %v3115
    %vm3138 = vweird.f32 %v3132
    %vm3139 = vmor %vm3137, %vm3138
    %v3140 = vsel %vm3139, %v3132, %v3136
    %v3141 = vand.u32 2147483647, %v3115
    %vm3142 = vcmp.eq.f32.partialorder %v3141, 8.507059e+37
    %v3143 = vand.u32 %v3115, 2147483648
    %v3144 = vor.u32 1.1754944e-38, %v3143
    %v3145 = vsel %vm3142, %v3144, %v3140
    %v3146 = vmul.f32 1.0, %v3145
    %v3147 = vrcp.pop %v3116
    %v3148 = vmul.f32 %v3116, %v3147
    %v3149 = vsub.f32 1.0, %v3148
    %v3150 = vmul.f32 %v3147, %v3149
    %v3151 = vadd.f32 %v3147, %v3150
    %vm3152 = vweird.f32 %v3116
    %vm3153 = vweird.f32 %v3147
    %vm3154 = vmor %vm3152, %vm3153
    %v3155 = vsel %vm3154, %v3147, %v3151
    %v3156 = vand.u32 2147483647, %v3116
    %vm3157 = vcmp.eq.f32.partialorder %v3156, 8.507059e+37
    %v3158 = vand.u32 %v3116, 2147483648
    %v3159 = vor.u32 1.1754944e-38, %v3158
    %v3160 = vsel %vm3157, %v3159, %v3155
    %v3161 = vmul.f32 1.0, %v3160
    %v3162 = vtanh.pop %v3104
    %v3163 = vmul.f32 %v3146, %v2688
    %v3164 = vmul.f32 %v3131, %v3162
    %v3165 = vadd.f32 %v3163, %v3164
    %v3166 = vtanh.pop %v3165
    %v3167 = vmul.f32 %v3161, %v3166
    %v3170 = vrot.slane %v2936, 5
    %v3171 = vrot.slane %v2937, 4
    %v3172 = vsel %vm785, %v3171, %v3170
    %v3173 = vsel %vm548, %v3172, 0
    %3175 = vmatpush.msra.mxu0 0.0
    %3176 = vmatpush.msra.mxu0 0.0
    %3177 = vmatpush.msra.mxu0 0.0
    %3178 = vmatpush.msra.mxu0 0.0
    %3179 = vmatpush.msra.mxu0 0.0
    %3180 = vmatpush.msra.mxu0 0.0
    %3181 = vmatpush.msra.mxu0 0.0
    %3182 = vmatpush.msra.mxu0 %v471
    %3183 = vmatpush.msra.mxu0 %v467
    %3184 = vmatpush.msra.mxu0 %v463
    %3185 = vmatpush.msra.mxu0 %v459
    %3186 = vmatpush.msra.mxu0 %v455
    %3187 = vmatpush.msra.mxu0 %v451
    %3188 = vmatpush.msra.mxu0 %v447
    %3189 = vmatpush.msra.mxu0 %v443
    %3190 = vmatpush.msra.mxu0 %v439
    %3191 = vmatmul.f32.gmra.mxu0 %v3173
    %v3192 = vpop.f32.mrf.mxu0
    %v3193 = vadd.f32 0.0, %v3192
    %3194 = vdwg.mxu0
    %3195 = vmatpush.msra.mxu0 0.0
    %3196 = vmatpush.msra.mxu0 0.0
    %3197 = vmatpush.msra.mxu0 0.0
    %3198 = vmatpush.msra.mxu0 0.0
    %3199 = vmatpush.msra.mxu0 0.0
    %3200 = vmatpush.msra.mxu0 0.0
    %3201 = vmatpush.msra.mxu0 0.0
    %3202 = vmatpush.msra.mxu0 %v472
    %3203 = vmatpush.msra.mxu0 %v468
    %3204 = vmatpush.msra.mxu0 %v464
    %3205 = vmatpush.msra.mxu0 %v460
    %3206 = vmatpush.msra.mxu0 %v456
    %3207 = vmatpush.msra.mxu0 %v452
    %3208 = vmatpush.msra.mxu0 %v448
    %3209 = vmatpush.msra.mxu0 %v444
    %3210 = vmatpush.msra.mxu0 %v440
    %3211 = vmatmul.f32.gmra.mxu0 %v3173
    %v3212 = vpop.f32.mrf.mxu0
    %v3213 = vadd.f32 0.0, %v3212
    %3214 = vdwg.mxu0
    %3215 = vmatpush.msra.mxu0 0.0
    %3216 = vmatpush.msra.mxu0 0.0
    %3217 = vmatpush.msra.mxu0 0.0
    %3218 = vmatpush.msra.mxu0 0.0
    %3219 = vmatpush.msra.mxu0 0.0
    %3220 = vmatpush.msra.mxu0 0.0
    %3221 = vmatpush.msra.mxu0 0.0
    %3222 = vmatpush.msra.mxu0 %v473
    %3223 = vmatpush.msra.mxu0 %v469
    %3224 = vmatpush.msra.mxu0 %v465
    %3225 = vmatpush.msra.mxu0 %v461
    %3226 = vmatpush.msra.mxu0 %v457
    %3227 = vmatpush.msra.mxu0 %v453
    %3228 = vmatpush.msra.mxu0 %v449
    %3229 = vmatpush.msra.mxu0 %v445
    %3230 = vmatpush.msra.mxu0 %v441
    %3231 = vmatmul.f32.gmra.mxu0 %v3173
    %v3232 = vpop.f32.mrf.mxu0
    %v3233 = vadd.f32 0.0, %v3232
    %3234 = vdwg.mxu0
    %3235 = vmatpush.msra.mxu0 0.0
    %3236 = vmatpush.msra.mxu0 0.0
    %3237 = vmatpush.msra.mxu0 0.0
    %3238 = vmatpush.msra.mxu0 0.0
    %3239 = vmatpush.msra.mxu0 0.0
    %3240 = vmatpush.msra.mxu0 0.0
    %3241 = vmatpush.msra.mxu0 0.0
    %3242 = vmatpush.msra.mxu0 %v474
    %3243 = vmatpush.msra.mxu0 %v470
    %3244 = vmatpush.msra.mxu0 %v466
    %3245 = vmatpush.msra.mxu0 %v462
    %3246 = vmatpush.msra.mxu0 %v458
    %3247 = vmatpush.msra.mxu0 %v454
    %3248 = vmatpush.msra.mxu0 %v450
    %3249 = vmatpush.msra.mxu0 %v446
    %3250 = vmatpush.msra.mxu0 %v442
    %3251 = vmatmul.f32.gmra.mxu0 %v3173
    %v3252 = vpop.f32.mrf.mxu0
    %v3253 = vadd.f32 0.0, %v3252
    %3254 = vdwg.mxu0
    %v3259 = vrot.slane %v3193, 2
    %v3260 = vrot.slane %v3213, 2
    %v3261 = vrot.slane %v3233, 2
    %v3262 = vrot.slane %v3253, 2
    %v3263 = vrot.slane %v3193, 3
    %v3264 = vrot.slane %v3213, 3
    %v3265 = vrot.slane %v3233, 3
    %v3266 = vrot.slane %v3253, 3
    %v3275 = vadd.f32 %v365, %v3259
    %v3276 = vadd.f32 %v388, %v3260
    %v3277 = vadd.f32 %v411, %v3261
    %v3278 = vadd.f32 %v434, %v3262
    %v3279 = vadd.f32 %v368, %v3263
    %v3280 = vadd.f32 %v391, %v3264
    %v3281 = vadd.f32 %v414, %v3265
    %v3282 = vadd.f32 %v437, %v3266
    %v3283 = vxor.u32 %v3275, 2147483648
    %v3284 = vxor.u32 %v3276, 2147483648
    %v3285 = vxor.u32 %v3277, 2147483648
    %v3286 = vxor.u32 %v3279, 2147483648
    %v3287 = vxor.u32 %v3280, 2147483648
    %v3288 = vxor.u32 %v3281, 2147483648
    %v3289 = vmul.f32 %v3283, 1.442695
    %v3290 = vpow.pop %v3289
    %v3291 = vmul.f32 %v3284, 1.442695
    %v3292 = vpow.pop %v3291
    %v3293 = vmul.f32 %v3285, 1.442695
    %v3294 = vpow.pop %v3293
    %v3295 = vmul.f32 %v3286, 1.442695
    %v3296 = vpow.pop %v3295
    %v3297 = vmul.f32 %v3287, 1.442695
    %v3298 = vpow.pop %v3297
    %v3299 = vmul.f32 %v3288, 1.442695
    %v3300 = vpow.pop %v3299
    %v3301 = vadd.f32 %v3290, 1.0
    %v3302 = vadd.f32 %v3292, 1.0
    %v3303 = vadd.f32 %v3294, 1.0
    %v3304 = vadd.f32 %v3296, 1.0
    %v3305 = vadd.f32 %v3298, 1.0
    %v3306 = vadd.f32 %v3300, 1.0
    %v3307 = vrcp.pop %v3301
    %v3308 = vmul.f32 %v3301, %v3307
    %v3309 = vsub.f32 1.0, %v3308
    %v3310 = vmul.f32 %v3307, %v3309
    %v3311 = vadd.f32 %v3307, %v3310
    %vm3312 = vweird.f32 %v3301
    %vm3313 = vweird.f32 %v3307
    %vm3314 = vmor %vm3312, %vm3313
    %v3315 = vsel %vm3314, %v3307, %v3311
    %v3316 = vand.u32 2147483647, %v3301
    %vm3317 = vcmp.eq.f32.partialorder %v3316, 8.507059e+37
    %v3318 = vand.u32 %v3301, 2147483648
    %v3319 = vor.u32 1.1754944e-38, %v3318
    %v3320 = vsel %vm3317, %v3319, %v3315
    %v3321 = vmul.f32 1.0, %v3320
    %v3322 = vrcp.pop %v3302
    %v3323 = vmul.f32 %v3302, %v3322
    %v3324 = vsub.f32 1.0, %v3323
    %v3325 = vmul.f32 %v3322, %v3324
    %v3326 = vadd.f32 %v3322, %v3325
    %vm3327 = vweird.f32 %v3302
    %vm3328 = vweird.f32 %v3322
    %vm3329 = vmor %vm3327, %vm3328
    %v3330 = vsel %vm3329, %v3322, %v3326
    %v3331 = vand.u32 2147483647, %v3302
    %vm3332 = vcmp.eq.f32.partialorder %v3331, 8.507059e+37
    %v3333 = vand.u32 %v3302, 2147483648
    %v3334 = vor.u32 1.1754944e-38, %v3333
    %v3335 = vsel %vm3332, %v3334, %v3330
    %v3336 = vmul.f32 1.0, %v3335
    %v3337 = vrcp.pop %v3303
    %v3338 = vmul.f32 %v3303, %v3337
    %v3339 = vsub.f32 1.0, %v3338
    %v3340 = vmul.f32 %v3337, %v3339
    %v3341 = vadd.f32 %v3337, %v3340
    %vm3342 = vweird.f32 %v3303
    %vm3343 = vweird.f32 %v3337
    %vm3344 = vmor %vm3342, %vm3343
    %v3345 = vsel %vm3344, %v3337, %v3341
    %v3346 = vand.u32 2147483647, %v3303
    %vm3347 = vcmp.eq.f32.partialorder %v3346, 8.507059e+37
    %v3348 = vand.u32 %v3303, 2147483648
    %v3349 = vor.u32 1.1754944e-38, %v3348
    %v3350 = vsel %vm3347, %v3349, %v3345
    %v3351 = vmul.f32 1.0, %v3350
    %v3352 = vrcp.pop %v3304
    %v3353 = vmul.f32 %v3304, %v3352
    %v3354 = vsub.f32 1.0, %v3353
    %v3355 = vmul.f32 %v3352, %v3354
    %v3356 = vadd.f32 %v3352, %v3355
    %vm3357 = vweird.f32 %v3304
    %vm3358 = vweird.f32 %v3352
    %vm3359 = vmor %vm3357, %vm3358
    %v3360 = vsel %vm3359, %v3352, %v3356
    %v3361 = vand.u32 2147483647, %v3304
    %vm3362 = vcmp.eq.f32.partialorder %v3361, 8.507059e+37
    %v3363 = vand.u32 %v3304, 2147483648
    %v3364 = vor.u32 1.1754944e-38, %v3363
    %v3365 = vsel %vm3362, %v3364, %v3360
    %v3366 = vmul.f32 1.0, %v3365
    %v3367 = vrcp.pop %v3305
    %v3368 = vmul.f32 %v3305, %v3367
    %v3369 = vsub.f32 1.0, %v3368
    %v3370 = vmul.f32 %v3367, %v3369
    %v3371 = vadd.f32 %v3367, %v3370
    %vm3372 = vweird.f32 %v3305
    %vm3373 = vweird.f32 %v3367
    %vm3374 = vmor %vm3372, %vm3373
    %v3375 = vsel %vm3374, %v3367, %v3371
    %v3376 = vand.u32 2147483647, %v3305
    %vm3377 = vcmp.eq.f32.partialorder %v3376, 8.507059e+37
    %v3378 = vand.u32 %v3305, 2147483648
    %v3379 = vor.u32 1.1754944e-38, %v3378
    %v3380 = vsel %vm3377, %v3379, %v3375
    %v3381 = vmul.f32 1.0, %v3380
    %v3382 = vrcp.pop %v3306
    %v3383 = vmul.f32 %v3306, %v3382
    %v3384 = vsub.f32 1.0, %v3383
    %v3385 = vmul.f32 %v3382, %v3384
    %v3386 = vadd.f32 %v3382, %v3385
    %vm3387 = vweird.f32 %v3306
    %vm3388 = vweird.f32 %v3382
    %vm3389 = vmor %vm3387, %vm3388
    %v3390 = vsel %vm3389, %v3382, %v3386
    %v3391 = vand.u32 2147483647, %v3306
    %vm3392 = vcmp.eq.f32.partialorder %v3391, 8.507059e+37
    %v3393 = vand.u32 %v3306, 2147483648
    %v3394 = vor.u32 1.1754944e-38, %v3393
    %v3395 = vsel %vm3392, %v3394, %v3390
    %v3396 = vmul.f32 1.0, %v3395
    %v3397 = vtanh.pop %v3278
    %v3398 = vtanh.pop %v3282
    %v3401 = vrot.slane %v2932, 7
    %v3402 = vrot.slane %v2933, 7
    %v3405 = vmul.f32 %v3336, %v3401
    %v3406 = vmul.f32 %v3381, %v3402
    %v3407 = vmul.f32 %v3321, %v3397
    %v3408 = vmul.f32 %v3366, %v3398
    %v3409 = vadd.f32 %v3405, %v3407
    %v3410 = vadd.f32 %v3406, %v3408
    %v3411 = vtanh.pop %v3409
    %v3412 = vtanh.pop %v3410
    %v3413 = vmul.f32 %v3351, %v3411
    %v3414 = vmul.f32 %v3396, %v3412
    %3415 = vmatpush.msra.mxu0 0.0
    %3416 = vmatpush.msra.mxu0 0.0
    %3417 = vmatpush.msra.mxu0 0.0
    %3418 = vmatpush.msra.mxu0 0.0
    %3419 = vmatpush.msra.mxu0 0.0
    %3420 = vmatpush.msra.mxu0 0.0
    %3421 = vmatpush.msra.mxu0 0.0
    %3422 = vmatpush.msra.mxu0 %v507
    %3423 = vmatpush.msra.mxu0 %v503
    %3424 = vmatpush.msra.mxu0 %v499
    %3425 = vmatpush.msra.mxu0 %v495
    %3426 = vmatpush.msra.mxu0 %v491
    %3427 = vmatpush.msra.mxu0 %v487
    %3428 = vmatpush.msra.mxu0 %v483
    %3429 = vmatpush.msra.mxu0 %v479
    %3430 = vmatpush.msra.mxu0 %v475
    %3431 = vmatmul.f32.gmra.mxu0 %v3173
    %v3432 = vpop.f32.mrf.mxu0
    %v3433 = vadd.f32 %v1026, %v3432
    %3434 = vdwg.mxu0
    %3435 = vmatpush.msra.mxu0 0.0
    %3436 = vmatpush.msra.mxu0 0.0
    %3437 = vmatpush.msra.mxu0 0.0
    %3438 = vmatpush.msra.mxu0 0.0
    %3439 = vmatpush.msra.mxu0 0.0
    %3440 = vmatpush.msra.mxu0 0.0
    %3441 = vmatpush.msra.mxu0 0.0
    %3442 = vmatpush.msra.mxu0 %v508
    %3443 = vmatpush.msra.mxu0 %v504
    %3444 = vmatpush.msra.mxu0 %v500
    %3445 = vmatpush.msra.mxu0 %v496
    %3446 = vmatpush.msra.mxu0 %v492
    %3447 = vmatpush.msra.mxu0 %v488
    %3448 = vmatpush.msra.mxu0 %v484
    %3449 = vmatpush.msra.mxu0 %v480
    %3450 = vmatpush.msra.mxu0 %v476
    %3451 = vmatmul.f32.gmra.mxu0 %v3173
    %v3452 = vpop.f32.mrf.mxu0
    %v3453 = vadd.f32 %v1027, %v3452
    %3454 = vdwg.mxu0
    %3455 = vmatpush.msra.mxu0 0.0
    %3456 = vmatpush.msra.mxu0 0.0
    %3457 = vmatpush.msra.mxu0 0.0
    %3458 = vmatpush.msra.mxu0 0.0
    %3459 = vmatpush.msra.mxu0 0.0
    %3460 = vmatpush.msra.mxu0 0.0
    %3461 = vmatpush.msra.mxu0 0.0
    %3462 = vmatpush.msra.mxu0 %v509
    %3463 = vmatpush.msra.mxu0 %v505
    %3464 = vmatpush.msra.mxu0 %v501
    %3465 = vmatpush.msra.mxu0 %v497
    %3466 = vmatpush.msra.mxu0 %v493
    %3467 = vmatpush.msra.mxu0 %v489
    %3468 = vmatpush.msra.mxu0 %v485
    %3469 = vmatpush.msra.mxu0 %v481
    %3470 = vmatpush.msra.mxu0 %v477
    %3471 = vmatmul.f32.gmra.mxu0 %v3173
    %v3472 = vpop.f32.mrf.mxu0
    %v3473 = vadd.f32 %v1028, %v3472
    %3474 = vdwg.mxu0
    %3475 = vmatpush.msra.mxu0 0.0
    %3476 = vmatpush.msra.mxu0 0.0
    %3477 = vmatpush.msra.mxu0 0.0
    %3478 = vmatpush.msra.mxu0 0.0
    %3479 = vmatpush.msra.mxu0 0.0
    %3480 = vmatpush.msra.mxu0 0.0
    %3481 = vmatpush.msra.mxu0 0.0
    %3482 = vmatpush.msra.mxu0 %v510
    %3483 = vmatpush.msra.mxu0 %v506
    %3484 = vmatpush.msra.mxu0 %v502
    %3485 = vmatpush.msra.mxu0 %v498
    %3486 = vmatpush.msra.mxu0 %v494
    %3487 = vmatpush.msra.mxu0 %v490
    %3488 = vmatpush.msra.mxu0 %v486
    %3489 = vmatpush.msra.mxu0 %v482
    %3490 = vmatpush.msra.mxu0 %v478
    %3491 = vmatmul.f32.gmra.mxu0 %v3173
    %v3492 = vpop.f32.mrf.mxu0
    %v3493 = vadd.f32 %v1029, %v3492
    %3494 = vdwg.mxu0
    %v3496 = vsel %vm548, %v3167, 0
    %3498 = vmatpush.msra.mxu0 0.0
    %3499 = vmatpush.msra.mxu0 0.0
    %3500 = vmatpush.msra.mxu0 0.0
    %3501 = vmatpush.msra.mxu0 0.0
    %3502 = vmatpush.msra.mxu0 0.0
    %3503 = vmatpush.msra.mxu0 0.0
    %3504 = vmatpush.msra.mxu0 0.0
    %3505 = vmatpush.msra.mxu0 %v543
    %3506 = vmatpush.msra.mxu0 %v539
    %3507 = vmatpush.msra.mxu0 %v535
    %3508 = vmatpush.msra.mxu0 %v531
    %3509 = vmatpush.msra.mxu0 %v527
    %3510 = vmatpush.msra.mxu0 %v523
    %3511 = vmatpush.msra.mxu0 %v519
    %3512 = vmatpush.msra.mxu0 %v515
    %3513 = vmatpush.msra.mxu0 %v511
    %3514 = vmatmul.f32.gmra.mxu0 %v3496
    %v3515 = vpop.f32.mrf.mxu0
    %v3516 = vadd.f32 0.0, %v3515
    %3517 = vdwg.mxu0
    %3518 = vmatpush.msra.mxu0 0.0
    %3519 = vmatpush.msra.mxu0 0.0
    %3520 = vmatpush.msra.mxu0 0.0
    %3521 = vmatpush.msra.mxu0 0.0
    %3522 = vmatpush.msra.mxu0 0.0
    %3523 = vmatpush.msra.mxu0 0.0
    %3524 = vmatpush.msra.mxu0 0.0
    %3525 = vmatpush.msra.mxu0 %v544
    %3526 = vmatpush.msra.mxu0 %v540
    %3527 = vmatpush.msra.mxu0 %v536
    %3528 = vmatpush.msra.mxu0 %v532
    %3529 = vmatpush.msra.mxu0 %v528
    %3530 = vmatpush.msra.mxu0 %v524
    %3531 = vmatpush.msra.mxu0 %v520
    %3532 = vmatpush.msra.mxu0 %v516
    %3533 = vmatpush.msra.mxu0 %v512
    %3534 = vmatmul.f32.gmra.mxu0 %v3496
    %v3535 = vpop.f32.mrf.mxu0
    %v3536 = vadd.f32 0.0, %v3535
    %3537 = vdwg.mxu0
    %3538 = vmatpush.msra.mxu0 0.0
    %3539 = vmatpush.msra.mxu0 0.0
    %3540 = vmatpush.msra.mxu0 0.0
    %3541 = vmatpush.msra.mxu0 0.0
    %3542 = vmatpush.msra.mxu0 0.0
    %3543 = vmatpush.msra.mxu0 0.0
    %3544 = vmatpush.msra.mxu0 0.0
    %3545 = vmatpush.msra.mxu0 %v545
    %3546 = vmatpush.msra.mxu0 %v541
    %3547 = vmatpush.msra.mxu0 %v537
    %3548 = vmatpush.msra.mxu0 %v533
    %3549 = vmatpush.msra.mxu0 %v529
    %3550 = vmatpush.msra.mxu0 %v525
    %3551 = vmatpush.msra.mxu0 %v521
    %3552 = vmatpush.msra.mxu0 %v517
    %3553 = vmatpush.msra.mxu0 %v513
    %3554 = vmatmul.f32.gmra.mxu0 %v3496
    %v3555 = vpop.f32.mrf.mxu0
    %v3556 = vadd.f32 0.0, %v3555
    %3557 = vdwg.mxu0
    %3558 = vmatpush.msra.mxu0 0.0
    %3559 = vmatpush.msra.mxu0 0.0
    %3560 = vmatpush.msra.mxu0 0.0
    %3561 = vmatpush.msra.mxu0 0.0
    %3562 = vmatpush.msra.mxu0 0.0
    %3563 = vmatpush.msra.mxu0 0.0
    %3564 = vmatpush.msra.mxu0 0.0
    %3565 = vmatpush.msra.mxu0 %v546
    %3566 = vmatpush.msra.mxu0 %v542
    %3567 = vmatpush.msra.mxu0 %v538
    %3568 = vmatpush.msra.mxu0 %v534
    %3569 = vmatpush.msra.mxu0 %v530
    %3570 = vmatpush.msra.mxu0 %v526
    %3571 = vmatpush.msra.mxu0 %v522
    %3572 = vmatpush.msra.mxu0 %v518
    %3573 = vmatpush.msra.mxu0 %v514
    %3574 = vmatmul.f32.gmra.mxu0 %v3496
    %v3575 = vpop.f32.mrf.mxu0
    %v3576 = vadd.f32 0.0, %v3575
    %3577 = vdwg.mxu0
    %v3578 = vadd.f32 %v3433, %v3516
    %v3579 = vadd.f32 %v3453, %v3536
    %v3580 = vadd.f32 %v3473, %v3556
    %v3581 = vadd.f32 %v3493, %v3576
    %v3582 = vxor.u32 %v3578, 2147483648
    %v3583 = vxor.u32 %v3579, 2147483648
    %v3584 = vxor.u32 %v3580, 2147483648
    %v3585 = vmul.f32 %v3582, 1.442695
    %v3586 = vpow.pop %v3585
    %v3587 = vmul.f32 %v3583, 1.442695
    %v3588 = vpow.pop %v3587
    %v3589 = vmul.f32 %v3584, 1.442695
    %v3590 = vpow.pop %v3589
    %v3591 = vadd.f32 %v3586, 1.0
    %v3592 = vadd.f32 %v3588, 1.0
    %v3593 = vadd.f32 %v3590, 1.0
    %v3594 = vrcp.pop %v3591
    %v3595 = vmul.f32 %v3591, %v3594
    %v3596 = vsub.f32 1.0, %v3595
    %v3597 = vmul.f32 %v3594, %v3596
    %v3598 = vadd.f32 %v3594, %v3597
    %vm3599 = vweird.f32 %v3591
    %vm3600 = vweird.f32 %v3594
    %vm3601 = vmor %vm3599, %vm3600
    %v3602 = vsel %vm3601, %v3594, %v3598
    %v3603 = vand.u32 2147483647, %v3591
    %vm3604 = vcmp.eq.f32.partialorder %v3603, 8.507059e+37
    %v3605 = vand.u32 %v3591, 2147483648
    %v3606 = vor.u32 1.1754944e-38, %v3605
    %v3607 = vsel %vm3604, %v3606, %v3602
    %v3608 = vmul.f32 1.0, %v3607
    %v3609 = vrcp.pop %v3592
    %v3610 = vmul.f32 %v3592, %v3609
    %v3611 = vsub.f32 1.0, %v3610
    %v3612 = vmul.f32 %v3609, %v3611
    %v3613 = vadd.f32 %v3609, %v3612
    %vm3614 = vweird.f32 %v3592
    %vm3615 = vweird.f32 %v3609
    %vm3616 = vmor %vm3614, %vm3615
    %v3617 = vsel %vm3616, %v3609, %v3613
    %v3618 = vand.u32 2147483647, %v3592
    %vm3619 = vcmp.eq.f32.partialorder %v3618, 8.507059e+37
    %v3620 = vand.u32 %v3592, 2147483648
    %v3621 = vor.u32 1.1754944e-38, %v3620
    %v3622 = vsel %vm3619, %v3621, %v3617
    %v3623 = vmul.f32 1.0, %v3622
    %v3624 = vrcp.pop %v3593
    %v3625 = vmul.f32 %v3593, %v3624
    %v3626 = vsub.f32 1.0, %v3625
    %v3627 = vmul.f32 %v3624, %v3626
    %v3628 = vadd.f32 %v3624, %v3627
    %vm3629 = vweird.f32 %v3593
    %vm3630 = vweird.f32 %v3624
    %vm3631 = vmor %vm3629, %vm3630
    %v3632 = vsel %vm3631, %v3624, %v3628
    %v3633 = vand.u32 2147483647, %v3593
    %vm3634 = vcmp.eq.f32.partialorder %v3633, 8.507059e+37
    %v3635 = vand.u32 %v3593, 2147483648
    %v3636 = vor.u32 1.1754944e-38, %v3635
    %v3637 = vsel %vm3634, %v3636, %v3632
    %v3638 = vmul.f32 1.0, %v3637
    %v3639 = vtanh.pop %v3581
    %v3640 = vmul.f32 %v3623, %v3165
    %v3641 = vmul.f32 %v3608, %v3639
    %v3642 = vadd.f32 %v3640, %v3641
    %v3643 = vtanh.pop %v3642
    %v3644 = vmul.f32 %v3638, %v3643
    %v3647 = vrot.slane %v3413, 6
    %v3648 = vrot.slane %v3414, 5
    %v3649 = vsel %vm785, %v3648, %v3647
    %v3650 = vsel %vm548, %v3649, 0
    %3652 = vmatpush.msra.mxu0 0.0
    %3653 = vmatpush.msra.mxu0 0.0
    %3654 = vmatpush.msra.mxu0 0.0
    %3655 = vmatpush.msra.mxu0 0.0
    %3656 = vmatpush.msra.mxu0 0.0
    %3657 = vmatpush.msra.mxu0 0.0
    %3658 = vmatpush.msra.mxu0 0.0
    %3659 = vmatpush.msra.mxu0 %v471
    %3660 = vmatpush.msra.mxu0 %v467
    %3661 = vmatpush.msra.mxu0 %v463
    %3662 = vmatpush.msra.mxu0 %v459
    %3663 = vmatpush.msra.mxu0 %v455
    %3664 = vmatpush.msra.mxu0 %v451
    %3665 = vmatpush.msra.mxu0 %v447
    %3666 = vmatpush.msra.mxu0 %v443
    %3667 = vmatpush.msra.mxu0 %v439
    %3668 = vmatmul.f32.gmra.mxu0 %v3650
    %v3669 = vpop.f32.mrf.mxu0
    %v3670 = vadd.f32 0.0, %v3669
    %3671 = vdwg.mxu0
    %3672 = vmatpush.msra.mxu0 0.0
    %3673 = vmatpush.msra.mxu0 0.0
    %3674 = vmatpush.msra.mxu0 0.0
    %3675 = vmatpush.msra.mxu0 0.0
    %3676 = vmatpush.msra.mxu0 0.0
    %3677 = vmatpush.msra.mxu0 0.0
    %3678 = vmatpush.msra.mxu0 0.0
    %3679 = vmatpush.msra.mxu0 %v472
    %3680 = vmatpush.msra.mxu0 %v468
    %3681 = vmatpush.msra.mxu0 %v464
    %3682 = vmatpush.msra.mxu0 %v460
    %3683 = vmatpush.msra.mxu0 %v456
    %3684 = vmatpush.msra.mxu0 %v452
    %3685 = vmatpush.msra.mxu0 %v448
    %3686 = vmatpush.msra.mxu0 %v444
    %3687 = vmatpush.msra.mxu0 %v440
    %3688 = vmatmul.f32.gmra.mxu0 %v3650
    %v3689 = vpop.f32.mrf.mxu0
    %v3690 = vadd.f32 0.0, %v3689
    %3691 = vdwg.mxu0
    %3692 = vmatpush.msra.mxu0 0.0
    %3693 = vmatpush.msra.mxu0 0.0
    %3694 = vmatpush.msra.mxu0 0.0
    %3695 = vmatpush.msra.mxu0 0.0
    %3696 = vmatpush.msra.mxu0 0.0
    %3697 = vmatpush.msra.mxu0 0.0
    %3698 = vmatpush.msra.mxu0 0.0
    %3699 = vmatpush.msra.mxu0 %v473
    %3700 = vmatpush.msra.mxu0 %v469
    %3701 = vmatpush.msra.mxu0 %v465
    %3702 = vmatpush.msra.mxu0 %v461
    %3703 = vmatpush.msra.mxu0 %v457
    %3704 = vmatpush.msra.mxu0 %v453
    %3705 = vmatpush.msra.mxu0 %v449
    %3706 = vmatpush.msra.mxu0 %v445
    %3707 = vmatpush.msra.mxu0 %v441
    %3708 = vmatmul.f32.gmra.mxu0 %v3650
    %v3709 = vpop.f32.mrf.mxu0
    %v3710 = vadd.f32 0.0, %v3709
    %3711 = vdwg.mxu0
    %3712 = vmatpush.msra.mxu0 0.0
    %3713 = vmatpush.msra.mxu0 0.0
    %3714 = vmatpush.msra.mxu0 0.0
    %3715 = vmatpush.msra.mxu0 0.0
    %3716 = vmatpush.msra.mxu0 0.0
    %3717 = vmatpush.msra.mxu0 0.0
    %3718 = vmatpush.msra.mxu0 0.0
    %3719 = vmatpush.msra.mxu0 %v474
    %3720 = vmatpush.msra.mxu0 %v470
    %3721 = vmatpush.msra.mxu0 %v466
    %3722 = vmatpush.msra.mxu0 %v462
    %3723 = vmatpush.msra.mxu0 %v458
    %3724 = vmatpush.msra.mxu0 %v454
    %3725 = vmatpush.msra.mxu0 %v450
    %3726 = vmatpush.msra.mxu0 %v446
    %3727 = vmatpush.msra.mxu0 %v442
    %3728 = vmatmul.f32.gmra.mxu0 %v3650
    %v3729 = vpop.f32.mrf.mxu0
    %v3730 = vadd.f32 0.0, %v3729
    %3731 = vdwg.mxu0
    %v3736 = vrot.slane %v3670, 1
    %v3737 = vrot.slane %v3690, 1
    %v3738 = vrot.slane %v3710, 1
    %v3739 = vrot.slane %v3730, 1
    %v3740 = vrot.slane %v3670, 2
    %v3741 = vrot.slane %v3690, 2
    %v3742 = vrot.slane %v3710, 2
    %v3743 = vrot.slane %v3730, 2
    %v3752 = vadd.f32 %v365, %v3736
    %v3753 = vadd.f32 %v388, %v3737
    %v3754 = vadd.f32 %v411, %v3738
    %v3755 = vadd.f32 %v434, %v3739
    %v3756 = vadd.f32 %v368, %v3740
    %v3757 = vadd.f32 %v391, %v3741
    %v3758 = vadd.f32 %v414, %v3742
    %v3759 = vadd.f32 %v437, %v3743
    %v3760 = vxor.u32 %v3752, 2147483648
    %v3761 = vxor.u32 %v3753, 2147483648
    %v3762 = vxor.u32 %v3754, 2147483648
    %v3763 = vxor.u32 %v3756, 2147483648
    %v3764 = vxor.u32 %v3757, 2147483648
    %v3765 = vxor.u32 %v3758, 2147483648
    %v3766 = vmul.f32 %v3760, 1.442695
    %v3767 = vpow.pop %v3766
    %v3768 = vmul.f32 %v3761, 1.442695
    %v3769 = vpow.pop %v3768
    %v3770 = vmul.f32 %v3762, 1.442695
    %v3771 = vpow.pop %v3770
    %v3772 = vmul.f32 %v3763, 1.442695
    %v3773 = vpow.pop %v3772
    %v3774 = vmul.f32 %v3764, 1.442695
    %v3775 = vpow.pop %v3774
    %v3776 = vmul.f32 %v3765, 1.442695
    %v3777 = vpow.pop %v3776
    %v3778 = vadd.f32 %v3767, 1.0
    %v3779 = vadd.f32 %v3769, 1.0
    %v3780 = vadd.f32 %v3771, 1.0
    %v3781 = vadd.f32 %v3773, 1.0
    %v3782 = vadd.f32 %v3775, 1.0
    %v3783 = vadd.f32 %v3777, 1.0
    %v3784 = vrcp.pop %v3778
    %v3785 = vmul.f32 %v3778, %v3784
    %v3786 = vsub.f32 1.0, %v3785
    %v3787 = vmul.f32 %v3784, %v3786
    %v3788 = vadd.f32 %v3784, %v3787
    %vm3789 = vweird.f32 %v3778
    %vm3790 = vweird.f32 %v3784
    %vm3791 = vmor %vm3789, %vm3790
    %v3792 = vsel %vm3791, %v3784, %v3788
    %v3793 = vand.u32 2147483647, %v3778
    %vm3794 = vcmp.eq.f32.partialorder %v3793, 8.507059e+37
    %v3795 = vand.u32 %v3778, 2147483648
    %v3796 = vor.u32 1.1754944e-38, %v3795
    %v3797 = vsel %vm3794, %v3796, %v3792
    %v3798 = vmul.f32 1.0, %v3797
    %v3799 = vrcp.pop %v3779
    %v3800 = vmul.f32 %v3779, %v3799
    %v3801 = vsub.f32 1.0, %v3800
    %v3802 = vmul.f32 %v3799, %v3801
    %v3803 = vadd.f32 %v3799, %v3802
    %vm3804 = vweird.f32 %v3779
    %vm3805 = vweird.f32 %v3799
    %vm3806 = vmor %vm3804, %vm3805
    %v3807 = vsel %vm3806, %v3799, %v3803
    %v3808 = vand.u32 2147483647, %v3779
    %vm3809 = vcmp.eq.f32.partialorder %v3808, 8.507059e+37
    %v3810 = vand.u32 %v3779, 2147483648
    %v3811 = vor.u32 1.1754944e-38, %v3810
    %v3812 = vsel %vm3809, %v3811, %v3807
    %v3813 = vmul.f32 1.0, %v3812
    %v3814 = vrcp.pop %v3780
    %v3815 = vmul.f32 %v3780, %v3814
    %v3816 = vsub.f32 1.0, %v3815
    %v3817 = vmul.f32 %v3814, %v3816
    %v3818 = vadd.f32 %v3814, %v3817
    %vm3819 = vweird.f32 %v3780
    %vm3820 = vweird.f32 %v3814
    %vm3821 = vmor %vm3819, %vm3820
    %v3822 = vsel %vm3821, %v3814, %v3818
    %v3823 = vand.u32 2147483647, %v3780
    %vm3824 = vcmp.eq.f32.partialorder %v3823, 8.507059e+37
    %v3825 = vand.u32 %v3780, 2147483648
    %v3826 = vor.u32 1.1754944e-38, %v3825
    %v3827 = vsel %vm3824, %v3826, %v3822
    %v3828 = vmul.f32 1.0, %v3827
    %v3829 = vrcp.pop %v3781
    %v3830 = vmul.f32 %v3781, %v3829
    %v3831 = vsub.f32 1.0, %v3830
    %v3832 = vmul.f32 %v3829, %v3831
    %v3833 = vadd.f32 %v3829, %v3832
    %vm3834 = vweird.f32 %v3781
    %vm3835 = vweird.f32 %v3829
    %vm3836 = vmor %vm3834, %vm3835
    %v3837 = vsel %vm3836, %v3829, %v3833
    %v3838 = vand.u32 2147483647, %v3781
    %vm3839 = vcmp.eq.f32.partialorder %v3838, 8.507059e+37
    %v3840 = vand.u32 %v3781, 2147483648
    %v3841 = vor.u32 1.1754944e-38, %v3840
    %v3842 = vsel %vm3839, %v3841, %v3837
    %v3843 = vmul.f32 1.0, %v3842
    %v3844 = vrcp.pop %v3782
    %v3845 = vmul.f32 %v3782, %v3844
    %v3846 = vsub.f32 1.0, %v3845
    %v3847 = vmul.f32 %v3844, %v3846
    %v3848 = vadd.f32 %v3844, %v3847
    %vm3849 = vweird.f32 %v3782
    %vm3850 = vweird.f32 %v3844
    %vm3851 = vmor %vm3849, %vm3850
    %v3852 = vsel %vm3851, %v3844, %v3848
    %v3853 = vand.u32 2147483647, %v3782
    %vm3854 = vcmp.eq.f32.partialorder %v3853, 8.507059e+37
    %v3855 = vand.u32 %v3782, 2147483648
    %v3856 = vor.u32 1.1754944e-38, %v3855
    %v3857 = vsel %vm3854, %v3856, %v3852
    %v3858 = vmul.f32 1.0, %v3857
    %v3859 = vrcp.pop %v3783
    %v3860 = vmul.f32 %v3783, %v3859
    %v3861 = vsub.f32 1.0, %v3860
    %v3862 = vmul.f32 %v3859, %v3861
    %v3863 = vadd.f32 %v3859, %v3862
    %vm3864 = vweird.f32 %v3783
    %vm3865 = vweird.f32 %v3859
    %vm3866 = vmor %vm3864, %vm3865
    %v3867 = vsel %vm3866, %v3859, %v3863
    %v3868 = vand.u32 2147483647, %v3783
    %vm3869 = vcmp.eq.f32.partialorder %v3868, 8.507059e+37
    %v3870 = vand.u32 %v3783, 2147483648
    %v3871 = vor.u32 1.1754944e-38, %v3870
    %v3872 = vsel %vm3869, %v3871, %v3867
    %v3873 = vmul.f32 1.0, %v3872
    %v3874 = vtanh.pop %v3755
    %v3875 = vtanh.pop %v3759
    %v3878 = vrot.slane %v3409, 7
    %v3879 = vrot.slane %v3410, 7
    %v3882 = vmul.f32 %v3813, %v3878
    %v3883 = vmul.f32 %v3858, %v3879
    %v3884 = vmul.f32 %v3798, %v3874
    %v3885 = vmul.f32 %v3843, %v3875
    %v3886 = vadd.f32 %v3882, %v3884
    %v3887 = vadd.f32 %v3883, %v3885
    %v3888 = vtanh.pop %v3886
    %v3889 = vtanh.pop %v3887
    %v3890 = vmul.f32 %v3828, %v3888
    %v3891 = vmul.f32 %v3873, %v3889
    %3892 = vmatpush.msra.mxu0 0.0
    %3893 = vmatpush.msra.mxu0 0.0
    %3894 = vmatpush.msra.mxu0 0.0
    %3895 = vmatpush.msra.mxu0 0.0
    %3896 = vmatpush.msra.mxu0 0.0
    %3897 = vmatpush.msra.mxu0 0.0
    %3898 = vmatpush.msra.mxu0 0.0
    %3899 = vmatpush.msra.mxu0 %v507
    %3900 = vmatpush.msra.mxu0 %v503
    %3901 = vmatpush.msra.mxu0 %v499
    %3902 = vmatpush.msra.mxu0 %v495
    %3903 = vmatpush.msra.mxu0 %v491
    %3904 = vmatpush.msra.mxu0 %v487
    %3905 = vmatpush.msra.mxu0 %v483
    %3906 = vmatpush.msra.mxu0 %v479
    %3907 = vmatpush.msra.mxu0 %v475
    %3908 = vmatmul.f32.gmra.mxu0 %v3650
    %v3909 = vpop.f32.mrf.mxu0
    %v3910 = vadd.f32 %v1026, %v3909
    %3911 = vdwg.mxu0
    %3912 = vmatpush.msra.mxu0 0.0
    %3913 = vmatpush.msra.mxu0 0.0
    %3914 = vmatpush.msra.mxu0 0.0
    %3915 = vmatpush.msra.mxu0 0.0
    %3916 = vmatpush.msra.mxu0 0.0
    %3917 = vmatpush.msra.mxu0 0.0
    %3918 = vmatpush.msra.mxu0 0.0
    %3919 = vmatpush.msra.mxu0 %v508
    %3920 = vmatpush.msra.mxu0 %v504
    %3921 = vmatpush.msra.mxu0 %v500
    %3922 = vmatpush.msra.mxu0 %v496
    %3923 = vmatpush.msra.mxu0 %v492
    %3924 = vmatpush.msra.mxu0 %v488
    %3925 = vmatpush.msra.mxu0 %v484
    %3926 = vmatpush.msra.mxu0 %v480
    %3927 = vmatpush.msra.mxu0 %v476
    %3928 = vmatmul.f32.gmra.mxu0 %v3650
    %v3929 = vpop.f32.mrf.mxu0
    %v3930 = vadd.f32 %v1027, %v3929
    %3931 = vdwg.mxu0
    %3932 = vmatpush.msra.mxu0 0.0
    %3933 = vmatpush.msra.mxu0 0.0
    %3934 = vmatpush.msra.mxu0 0.0
    %3935 = vmatpush.msra.mxu0 0.0
    %3936 = vmatpush.msra.mxu0 0.0
    %3937 = vmatpush.msra.mxu0 0.0
    %3938 = vmatpush.msra.mxu0 0.0
    %3939 = vmatpush.msra.mxu0 %v509
    %3940 = vmatpush.msra.mxu0 %v505
    %3941 = vmatpush.msra.mxu0 %v501
    %3942 = vmatpush.msra.mxu0 %v497
    %3943 = vmatpush.msra.mxu0 %v493
    %3944 = vmatpush.msra.mxu0 %v489
    %3945 = vmatpush.msra.mxu0 %v485
    %3946 = vmatpush.msra.mxu0 %v481
    %3947 = vmatpush.msra.mxu0 %v477
    %3948 = vmatmul.f32.gmra.mxu0 %v3650
    %v3949 = vpop.f32.mrf.mxu0
    %v3950 = vadd.f32 %v1028, %v3949
    %3951 = vdwg.mxu0
    %3952 = vmatpush.msra.mxu0 0.0
    %3953 = vmatpush.msra.mxu0 0.0
    %3954 = vmatpush.msra.mxu0 0.0
    %3955 = vmatpush.msra.mxu0 0.0
    %3956 = vmatpush.msra.mxu0 0.0
    %3957 = vmatpush.msra.mxu0 0.0
    %3958 = vmatpush.msra.mxu0 0.0
    %3959 = vmatpush.msra.mxu0 %v510
    %3960 = vmatpush.msra.mxu0 %v506
    %3961 = vmatpush.msra.mxu0 %v502
    %3962 = vmatpush.msra.mxu0 %v498
    %3963 = vmatpush.msra.mxu0 %v494
    %3964 = vmatpush.msra.mxu0 %v490
    %3965 = vmatpush.msra.mxu0 %v486
    %3966 = vmatpush.msra.mxu0 %v482
    %3967 = vmatpush.msra.mxu0 %v478
    %3968 = vmatmul.f32.gmra.mxu0 %v3650
    %v3969 = vpop.f32.mrf.mxu0
    %v3970 = vadd.f32 %v1029, %v3969
    %3971 = vdwg.mxu0
    %v3973 = vsel %vm548, %v3644, 0
    %3975 = vmatpush.msra.mxu0 0.0
    %3976 = vmatpush.msra.mxu0 0.0
    %3977 = vmatpush.msra.mxu0 0.0
    %3978 = vmatpush.msra.mxu0 0.0
    %3979 = vmatpush.msra.mxu0 0.0
    %3980 = vmatpush.msra.mxu0 0.0
    %3981 = vmatpush.msra.mxu0 0.0
    %3982 = vmatpush.msra.mxu0 %v543
    %3983 = vmatpush.msra.mxu0 %v539
    %3984 = vmatpush.msra.mxu0 %v535
    %3985 = vmatpush.msra.mxu0 %v531
    %3986 = vmatpush.msra.mxu0 %v527
    %3987 = vmatpush.msra.mxu0 %v523
    %3988 = vmatpush.msra.mxu0 %v519
    %3989 = vmatpush.msra.mxu0 %v515
    %3990 = vmatpush.msra.mxu0 %v511
    %3991 = vmatmul.f32.gmra.mxu0 %v3973
    %v3992 = vpop.f32.mrf.mxu0
    %v3993 = vadd.f32 0.0, %v3992
    %3994 = vdwg.mxu0
    %3995 = vmatpush.msra.mxu0 0.0
    %3996 = vmatpush.msra.mxu0 0.0
    %3997 = vmatpush.msra.mxu0 0.0
    %3998 = vmatpush.msra.mxu0 0.0
    %3999 = vmatpush.msra.mxu0 0.0
    %4000 = vmatpush.msra.mxu0 0.0
    %4001 = vmatpush.msra.mxu0 0.0
    %4002 = vmatpush.msra.mxu0 %v544
    %4003 = vmatpush.msra.mxu0 %v540
    %4004 = vmatpush.msra.mxu0 %v536
    %4005 = vmatpush.msra.mxu0 %v532
    %4006 = vmatpush.msra.mxu0 %v528
    %4007 = vmatpush.msra.mxu0 %v524
    %4008 = vmatpush.msra.mxu0 %v520
    %4009 = vmatpush.msra.mxu0 %v516
    %4010 = vmatpush.msra.mxu0 %v512
    %4011 = vmatmul.f32.gmra.mxu0 %v3973
    %v4012 = vpop.f32.mrf.mxu0
    %v4013 = vadd.f32 0.0, %v4012
    %4014 = vdwg.mxu0
    %4015 = vmatpush.msra.mxu0 0.0
    %4016 = vmatpush.msra.mxu0 0.0
    %4017 = vmatpush.msra.mxu0 0.0
    %4018 = vmatpush.msra.mxu0 0.0
    %4019 = vmatpush.msra.mxu0 0.0
    %4020 = vmatpush.msra.mxu0 0.0
    %4021 = vmatpush.msra.mxu0 0.0
    %4022 = vmatpush.msra.mxu0 %v545
    %4023 = vmatpush.msra.mxu0 %v541
    %4024 = vmatpush.msra.mxu0 %v537
    %4025 = vmatpush.msra.mxu0 %v533
    %4026 = vmatpush.msra.mxu0 %v529
    %4027 = vmatpush.msra.mxu0 %v525
    %4028 = vmatpush.msra.mxu0 %v521
    %4029 = vmatpush.msra.mxu0 %v517
    %4030 = vmatpush.msra.mxu0 %v513
    %4031 = vmatmul.f32.gmra.mxu0 %v3973
    %v4032 = vpop.f32.mrf.mxu0
    %v4033 = vadd.f32 0.0, %v4032
    %4034 = vdwg.mxu0
    %4035 = vmatpush.msra.mxu0 0.0
    %4036 = vmatpush.msra.mxu0 0.0
    %4037 = vmatpush.msra.mxu0 0.0
    %4038 = vmatpush.msra.mxu0 0.0
    %4039 = vmatpush.msra.mxu0 0.0
    %4040 = vmatpush.msra.mxu0 0.0
    %4041 = vmatpush.msra.mxu0 0.0
    %4042 = vmatpush.msra.mxu0 %v546
    %4043 = vmatpush.msra.mxu0 %v542
    %4044 = vmatpush.msra.mxu0 %v538
    %4045 = vmatpush.msra.mxu0 %v534
    %4046 = vmatpush.msra.mxu0 %v530
    %4047 = vmatpush.msra.mxu0 %v526
    %4048 = vmatpush.msra.mxu0 %v522
    %4049 = vmatpush.msra.mxu0 %v518
    %4050 = vmatpush.msra.mxu0 %v514
    %4051 = vmatmul.f32.gmra.mxu0 %v3973
    %v4052 = vpop.f32.mrf.mxu0
    %v4053 = vadd.f32 0.0, %v4052
    %4054 = vdwg.mxu0
    %v4055 = vadd.f32 %v3910, %v3993
    %v4056 = vadd.f32 %v3930, %v4013
    %v4057 = vadd.f32 %v3950, %v4033
    %v4058 = vadd.f32 %v3970, %v4053
    %v4059 = vxor.u32 %v4055, 2147483648
    %v4060 = vxor.u32 %v4056, 2147483648
    %v4061 = vxor.u32 %v4057, 2147483648
    %v4062 = vmul.f32 %v4059, 1.442695
    %v4063 = vpow.pop %v4062
    %v4064 = vmul.f32 %v4060, 1.442695
    %v4065 = vpow.pop %v4064
    %v4066 = vmul.f32 %v4061, 1.442695
    %v4067 = vpow.pop %v4066
    %v4068 = vadd.f32 %v4063, 1.0
    %v4069 = vadd.f32 %v4065, 1.0
    %v4070 = vadd.f32 %v4067, 1.0
    %v4071 = vrcp.pop %v4068
    %v4072 = vmul.f32 %v4068, %v4071
    %v4073 = vsub.f32 1.0, %v4072
    %v4074 = vmul.f32 %v4071, %v4073
    %v4075 = vadd.f32 %v4071, %v4074
    %vm4076 = vweird.f32 %v4068
    %vm4077 = vweird.f32 %v4071
    %vm4078 = vmor %vm4076, %vm4077
    %v4079 = vsel %vm4078, %v4071, %v4075
    %v4080 = vand.u32 2147483647, %v4068
    %vm4081 = vcmp.eq.f32.partialorder %v4080, 8.507059e+37
    %v4082 = vand.u32 %v4068, 2147483648
    %v4083 = vor.u32 1.1754944e-38, %v4082
    %v4084 = vsel %vm4081, %v4083, %v4079
    %v4085 = vmul.f32 1.0, %v4084
    %v4086 = vrcp.pop %v4069
    %v4087 = vmul.f32 %v4069, %v4086
    %v4088 = vsub.f32 1.0, %v4087
    %v4089 = vmul.f32 %v4086, %v4088
    %v4090 = vadd.f32 %v4086, %v4089
    %vm4091 = vweird.f32 %v4069
    %vm4092 = vweird.f32 %v4086
    %vm4093 = vmor %vm4091, %vm4092
    %v4094 = vsel %vm4093, %v4086, %v4090
    %v4095 = vand.u32 2147483647, %v4069
    %vm4096 = vcmp.eq.f32.partialorder %v4095, 8.507059e+37
    %v4097 = vand.u32 %v4069, 2147483648
    %v4098 = vor.u32 1.1754944e-38, %v4097
    %v4099 = vsel %vm4096, %v4098, %v4094
    %v4100 = vmul.f32 1.0, %v4099
    %v4101 = vrcp.pop %v4070
    %v4102 = vmul.f32 %v4070, %v4101
    %v4103 = vsub.f32 1.0, %v4102
    %v4104 = vmul.f32 %v4101, %v4103
    %v4105 = vadd.f32 %v4101, %v4104
    %vm4106 = vweird.f32 %v4070
    %vm4107 = vweird.f32 %v4101
    %vm4108 = vmor %vm4106, %vm4107
    %v4109 = vsel %vm4108, %v4101, %v4105
    %v4110 = vand.u32 2147483647, %v4070
    %vm4111 = vcmp.eq.f32.partialorder %v4110, 8.507059e+37
    %v4112 = vand.u32 %v4070, 2147483648
    %v4113 = vor.u32 1.1754944e-38, %v4112
    %v4114 = vsel %vm4111, %v4113, %v4109
    %v4115 = vmul.f32 1.0, %v4114
    %v4116 = vtanh.pop %v4058
    %v4117 = vmul.f32 %v4100, %v3642
    %v4118 = vmul.f32 %v4085, %v4116
    %v4119 = vadd.f32 %v4117, %v4118
    %v4120 = vtanh.pop %v4119
    %v4121 = vmul.f32 %v4115, %v4120
    %v4124 = vrot.slane %v3890, 7
    %v4125 = vrot.slane %v3891, 6
    %v4126 = vsel %vm785, %v4125, %v4124
    %v4127 = vsel %vm548, %v4126, 0
    %4129 = vmatpush.msra.mxu0 0.0
    %4130 = vmatpush.msra.mxu0 0.0
    %4131 = vmatpush.msra.mxu0 0.0
    %4132 = vmatpush.msra.mxu0 0.0
    %4133 = vmatpush.msra.mxu0 0.0
    %4134 = vmatpush.msra.mxu0 0.0
    %4135 = vmatpush.msra.mxu0 0.0
    %4136 = vmatpush.msra.mxu0 %v507
    %4137 = vmatpush.msra.mxu0 %v503
    %4138 = vmatpush.msra.mxu0 %v499
    %4139 = vmatpush.msra.mxu0 %v495
    %4140 = vmatpush.msra.mxu0 %v491
    %4141 = vmatpush.msra.mxu0 %v487
    %4142 = vmatpush.msra.mxu0 %v483
    %4143 = vmatpush.msra.mxu0 %v479
    %4144 = vmatpush.msra.mxu0 %v475
    %4145 = vmatmul.f32.gmra.mxu0 %v4127
    %v4146 = vpop.f32.mrf.mxu0
    %v4147 = vadd.f32 %v1026, %v4146
    %4148 = vdwg.mxu0
    %4149 = vmatpush.msra.mxu0 0.0
    %4150 = vmatpush.msra.mxu0 0.0
    %4151 = vmatpush.msra.mxu0 0.0
    %4152 = vmatpush.msra.mxu0 0.0
    %4153 = vmatpush.msra.mxu0 0.0
    %4154 = vmatpush.msra.mxu0 0.0
    %4155 = vmatpush.msra.mxu0 0.0
    %4156 = vmatpush.msra.mxu0 %v508
    %4157 = vmatpush.msra.mxu0 %v504
    %4158 = vmatpush.msra.mxu0 %v500
    %4159 = vmatpush.msra.mxu0 %v496
    %4160 = vmatpush.msra.mxu0 %v492
    %4161 = vmatpush.msra.mxu0 %v488
    %4162 = vmatpush.msra.mxu0 %v484
    %4163 = vmatpush.msra.mxu0 %v480
    %4164 = vmatpush.msra.mxu0 %v476
    %4165 = vmatmul.f32.gmra.mxu0 %v4127
    %v4166 = vpop.f32.mrf.mxu0
    %v4167 = vadd.f32 %v1027, %v4166
    %4168 = vdwg.mxu0
    %4169 = vmatpush.msra.mxu0 0.0
    %4170 = vmatpush.msra.mxu0 0.0
    %4171 = vmatpush.msra.mxu0 0.0
    %4172 = vmatpush.msra.mxu0 0.0
    %4173 = vmatpush.msra.mxu0 0.0
    %4174 = vmatpush.msra.mxu0 0.0
    %4175 = vmatpush.msra.mxu0 0.0
    %4176 = vmatpush.msra.mxu0 %v509
    %4177 = vmatpush.msra.mxu0 %v505
    %4178 = vmatpush.msra.mxu0 %v501
    %4179 = vmatpush.msra.mxu0 %v497
    %4180 = vmatpush.msra.mxu0 %v493
    %4181 = vmatpush.msra.mxu0 %v489
    %4182 = vmatpush.msra.mxu0 %v485
    %4183 = vmatpush.msra.mxu0 %v481
    %4184 = vmatpush.msra.mxu0 %v477
    %4185 = vmatmul.f32.gmra.mxu0 %v4127
    %v4186 = vpop.f32.mrf.mxu0
    %v4187 = vadd.f32 %v1028, %v4186
    %4188 = vdwg.mxu0
    %4189 = vmatpush.msra.mxu0 0.0
    %4190 = vmatpush.msra.mxu0 0.0
    %4191 = vmatpush.msra.mxu0 0.0
    %4192 = vmatpush.msra.mxu0 0.0
    %4193 = vmatpush.msra.mxu0 0.0
    %4194 = vmatpush.msra.mxu0 0.0
    %4195 = vmatpush.msra.mxu0 0.0
    %4196 = vmatpush.msra.mxu0 %v510
    %4197 = vmatpush.msra.mxu0 %v506
    %4198 = vmatpush.msra.mxu0 %v502
    %4199 = vmatpush.msra.mxu0 %v498
    %4200 = vmatpush.msra.mxu0 %v494
    %4201 = vmatpush.msra.mxu0 %v490
    %4202 = vmatpush.msra.mxu0 %v486
    %4203 = vmatpush.msra.mxu0 %v482
    %4204 = vmatpush.msra.mxu0 %v478
    %4205 = vmatmul.f32.gmra.mxu0 %v4127
    %v4206 = vpop.f32.mrf.mxu0
    %v4207 = vadd.f32 %v1029, %v4206
    %4208 = vdwg.mxu0
    %v4210 = vsel %vm548, %v4121, 0
    %4212 = vmatpush.msra.mxu0 0.0
    %4213 = vmatpush.msra.mxu0 0.0
    %4214 = vmatpush.msra.mxu0 0.0
    %4215 = vmatpush.msra.mxu0 0.0
    %4216 = vmatpush.msra.mxu0 0.0
    %4217 = vmatpush.msra.mxu0 0.0
    %4218 = vmatpush.msra.mxu0 0.0
    %4219 = vmatpush.msra.mxu0 %v543
    %4220 = vmatpush.msra.mxu0 %v539
    %4221 = vmatpush.msra.mxu0 %v535
    %4222 = vmatpush.msra.mxu0 %v531
    %4223 = vmatpush.msra.mxu0 %v527
    %4224 = vmatpush.msra.mxu0 %v523
    %4225 = vmatpush.msra.mxu0 %v519
    %4226 = vmatpush.msra.mxu0 %v515
    %4227 = vmatpush.msra.mxu0 %v511
    %4228 = vmatmul.f32.gmra.mxu0 %v4210
    %v4229 = vpop.f32.mrf.mxu0
    %v4230 = vadd.f32 0.0, %v4229
    %4231 = vdwg.mxu0
    %4232 = vmatpush.msra.mxu0 0.0
    %4233 = vmatpush.msra.mxu0 0.0
    %4234 = vmatpush.msra.mxu0 0.0
    %4235 = vmatpush.msra.mxu0 0.0
    %4236 = vmatpush.msra.mxu0 0.0
    %4237 = vmatpush.msra.mxu0 0.0
    %4238 = vmatpush.msra.mxu0 0.0
    %4239 = vmatpush.msra.mxu0 %v544
    %4240 = vmatpush.msra.mxu0 %v540
    %4241 = vmatpush.msra.mxu0 %v536
    %4242 = vmatpush.msra.mxu0 %v532
    %4243 = vmatpush.msra.mxu0 %v528
    %4244 = vmatpush.msra.mxu0 %v524
    %4245 = vmatpush.msra.mxu0 %v520
    %4246 = vmatpush.msra.mxu0 %v516
    %4247 = vmatpush.msra.mxu0 %v512
    %4248 = vmatmul.f32.gmra.mxu0 %v4210
    %v4249 = vpop.f32.mrf.mxu0
    %v4250 = vadd.f32 0.0, %v4249
    %4251 = vdwg.mxu0
    %4252 = vmatpush.msra.mxu0 0.0
    %4253 = vmatpush.msra.mxu0 0.0
    %4254 = vmatpush.msra.mxu0 0.0
    %4255 = vmatpush.msra.mxu0 0.0
    %4256 = vmatpush.msra.mxu0 0.0
    %4257 = vmatpush.msra.mxu0 0.0
    %4258 = vmatpush.msra.mxu0 0.0
    %4259 = vmatpush.msra.mxu0 %v545
    %4260 = vmatpush.msra.mxu0 %v541
    %4261 = vmatpush.msra.mxu0 %v537
    %4262 = vmatpush.msra.mxu0 %v533
    %4263 = vmatpush.msra.mxu0 %v529
    %4264 = vmatpush.msra.mxu0 %v525
    %4265 = vmatpush.msra.mxu0 %v521
    %4266 = vmatpush.msra.mxu0 %v517
    %4267 = vmatpush.msra.mxu0 %v513
    %4268 = vmatmul.f32.gmra.mxu0 %v4210
    %v4269 = vpop.f32.mrf.mxu0
    %v4270 = vadd.f32 0.0, %v4269
    %4271 = vdwg.mxu0
    %4272 = vmatpush.msra.mxu0 0.0
    %4273 = vmatpush.msra.mxu0 0.0
    %4274 = vmatpush.msra.mxu0 0.0
    %4275 = vmatpush.msra.mxu0 0.0
    %4276 = vmatpush.msra.mxu0 0.0
    %4277 = vmatpush.msra.mxu0 0.0
    %4278 = vmatpush.msra.mxu0 0.0
    %4279 = vmatpush.msra.mxu0 %v546
    %4280 = vmatpush.msra.mxu0 %v542
    %4281 = vmatpush.msra.mxu0 %v538
    %4282 = vmatpush.msra.mxu0 %v534
    %4283 = vmatpush.msra.mxu0 %v530
    %4284 = vmatpush.msra.mxu0 %v526
    %4285 = vmatpush.msra.mxu0 %v522
    %4286 = vmatpush.msra.mxu0 %v518
    %4287 = vmatpush.msra.mxu0 %v514
    %4288 = vmatmul.f32.gmra.mxu0 %v4210
    %v4289 = vpop.f32.mrf.mxu0
    %v4290 = vadd.f32 0.0, %v4289
    %4291 = vdwg.mxu0
    %v4292 = vadd.f32 %v4147, %v4230
    %v4293 = vadd.f32 %v4167, %v4250
    %v4294 = vadd.f32 %v4187, %v4270
    %v4295 = vadd.f32 %v4207, %v4290
    %v4296 = vxor.u32 %v4292, 2147483648
    %v4297 = vxor.u32 %v4293, 2147483648
    %v4298 = vxor.u32 %v4294, 2147483648
    %v4299 = vmul.f32 %v4296, 1.442695
    %v4300 = vpow.pop %v4299
    %v4301 = vmul.f32 %v4297, 1.442695
    %v4302 = vpow.pop %v4301
    %v4303 = vmul.f32 %v4298, 1.442695
    %v4304 = vpow.pop %v4303
    %v4305 = vadd.f32 %v4300, 1.0
    %v4306 = vadd.f32 %v4302, 1.0
    %v4307 = vadd.f32 %v4304, 1.0
    %v4308 = vrcp.pop %v4305
    %v4309 = vmul.f32 %v4305, %v4308
    %v4310 = vsub.f32 1.0, %v4309
    %v4311 = vmul.f32 %v4308, %v4310
    %v4312 = vadd.f32 %v4308, %v4311
    %vm4313 = vweird.f32 %v4305
    %vm4314 = vweird.f32 %v4308
    %vm4315 = vmor %vm4313, %vm4314
    %v4316 = vsel %vm4315, %v4308, %v4312
    %v4317 = vand.u32 2147483647, %v4305
    %vm4318 = vcmp.eq.f32.partialorder %v4317, 8.507059e+37
    %v4319 = vand.u32 %v4305, 2147483648
    %v4320 = vor.u32 1.1754944e-38, %v4319
    %v4321 = vsel %vm4318, %v4320, %v4316
    %v4322 = vmul.f32 1.0, %v4321
    %v4323 = vrcp.pop %v4306
    %v4324 = vmul.f32 %v4306, %v4323
    %v4325 = vsub.f32 1.0, %v4324
    %v4326 = vmul.f32 %v4323, %v4325
    %v4327 = vadd.f32 %v4323, %v4326
    %vm4328 = vweird.f32 %v4306
    %vm4329 = vweird.f32 %v4323
    %vm4330 = vmor %vm4328, %vm4329
    %v4331 = vsel %vm4330, %v4323, %v4327
    %v4332 = vand.u32 2147483647, %v4306
    %vm4333 = vcmp.eq.f32.partialorder %v4332, 8.507059e+37
    %v4334 = vand.u32 %v4306, 2147483648
    %v4335 = vor.u32 1.1754944e-38, %v4334
    %v4336 = vsel %vm4333, %v4335, %v4331
    %v4337 = vmul.f32 1.0, %v4336
    %v4338 = vrcp.pop %v4307
    %v4339 = vmul.f32 %v4307, %v4338
    %v4340 = vsub.f32 1.0, %v4339
    %v4341 = vmul.f32 %v4338, %v4340
    %v4342 = vadd.f32 %v4338, %v4341
    %vm4343 = vweird.f32 %v4307
    %vm4344 = vweird.f32 %v4338
    %vm4345 = vmor %vm4343, %vm4344
    %v4346 = vsel %vm4345, %v4338, %v4342
    %v4347 = vand.u32 2147483647, %v4307
    %vm4348 = vcmp.eq.f32.partialorder %v4347, 8.507059e+37
    %v4349 = vand.u32 %v4307, 2147483648
    %v4350 = vor.u32 1.1754944e-38, %v4349
    %v4351 = vsel %vm4348, %v4350, %v4346
    %v4352 = vmul.f32 1.0, %v4351
    %v4353 = vtanh.pop %v4295
    %v4354 = vmul.f32 %v4337, %v4119
    %v4355 = vmul.f32 %v4322, %v4353
    %v4356 = vadd.f32 %v4354, %v4355
    %v4357 = vtanh.pop %v4356
    %v4358 = vmul.f32 %v4352, %v4357
    %v4359 = vrot.slane %v1736, 6
    %v4361 = vrot.slane %v2213, 4
    %v4363 = vrot.slane %v2690, 2
    %v4365 = vrot.slane %v3644, 6
    %v4367 = vrot.slane %v4121, 4
    %v4370 = vrot.slane %v4358, 2
    %vm4372 = vcmask 1041408
    %v4373 = vsel %vm4372, %v1260, %v4359
    %vm4374 = vcmask 1043456
    %v4375 = vsel %vm4374, %v4373, %v4361
    %vm4376 = vcmask 1045504
    %v4377 = vsel %vm4376, %v4375, %v4363
    %v4378 = vsel %vm4372, %v3167, %v4365
    %v4379 = vsel %vm4374, %v4378, %v4367
    %v4380 = vsel %vm4376, %v4379, %v4370
    %v4381 = vld [vmem:[%s7] sm:$0xff]
    %v4382 = vld [vmem:[%s7 + $0x8] sm:$0xff]
    %v4383 = vld [vmem:[%s7 + $0x10] sm:$0xff]
    %v4384 = vld [vmem:[%s7 + $0x18] sm:$0xff]
    %v4385 = vld [vmem:[%s7 + $0x20] sm:$0xff]
    %v4386 = vld [vmem:[%s7 + $0x28] sm:$0xff]
    %v4387 = vld [vmem:[%s7 + $0x30] sm:$0xff]
    %v4388 = vld [vmem:[%s7 + $0x38] sm:$0xff]
    %v4389 = vld [vmem:[%s7 + $0x40] sm:$0xff]
    %v4390 = vld [vmem:[#allocation14] sm:$0x1]
    %v4392 = vperm.slane %v4390, 0
    %v4394 = vsel %vm548, %v4358, 0
    %4396 = vmatpush.msra.mxu0 0.0
    %4397 = vmatpush.msra.mxu0 0.0
    %4398 = vmatpush.msra.mxu0 0.0
    %4399 = vmatpush.msra.mxu0 0.0
    %4400 = vmatpush.msra.mxu0 0.0
    %4401 = vmatpush.msra.mxu0 0.0
    %4402 = vmatpush.msra.mxu0 0.0
    %4403 = vmatpush.msra.mxu0 %v4389
    %4404 = vmatpush.msra.mxu0 %v4388
    %4405 = vmatpush.msra.mxu0 %v4387
    %4406 = vmatpush.msra.mxu0 %v4386
    %4407 = vmatpush.msra.mxu0 %v4385
    %4408 = vmatpush.msra.mxu0 %v4384
    %4409 = vmatpush.msra.mxu0 %v4383
    %4410 = vmatpush.msra.mxu0 %v4382
    %4411 = vmatpush.msra.mxu0 %v4381
    %4412 = vmatmul.f32.gmra.mxu0 %v4394
    %v4413 = vpop.f32.mrf.mxu0
    %v4414 = vadd.f32 %v4392, %v4413
    %4415 = vdwg.mxu0
    %v4416 = vmul.f32 %v4414, 0.33333334
    %v4417 = vld [vmem:[%s9] sm:$0xff]
    %v4418 = vld [vmem:[%s9 + $0x8] sm:$0xff]
    %v4419 = vld [vmem:[%s9 + $0x10] sm:$0xff]
    %v4420 = vld [vmem:[%s9 + $0x18] sm:$0xff]
    %v4421 = vld [vmem:[%s9 + $0x20] sm:$0xff]
    %v4422 = vld [vmem:[%s9 + $0x28] sm:$0xff]
    %v4423 = vld [vmem:[%s9 + $0x30] sm:$0xff]
    %v4424 = vld [vmem:[%s9 + $0x38] sm:$0xff]
    %v4425 = vld [vmem:[%s9 + $0x40] sm:$0xff]
    %v4426 = vld [vmem:[#allocation16] sm:$0x1]
    %v4428 = vperm.slane %v4426, 0
    %v4431 = vsel %vm548, %v4377, 0
    %v4434 = vsel %vm548, %v4380, 0
    %4436 = vmatpush.msra.mxu0 0.0
    %4437 = vmatpush.msra.mxu0 0.0
    %4438 = vmatpush.msra.mxu0 0.0
    %4439 = vmatpush.msra.mxu0 0.0
    %4440 = vmatpush.msra.mxu0 0.0
    %4441 = vmatpush.msra.mxu0 0.0
    %4442 = vmatpush.msra.mxu0 0.0
    %4443 = vmatpush.msra.mxu0 %v4425
    %4444 = vmatpush.msra.mxu0 %v4424
    %4445 = vmatpush.msra.mxu0 %v4423
    %4446 = vmatpush.msra.mxu0 %v4422
    %4447 = vmatpush.msra.mxu0 %v4421
    %4448 = vmatpush.msra.mxu0 %v4420
    %4449 = vmatpush.msra.mxu0 %v4419
    %4450 = vmatpush.msra.mxu0 %v4418
    %4451 = vmatpush.msra.mxu0 %v4417
    %4452 = vmatmul.f32.gmra.mxu0 %v4431
    %v4453 = vpop.f32.mrf.mxu0
    %v4454 = vadd.f32 %v4428, %v4453
    %4455 = vmatmul.f32.gmra.mxu0 %v4434
    %v4456 = vpop.f32.mrf.mxu0
    %v4457 = vadd.f32 %v4428, %v4456
    %4458 = vdwg.mxu0
    %v4459 = vld [vmem:[%s11] sm:$0xff]
    %v4460 = vld [vmem:[%s11 + $0x8] sm:$0xff]
    %v4461 = vld [vmem:[%s11 + $0x10] sm:$0xff]
    %v4462 = vld [vmem:[%s11 + $0x18] sm:$0xff]
    %v4463 = vld [vmem:[%s11 + $0x20] sm:$0xff]
    %v4464 = vld [vmem:[%s11 + $0x28] sm:$0xff]
    %v4465 = vld [vmem:[%s11 + $0x30] sm:$0xff]
    %v4466 = vld [vmem:[%s11 + $0x38] sm:$0xff]
    %v4467 = vld [vmem:[%s11 + $0x40] sm:$0xff]
    %v4468 = vld [vmem:[#allocation17] sm:$0x1]
    %v4470 = vperm.slane %v4468, 0
    %4472 = vmatpush.msra.mxu0 0.0
    %4473 = vmatpush.msra.mxu0 0.0
    %4474 = vmatpush.msra.mxu0 0.0
    %4475 = vmatpush.msra.mxu0 0.0
    %4476 = vmatpush.msra.mxu0 0.0
    %4477 = vmatpush.msra.mxu0 0.0
    %4478 = vmatpush.msra.mxu0 0.0
    %4479 = vmatpush.msra.mxu0 %v4467
    %4480 = vmatpush.msra.mxu0 %v4466
    %4481 = vmatpush.msra.mxu0 %v4465
    %4482 = vmatpush.msra.mxu0 %v4464
    %4483 = vmatpush.msra.mxu0 %v4463
    %4484 = vmatpush.msra.mxu0 %v4462
    %4485 = vmatpush.msra.mxu0 %v4461
    %4486 = vmatpush.msra.mxu0 %v4460
    %4487 = vmatpush.msra.mxu0 %v4459
    %4488 = vmatmul.f32.gmra.mxu0 %v4431
    %v4489 = vpop.f32.mrf.mxu0
    %v4490 = vadd.f32 %v4470, %v4489
    %4491 = vmatmul.f32.gmra.mxu0 %v4434
    %v4492 = vpop.f32.mrf.mxu0
    %v4493 = vadd.f32 %v4470, %v4492
    %4494 = vdwg.mxu0
    %v4495 = vld [vmem:[%s19] sm:$0xff]
    %v4496 = vld [vmem:[%s19 + $0x8] sm:$0xff]
    %v4497 = vld [vmem:[%s19 + $0x10] sm:$0xff]
    %v4498 = vld [vmem:[%s19 + $0x18] sm:$0xff]
    %v4499 = vld [vmem:[%s19 + $0x20] sm:$0xff]
    %v4500 = vld [vmem:[%s19 + $0x28] sm:$0xff]
    %v4501 = vld [vmem:[%s19 + $0x30] sm:$0xff]
    %v4502 = vld [vmem:[%s19 + $0x38] sm:$0xff]
    %v4503 = vld [vmem:[%s19 + $0x40] sm:$0xff]
    %v4504 = vld [vmem:[%s20] sm:$0xff]
    %v4507 = vrot.slane %v4454, 2
    %v4508 = vrot.slane %v4454, 4
    %v4509 = vrot.slane %v4454, 6
    %v4510 = vrot.slane %v4457, 2
    %v4511 = vrot.slane %v4457, 4
    %v4512 = vrot.slane %v4457, 6
    %v4519 = vmul.f32 %v4454, %v4416
    %v4520 = vmul.f32 %v4507, %v4416
    %v4521 = vmul.f32 %v4508, %v4416
    %v4522 = vmul.f32 %v4509, %v4416
    %v4523 = vmul.f32 %v4457, %v4416
    %v4524 = vmul.f32 %v4510, %v4416
    %v4525 = vmul.f32 %v4511, %v4416
    %v4526 = vmul.f32 %v4512, %v4416
    %4535 = vst [vmem:[#allocation1] ss:$4 sm:$0xff] %v4519
    %s4536 = scalar_lea.vmem [#allocation1], 1
    %4537 = vst [vmem:[%s4536] ss:$4 sm:$0xff] %v4520
    %s4538 = scalar_lea.vmem [#allocation1], 2
    %4539 = vst [vmem:[%s4538] ss:$4 sm:$0xff] %v4521
    %s4540 = scalar_lea.vmem [#allocation1], 3
    %4541 = vst [vmem:[%s4540] ss:$4 sm:$0xff] %v4522
    %s4542 = scalar_lea.vmem [#allocation1], 32
    %4543 = vst [vmem:[%s4542] ss:$4 sm:$0xff] %v4523
    %s4544 = scalar_lea.vmem [#allocation1], 33
    %4545 = vst [vmem:[%s4544] ss:$4 sm:$0xff] %v4524
    %s4546 = scalar_lea.vmem [#allocation1], 34
    %4547 = vst [vmem:[%s4546] ss:$4 sm:$0xff] %v4525
    %s4548 = scalar_lea.vmem [#allocation1], 35
    %4549 = vst [vmem:[%s4548] ss:$4 sm:$0xff] %v4526
    %v4550 = vld.sshfl [vmem:[#allocation1] sm:$0xff pattern:$0x73625140]
    %v4551 = vld.sshfl [vmem:[#allocation1 + $0x20] sm:$0xff pattern:$0x73625140]
    %v4552 = vsel %vm548, %v4550, 0
    %v4554 = vsel %vm548, %v4551, 0
    %4556 = vmatpush.msra.mxu0 0.0
    %4557 = vmatpush.msra.mxu0 0.0
    %4558 = vmatpush.msra.mxu0 0.0
    %4559 = vmatpush.msra.mxu0 0.0
    %4560 = vmatpush.msra.mxu0 0.0
    %4561 = vmatpush.msra.mxu0 0.0
    %4562 = vmatpush.msra.mxu0 0.0
    %4563 = vmatpush.msra.mxu0 %v4503
    %4564 = vmatpush.msra.mxu0 %v4502
    %4565 = vmatpush.msra.mxu0 %v4501
    %4566 = vmatpush.msra.mxu0 %v4500
    %4567 = vmatpush.msra.mxu0 %v4499
    %4568 = vmatpush.msra.mxu0 %v4498
    %4569 = vmatpush.msra.mxu0 %v4497
    %4570 = vmatpush.msra.mxu0 %v4496
    %4571 = vmatpush.msra.mxu0 %v4495
    %4572 = vmatmul.f32.gmra.mxu0 %v4552
    %v4573 = vpop.f32.mrf.mxu0
    %v4574 = vadd.f32 0.0, %v4573
    %4575 = vmatmul.f32.gmra.mxu0 %v4554
    %v4576 = vpop.f32.mrf.mxu0
    %v4577 = vadd.f32 0.0, %v4576
    %4578 = vdwg.mxu0
    %v4581 = vrot.slane %v4574, 2
    %v4582 = vrot.slane %v4574, 4
    %v4583 = vrot.slane %v4574, 6
    %v4584 = vrot.slane %v4577, 2
    %v4585 = vrot.slane %v4577, 4
    %v4586 = vrot.slane %v4577, 6
    %vm4593 = vcmask 58368
    %v4594 = vsel %vm4593, %v4574, -inf
    %v4595 = vsel %vm4593, %v4581, -inf
    %v4596 = vsel %vm4593, %v4582, -inf
    %v4597 = vsel %vm4593, %v4583, -inf
    %v4598 = vsel %vm4593, %v4577, -inf
    %v4599 = vmax.f32 %v4594, %v4598
    %v4600 = vsel %vm4593, %v4584, -inf
    %v4601 = vmax.f32 %v4595, %v4600
    %v4602 = vsel %vm4593, %v4585, -inf
    %v4603 = vmax.f32 %v4596, %v4602
    %v4604 = vsel %vm4593, %v4586, -inf
    %v4605 = vmax.f32 %v4597, %v4604
    %v4606 = vmax.f32 %v4599, %v4601
    %v4607 = vmax.f32 %v4603, %v4605
    %v4608 = vmax.f32 %v4606, %v4607
    %v4609 = vsub.f32 %v4574, %v4608
    %v4610 = vsub.f32 %v4581, %v4608
    %v4611 = vsub.f32 %v4582, %v4608
    %v4612 = vsub.f32 %v4583, %v4608
    %v4613 = vsub.f32 %v4577, %v4608
    %v4614 = vsub.f32 %v4584, %v4608
    %v4615 = vsub.f32 %v4585, %v4608
    %v4616 = vsub.f32 %v4586, %v4608
    %v4617 = vmul.f32 %v4609, 1.442695
    %v4618 = vpow.pop %v4617
    %v4619 = vmul.f32 %v4610, 1.442695
    %v4620 = vpow.pop %v4619
    %v4621 = vmul.f32 %v4611, 1.442695
    %v4622 = vpow.pop %v4621
    %v4623 = vmul.f32 %v4612, 1.442695
    %v4624 = vpow.pop %v4623
    %v4625 = vmul.f32 %v4613, 1.442695
    %v4626 = vpow.pop %v4625
    %v4627 = vmul.f32 %v4614, 1.442695
    %v4628 = vpow.pop %v4627
    %v4629 = vmul.f32 %v4615, 1.442695
    %v4630 = vpow.pop %v4629
    %v4631 = vmul.f32 %v4616, 1.442695
    %v4632 = vpow.pop %v4631
    %v4633 = vsel %vm4593, %v4618, 0.0
    %v4634 = vsel %vm4593, %v4620, 0.0
    %v4635 = vadd.f32 %v4633, %v4634
    %v4636 = vsel %vm4593, %v4622, 0.0
    %v4637 = vadd.f32 %v4635, %v4636
    %v4638 = vsel %vm4593, %v4624, 0.0
    %v4639 = vadd.f32 %v4637, %v4638
    %v4640 = vsel %vm4593, %v4626, 0.0
    %v4641 = vadd.f32 %v4639, %v4640
    %v4642 = vsel %vm4593, %v4628, 0.0
    %v4643 = vadd.f32 %v4641, %v4642
    %v4644 = vsel %vm4593, %v4630, 0.0
    %v4645 = vadd.f32 %v4643, %v4644
    %v4646 = vsel %vm4593, %v4632, 0.0
    %v4647 = vadd.f32 %v4645, %v4646
    %v4648 = vrcp.pop %v4647
    %v4649 = vmul.f32 %v4647, %v4648
    %v4650 = vsub.f32 1.0, %v4649
    %v4651 = vmul.f32 %v4648, %v4650
    %v4652 = vadd.f32 %v4648, %v4651
    %vm4653 = vweird.f32 %v4647
    %vm4654 = vweird.f32 %v4648
    %vm4655 = vmor %vm4653, %vm4654
    %v4656 = vsel %vm4655, %v4648, %v4652
    %v4657 = vand.u32 2147483647, %v4647
    %vm4658 = vcmp.eq.f32.partialorder %v4657, 8.507059e+37
    %v4659 = vand.u32 %v4647, 2147483648
    %v4660 = vor.u32 1.1754944e-38, %v4659
    %v4661 = vsel %vm4658, %v4660, %v4656
    %v4662 = vmul.f32 1.0, %v4661
    %v4663 = vmul.f32 %v4618, %v4662
    %v4664 = vmul.f32 %v4620, %v4662
    %v4665 = vmul.f32 %v4622, %v4662
    %v4666 = vmul.f32 %v4624, %v4662
    %v4667 = vmul.f32 %v4626, %v4662
    %v4668 = vmul.f32 %v4628, %v4662
    %v4669 = vmul.f32 %v4630, %v4662
    %v4670 = vmul.f32 %v4632, %v4662
    %4679 = vst [vmem:[#allocation1] ss:$4 sm:$0xff] %v4663
    %s4680 = scalar_lea.vmem [#allocation1], 1
    %4681 = vst [vmem:[%s4680] ss:$4 sm:$0xff] %v4664
    %s4682 = scalar_lea.vmem [#allocation1], 2
    %4683 = vst [vmem:[%s4682] ss:$4 sm:$0xff] %v4665
    %s4684 = scalar_lea.vmem [#allocation1], 3
    %4685 = vst [vmem:[%s4684] ss:$4 sm:$0xff] %v4666
    %s4686 = scalar_lea.vmem [#allocation1], 32
    %4687 = vst [vmem:[%s4686] ss:$4 sm:$0xff] %v4667
    %s4688 = scalar_lea.vmem [#allocation1], 33
    %4689 = vst [vmem:[%s4688] ss:$4 sm:$0xff] %v4668
    %s4690 = scalar_lea.vmem [#allocation1], 34
    %4691 = vst [vmem:[%s4690] ss:$4 sm:$0xff] %v4669
    %s4692 = scalar_lea.vmem [#allocation1], 35
    %4693 = vst [vmem:[%s4692] ss:$4 sm:$0xff] %v4670
    %v4694 = vld.sshfl [vmem:[#allocation1] sm:$0xff pattern:$0x73625140]
    %v4695 = vld.sshfl [vmem:[#allocation1 + $0x20] sm:$0xff pattern:$0x73625140]
    %vm4696 = vcmask 64512
    %v4697 = vsel %vm4696, %v4694, 0
    %v4699 = vsel %vm4696, %v4695, 0
    %4701 = vmatpush.msra.mxu0 0.0
    %4702 = vmatpush.msra.mxu0 0.0
    %4703 = vmatpush.msra.mxu0 0.0
    %4704 = vmatpush.msra.mxu0 0.0
    %4705 = vmatpush.msra.mxu0 0.0
    %4706 = vmatpush.msra.mxu0 0.0
    %4707 = vmatpush.msra.mxu0 0.0
    %4708 = vmatpush.msra.mxu0 0.0
    %4709 = vmatpush.msra.mxu0 0.0
    %4710 = vmatpush.msra.mxu0 0.0
    %4711 = vmatpush.msra.mxu0 0.0
    %4712 = vmatpush.msra.mxu0 0.0
    %4713 = vmatpush.msra.mxu0 0.0
    %4714 = vmatpush.msra.mxu0 0.0
    %4715 = vmatpush.msra.mxu0 0.0
    %4716 = vmatpush.msra.mxu0 %v4504
    %4717 = vmatmul.f32.gmra.mxu0 %v4697
    %v4718 = vpop.f32.mrf.mxu0
    %v4719 = vadd.f32 0.0, %v4718
    %4720 = vmatmul.f32.gmra.mxu0 %v4699
    %v4721 = vpop.f32.mrf.mxu0
    %v4722 = vadd.f32 0.0, %v4721
    %4723 = vdwg.mxu0
    %v4724 = vmul.f32 %v4719, %v4490
    %v4725 = vmul.f32 %v4722, %v4493
    %v4728 = vrot.slane %v4724, 2
    %v4729 = vrot.slane %v4724, 4
    %v4730 = vrot.slane %v4724, 6
    %v4731 = vrot.slane %v4725, 2
    %v4732 = vrot.slane %v4725, 4
    %v4733 = vrot.slane %v4725, 6
    %vm4740 = vcmask 582656
    %v4741 = vsel %vm4740, %v4724, 0.0
    %v4742 = vsel %vm4740, %v4728, 0.0
    %v4743 = vadd.f32 %v4741, %v4742
    %v4744 = vsel %vm4740, %v4729, 0.0
    %v4745 = vadd.f32 %v4743, %v4744
    %v4746 = vsel %vm4740, %v4730, 0.0
    %v4747 = vadd.f32 %v4745, %v4746
    %v4748 = vsel %vm4740, %v4725, 0.0
    %v4749 = vadd.f32 %v4747, %v4748
    %v4750 = vsel %vm4740, %v4731, 0.0
    %v4751 = vadd.f32 %v4749, %v4750
    %v4752 = vsel %vm4740, %v4732, 0.0
    %v4753 = vadd.f32 %v4751, %v4752
    %v4754 = vsel %vm4740, %v4733, 0.0
    %v4755 = vadd.f32 %v4753, %v4754
    %v4756 = vld [vmem:[#allocation19] sm:$0xff]
    %v4757 = vld [vmem:[#allocation19 + $0x8] sm:$0xff]
    %v4758 = vld [vmem:[#allocation19 + $0x10] sm:$0xff]
    %v4759 = vld [vmem:[#allocation19 + $0x18] sm:$0xff]
    %v4760 = vld [vmem:[#allocation19 + $0x20] sm:$0xff]
    %v4761 = vld [vmem:[#allocation19 + $0x28] sm:$0xff]
    %v4762 = vld [vmem:[#allocation19 + $0x30] sm:$0xff]
    %v4763 = vld [vmem:[#allocation19 + $0x38] sm:$0xff]
    %v4764 = vld [vmem:[#allocation19 + $0x40] sm:$0xff]
    %v4765 = vld [vmem:[#allocation20] sm:$0x1]
    %v4767 = vperm.slane %v4765, 0
    %v4770 = vsel %vm548, %v4755, 0
    %4772 = vmatpush.msra.mxu0 0.0
    %4773 = vmatpush.msra.mxu0 0.0
    %4774 = vmatpush.msra.mxu0 0.0
    %4775 = vmatpush.msra.mxu0 0.0
    %4776 = vmatpush.msra.mxu0 0.0
    %4777 = vmatpush.msra.mxu0 0.0
    %4778 = vmatpush.msra.mxu0 0.0
    %4779 = vmatpush.msra.mxu0 %v4764
    %4780 = vmatpush.msra.mxu0 %v4763
    %4781 = vmatpush.msra.mxu0 %v4762
    %4782 = vmatpush.msra.mxu0 %v4761
    %4783 = vmatpush.msra.mxu0 %v4760
    %4784 = vmatpush.msra.mxu0 %v4759
    %4785 = vmatpush.msra.mxu0 %v4758
    %4786 = vmatpush.msra.mxu0 %v4757
    %4787 = vmatpush.msra.mxu0 %v4756
    %4788 = vmatmul.f32.gmra.mxu0 %v4770
    %v4789 = vpop.f32.mrf.mxu0
    %v4790 = vadd.f32 %v4767, %v4789
    %4791 = vdwg.mxu0
    %v4792 = vld [vmem:[%s15] sm:$0xff]
    %v4793 = vld [vmem:[%s15 + $0x8] sm:$0xff]
    %v4794 = vld [vmem:[%s15 + $0x10] sm:$0xff]
    %v4795 = vld [vmem:[%s15 + $0x18] sm:$0xff]
    %v4796 = vld [vmem:[%s15 + $0x20] sm:$0xff]
    %v4797 = vld [vmem:[%s15 + $0x28] sm:$0xff]
    %v4798 = vld [vmem:[%s15 + $0x30] sm:$0xff]
    %v4799 = vld [vmem:[%s15 + $0x38] sm:$0xff]
    %v4800 = vld [vmem:[%s15 + $0x40] sm:$0xff]
    %v4801 = vld [vmem:[#allocation22] sm:$0x1]
    %v4803 = vperm.slane %v4801, 0
    %v4806 = vsel %vm548, %v4790, 0
    %4808 = vmatpush.msra.mxu0 0.0
    %4809 = vmatpush.msra.mxu0 0.0
    %4810 = vmatpush.msra.mxu0 0.0
    %4811 = vmatpush.msra.mxu0 0.0
    %4812 = vmatpush.msra.mxu0 0.0
    %4813 = vmatpush.msra.mxu0 0.0
    %4814 = vmatpush.msra.mxu0 0.0
    %4815 = vmatpush.msra.mxu0 %v4800
    %4816 = vmatpush.msra.mxu0 %v4799
    %4817 = vmatpush.msra.mxu0 %v4798
    %4818 = vmatpush.msra.mxu0 %v4797
    %4819 = vmatpush.msra.mxu0 %v4796
    %4820 = vmatpush.msra.mxu0 %v4795
    %4821 = vmatpush.msra.mxu0 %v4794
    %4822 = vmatpush.msra.mxu0 %v4793
    %4823 = vmatpush.msra.mxu0 %v4792
    %4824 = vmatmul.f32.gmra.mxu0 %v4806
    %v4825 = vpop.f32.mrf.mxu0
    %v4826 = vadd.f32 %v4803, %v4825
    %4827 = vdwg.mxu0
    %v4828 = vmax.f32 %v4826, 0.0
    %v4829 = vld [vmem:[%s17] sm:$0xff]
    %v4830 = vld [vmem:[%s17 + $0x8] sm:$0xff]
    %v4831 = vld [vmem:[%s17 + $0x10] sm:$0xff]
    %v4832 = vld [vmem:[%s17 + $0x18] sm:$0xff]
    %v4833 = vld [vmem:[%s17 + $0x20] sm:$0xff]
    %v4834 = vld [vmem:[%s17 + $0x28] sm:$0xff]
    %v4835 = vld [vmem:[%s17 + $0x30] sm:$0xff]
    %v4836 = vld [vmem:[%s17 + $0x38] sm:$0xff]
    %v4837 = vld [vmem:[#allocation23] sm:$0x1]
    %v4839 = vperm.slane %v4837, 0
    %vm4841 = vcmask 523264
    %v4843 = vsel %vm4841, %v4828, 0
    %4845 = vmatpush.msra.mxu0 0.0
    %4846 = vmatpush.msra.mxu0 0.0
    %4847 = vmatpush.msra.mxu0 0.0
    %4848 = vmatpush.msra.mxu0 0.0
    %4849 = vmatpush.msra.mxu0 0.0
    %4850 = vmatpush.msra.mxu0 0.0
    %4851 = vmatpush.msra.mxu0 0.0
    %4852 = vmatpush.msra.mxu0 0.0
    %4853 = vmatpush.msra.mxu0 %v4836
    %4854 = vmatpush.msra.mxu0 %v4835
    %4855 = vmatpush.msra.mxu0 %v4834
    %4856 = vmatpush.msra.mxu0 %v4833
    %4857 = vmatpush.msra.mxu0 %v4832
    %4858 = vmatpush.msra.mxu0 %v4831
    %4859 = vmatpush.msra.mxu0 %v4830
    %4860 = vmatpush.msra.mxu0 %v4829
    %4861 = vmatmul.f32.gmra.mxu0 %v4843
    %v4862 = vpop.f32.mrf.mxu0
    %v4863 = vadd.f32 %v4839, %v4862
    %4864 = vdwg.mxu0
    %vm4865 = vcmask 66560
    %4866 = vst.msk [vmem:[#allocation25] sm:$0x3] %vm4865, %v4863
    // Predicated region
    $region142: #{tpu_custom_call.1} parent=1 // pred_check
      _
    $region143: #{tpu_custom_call.1} parent=1 // pred_check_branch
      %4868 = sbr.rel (0) target = $region145
    $region144: #{tpu_custom_call.1} parent=1 // pred_region
      %4870 = vsyncadd [#allocation4], 0
      %s4872 = sshll.u32 [#allocation25], 4
      %s4873 = int_to_ptr.vmem [resolvable:$true] %s4872
      %s4874 = sshll.u32 %s21, 4
      %s4875 = int_to_ptr.hbm [resolvable:$true] %s4874
      %4877 = dma.vmem_to_hbm [thread:$0]  %s4873, 32, %s4875, [#allocation4]
    $region145: #{tpu_custom_call.1} parent=1 // pred_fallthru
      _
    // Predicated region
    $region146: #{tpu_custom_call.1} parent=1 // pred_check
      _
    $region147: #{tpu_custom_call.1} parent=1 // pred_check_branch
      %4879 = sbr.rel (0) target = $region149
    $region148: #{tpu_custom_call.1} parent=1 // pred_region
      %4881 = dma.done [#allocation4], 32
    $region149: #{tpu_custom_call.1} parent=1 // pred_fallthru
      _
    %4882 = vsyncpa [#allocation3], 1
    %4883 = vsyncpa [#allocation6], 1
    %4884 = vsyncpa [#allocation9], 1
    %4885 = vsyncpa [#allocation12], 1
    %4886 = vsyncpa [#allocation15], 1
    %4887 = vsyncpa [#allocation18], 1
    %4888 = vsyncpa [#allocation21], 1
    %4889 = vsyncpa [#allocation24], 1
    %4890 = vsyncpa [#allocation4], 1

</llo_original>
